<compile_context>
chip_gen: v7x
topology: tpu7x:2x2x1
jax: 0.10.0
libtpu: 0.0.40
codegen_flags: <defaults>
</compile_context>

<pallas_src>
import functools

import jax
import jax.numpy as jnp
from jax.experimental import pallas as pl
from jax.experimental.pallas import tpu as pltpu

_LANE = 128


def _round_up(n: int, m: int) -> int:
    return ((n + m - 1) // m) * m


def _mha_kernel(*refs, num_heads, head_size_p, has_mask, compute_dtype):
    if has_mask:
        x_ref, wqkv_ref, bqkv_ref, wo_ref, bo_ref, mask_ref, o_ref = refs
    else:
        x_ref, wqkv_ref, bqkv_ref, wo_ref, bo_ref, o_ref = refs
        mask_ref = None

    bblk, S, hin = x_ref.shape
    nh, hsp = num_heads, head_size_p
    Hq = nh * hsp
    rows = bblk * S

    def mm(a, b):
        # MXU matmul: operands in compute_dtype (no-op cast when they already
        # arrive in that dtype from the wrapper), accumulation always f32.
        return jnp.dot(a.astype(compute_dtype), b.astype(compute_dtype),
                       preferred_element_type=jnp.float32)

    # (bblk, S, Hin_p) -> (rows, Hin_p); merging major dims is layout-free.
    xf = x_ref[...].reshape(rows, hin)

    # Single fused QKV projection (one MXU schedule, N = 3*Hq).  The
    # 1/sqrt(head_size) scale is already folded into the Q columns/bias.
    qkv = mm(xf, wqkv_ref[...]) + bqkv_ref[...].astype(jnp.float32)  # (rows, 3*Hq) f32

    if has_mask:
        mb = mask_ref.shape[0]
        mask_add = mask_ref[...].reshape(mb, S, S).astype(jnp.float32)  # hoisted cast

    # Per-head attention.  hsp is a multiple of 128, so every column slice
    # below is lane-aligned (free) and no reshape+transpose relayouts occur.
    parts = []
    for h in range(nh):
        q_h = qkv[:, h * hsp:(h + 1) * hsp].reshape(bblk, S, hsp)
        k_h = qkv[:, Hq + h * hsp:Hq + (h + 1) * hsp].reshape(bblk, S, hsp)
        v_h = qkv[:, 2 * Hq + h * hsp:2 * Hq + (h + 1) * hsp].reshape(bblk, S, hsp)

        # Leading-batch 3-D einsums (the Mosaic-supported batched-dot form).
        scores = jnp.einsum('bqd,bkd->bqk',
                            q_h.astype(compute_dtype), k_h.astype(compute_dtype),
                            preferred_element_type=jnp.float32)       # (bblk, S, S)
        if has_mask:
            scores = scores + mask_add

        # Numerically stable softmax along seq_K, in f32 (VPU/EUP, v5e-safe).
        m = jnp.max(scores, axis=-1, keepdims=True)
        e = jnp.exp(scores - m)
        denom = jnp.sum(e, axis=-1, keepdims=True)
        probs = e * pl.reciprocal(denom, approx=True)

        # TODO(synk): dropout on probs (train mode) is identity here.
        attn = jnp.einsum('bqk,bkd->bqd',
                          probs.astype(compute_dtype), v_h.astype(compute_dtype),
                          preferred_element_type=jnp.float32)          # (bblk, S, hsp)
        parts.append(attn.reshape(rows, hsp))

    # Head merge: lane-aligned concat of 128-wide blocks (no masked lanes).
    merged = parts[0] if nh == 1 else jnp.concatenate(parts, axis=-1)   # (rows, Hq)

    out = mm(merged, wo_ref[...]) + bo_ref[...].astype(jnp.float32)     # (rows, Hout_p)
    o_ref[...] = out.reshape(bblk, S, -1).astype(o_ref.dtype)


def _vmem_limit_bytes() -> int:
    """Generation-aware scoped-VMEM budget: ~3/4 of physical VMEM, capped at
    96 MiB (v5e/v6e: 128 MiB physical -> 96 MiB; v7x: 64 MiB -> 48 MiB)."""
    try:
        cap = int(pltpu.get_tpu_info().vmem_capacity_bytes)
    except Exception:
        cap = 64 * 1024 * 1024
    return min(max(cap * 3 // 4, 32 * 1024 * 1024), 96 * 1024 * 1024)


def _pick_batch_block(batch, seq, hin_p, hq, hout_p, x_bytes, w_bytes,
                      vmem_budget, max_rows=1024):
    """Largest batch block that (a) divides batch, (b) keeps >= 2 grid steps
    when batch > 1 (dual-TC v7x), (c) keeps <= max_rows MXU rows per step and
    (d) fits a per-step VMEM estimate that includes the S^2 scores terms."""
    def est(bblk):
        rows = bblk * seq
        return (2 * rows * hin_p * x_bytes          # x block, double-buffered
                + 2 * rows * hout_p * 4             # out block, double-buffered
                + 2 * bblk * seq * seq * x_bytes    # mask block (worst case)
                + rows * 3 * hq * 4                 # fused QKV intermediate (f32)
                + rows * hq * 4                     # merged heads (f32)
                + 3 * bblk * seq * seq * 4          # scores / exp / probs (f32)
                + (hin_p * 3 * hq + hq * hout_p) * w_bytes)  # weights, single-buffered

    best = 1
    for bblk in range(1, batch + 1):
        if batch % bblk:
            continue
        if batch > 1 and batch // bblk < 2:
            continue
        if bblk * seq > max_rows:
            continue
        if est(bblk) > int(0.8 * vmem_budget):
            continue
        best = bblk
    return best


def multihead_attention_pallas(x, w_qkv, b_qkv, w_o, b_o, mask, num_heads,
                               mxu_dtype=jnp.bfloat16):
    """Fused multi-head attention forward.

    x: (B, S, H); w_qkv: (3H, H); b_qkv: (3H,); w_o: (H, H); b_o: (H,);
    mask: None, (1, 1, S, S) or (B, 1, S, S) additive mask.  Returns (B, S, H).

    mxu_dtype: dtype for matmul operands and x/weights/mask HBM->VMEM transfer
    (default bf16, MXU-native on v5e/v6e/v7x); accumulation, biases and the
    softmax stay in f32.
    """
    B, S, H = x.shape
    nh = num_heads
    assert H % nh == 0, "hidden_size must be divisible by num_heads"
    hs = H // nh
    hsp = _round_up(hs, _LANE)       # per-head size, lane padded
    Hq = nh * hsp                    # padded "head space" width
    hin_p = _round_up(H, _LANE)      # padded input hidden (lane-dense x / W rows)
    hout_p = _round_up(H, _LANE)     # padded output hidden (lane-dense stores)

    f32 = jnp.float32
    w_qkv = w_qkv.astype(f32)
    b_qkv = b_qkv.astype(f32)
    w_o = w_o.astype(f32)
    b_o = b_o.astype(f32)

    scale = 1.0 / float(hs) ** 0.5   # folded into the Q weight/bias below

    def prep_head_w(w, s):
        # nn.Linear weight (H_out, H_in) -> transposed (H_in, H_out), head-major
        # per-head padding of the output columns, zero-padded input rows.
        wt = (w.T * s).reshape(H, nh, hs)
        wt = jnp.pad(wt, ((0, hin_p - H), (0, 0), (0, hsp - hs)))
        return wt.reshape(hin_p, Hq)

    def prep_head_b(b, s):
        bp = (b * s).reshape(nh, hs)
        bp = jnp.pad(bp, ((0, 0), (0, hsp - hs)))
        return bp.reshape(1, Hq)

    w_qkv_t = jnp.concatenate(
        [prep_head_w(w_qkv[:H], scale),
         prep_head_w(w_qkv[H:2 * H], 1.0),
         prep_head_w(w_qkv[2 * H:], 1.0)], axis=1)           # (hin_p, 3*Hq)
    b_qkv_p = jnp.concatenate(
        [prep_head_b(b_qkv[:H], scale),
         prep_head_b(b_qkv[H:2 * H], 1.0),
         prep_head_b(b_qkv[2 * H:], 1.0)], axis=1)           # (1, 3*Hq)

    # W_O^T: head-major padded input rows, zero-padded output columns.
    wo_t = w_o.T.reshape(nh, hs, H)
    wo_t = jnp.pad(wo_t, ((0, 0), (0, hsp - hs), (0, 0))).reshape(Hq, H)
    wo_t = jnp.pad(wo_t, ((0, 0), (0, hout_p - H)))           # (Hq, hout_p)
    b_o_p = jnp.pad(b_o, (0, hout_p - H)).reshape(1, hout_p)

    x_p = jnp.pad(x, ((0, 0), (0, 0), (0, hin_p - H)))        # lane-dense x

    has_mask = mask is not None
    if has_mask:
        if (mask.ndim != 4 or mask.shape[1] != 1
                or mask.shape[0] not in (1, B) or mask.shape[2:] != (S, S)):
            raise ValueError(
                f"mask must be (1,1,S,S) or (B,1,S,S); got {mask.shape}")

    # Wrapper-side bf16 cast: halves HBM DMA and VMEM for x / weights / mask and
    # removes per-step VPU cast passes.  Biases stay f32.
    compute_dtype = jnp.dtype(mxu_dtype)
    if compute_dtype != jnp.dtype(jnp.float32):
        x_p = x_p.astype(compute_dtype)
        w_qkv_t = w_qkv_t.astype(compute_dtype)
        wo_t = wo_t.astype(compute_dtype)
        if has_mask:
            mask = mask.astype(compute_dtype)

    vmem_budget = _vmem_limit_bytes()
    x_bytes = jnp.dtype(x_p.dtype).itemsize
    w_bytes = jnp.dtype(w_qkv_t.dtype).itemsize
    bblk = _pick_batch_block(B, S, hin_p, Hq, hout_p, x_bytes, w_bytes, vmem_budget)
    grid = (B // bblk,)

    kernel = functools.partial(_mha_kernel, num_heads=nh, head_size_p=hsp,
                               has_mask=has_mask, compute_dtype=compute_dtype)

    def _const_spec(shape, single_buffer):
        idx = lambda b: (0,) * len(shape)
        if single_buffer:
            # Constant-index blocks: single-buffer to free VMEM headroom.
            return pl.BlockSpec(shape, idx, pipeline_mode=pl.Buffered(1))
        return pl.BlockSpec(shape, idx)

    def _run(single_buffer_consts):
        in_specs = [
            pl.BlockSpec((bblk, S, hin_p), lambda b: (b, 0, 0)),        # x
            _const_spec((hin_p, 3 * Hq), single_buffer_consts),         # W_QKV^T
            _const_spec((1, 3 * Hq), single_buffer_consts),             # b_QKV
            _const_spec((Hq, hout_p), single_buffer_consts),            # W_O^T
            _const_spec((1, hout_p), single_buffer_consts),             # b_O
        ]
        operands = [x_p, w_qkv_t, b_qkv_p, wo_t, b_o_p]
        if has_mask:
            if mask.shape[0] == 1:
                # Batch-invariant mask: one resident block, no per-step DMA.
                in_specs.append(_const_spec((1, 1, S, S), single_buffer_consts))
            else:
                in_specs.append(pl.BlockSpec((bblk, 1, S, S),
                                             lambda b: (b, 0, 0, 0)))
            operands.append(mask)

        return pl.pallas_call(
            kernel,
            out_shape=jax.ShapeDtypeStruct((B, S, hout_p), x.dtype),
            grid_spec=pltpu.PrefetchScalarGridSpec(
                num_scalar_prefetch=0,
                grid=grid,
                in_specs=in_specs,
                out_specs=pl.BlockSpec((bblk, S, hout_p), lambda b: (b, 0, 0)),
            ),
            compiler_params=pltpu.CompilerParams(
                dimension_semantics=("parallel",),
                vmem_limit_bytes=vmem_budget,
            ),
        )(*operands)

    try:
        out_p = _run(True)
    except Exception:
        # pl.Buffered(1) pipeline_mode unsupported on this jax version:
        # fall back to default (double-buffered) constant blocks.
        out_p = _run(False)

    return out_p[..., :H]


def multihead_attention_ref(x, w_qkv, b_qkv, w_o, b_o, mask, num_heads):
    """Pure-JAX reference mirroring the PyTorch module (dropout = identity)."""
    B, S, H = x.shape
    hs = H // num_heads
    qkv = jnp.einsum("bsh,oh->bso", x, w_qkv) + b_qkv
    Q, K, V = qkv[..., :H], qkv[..., H:2 * H], qkv[..., 2 * H:]
    Q = Q.reshape(B, S, num_heads, hs).transpose(0, 2, 1, 3)
    K = K.reshape(B, S, num_heads, hs).transpose(0, 2, 1, 3)
    V = V.reshape(B, S, num_heads, hs).transpose(0, 2, 1, 3)
    scores = jnp.einsum("bnqd,bnkd->bnqk", Q, K) / jnp.sqrt(float(hs))
    if mask is not None:
        scores = scores + mask
    probs = jax.nn.softmax(scores, axis=-1)
    attn = jnp.einsum("bnqk,bnkd->bqnd", probs, V).reshape(B, S, H)
    return jnp.einsum("bsh,oh->bso", attn, w_o) + b_o


if __name__ == "__main__":
    # Small config consistent with TransformerConfig semantics.
    batch, seq, hidden, num_heads = 2, 8, 32, 4

    key = jax.random.PRNGKey(0)
    kx, kwq, kbq, kwo, kbo = jax.random.split(key, 5)

    x = jax.random.normal(kx, (batch, seq, hidden), dtype=jnp.float32)

    # Deterministic parameter init (shapes from nn.Linear in __init__).
    w_qkv = 0.05 * jax.random.normal(kwq, (3 * hidden, hidden), dtype=jnp.float32)
    b_qkv = 0.01 * jax.random.normal(kbq, (3 * hidden,), dtype=jnp.float32)
    w_o = 0.05 * jax.random.normal(kwo, (hidden, hidden), dtype=jnp.float32)
    b_o = 0.01 * jax.random.normal(kbo, (hidden,), dtype=jnp.float32)

    # Batch-invariant causal additive mask, shipped as one (1, 1, S, S) block.
    causal = jnp.where(jnp.tril(jnp.ones((seq, seq), dtype=bool)), 0.0, -1e9)
    mask = causal.astype(jnp.float32).reshape(1, 1, seq, seq)

    ref = multihead_attention_ref(x, w_qkv, b_qkv, w_o, b_o, mask, num_heads)

    # Strict-parity run: f32 MXU operands.
    out_f32 = multihead_attention_pallas(x, w_qkv, b_qkv, w_o, b_o, mask,
                                         num_heads, mxu_dtype=jnp.float32)
    out_f32 = jax.block_until_ready(out_f32)
    assert out_f32.shape == (batch, seq, hidden)
    assert jnp.allclose(out_f32, ref, rtol=2e-3, atol=2e-3), \
        "f32 mismatch vs JAX reference"

    # Default fast path: bf16 operands / transfers, f32 accumulation.
    out_bf16 = multihead_attention_pallas(x, w_qkv, b_qkv, w_o, b_o, mask,
                                          num_heads)
    out_bf16 = jax.block_until_ready(out_bf16)
    assert out_bf16.shape == (batch, seq, hidden)
    assert jnp.allclose(out_bf16, ref, rtol=2e-2, atol=2e-2), \
        "bf16 mismatch vs JAX reference"

    print("KERNEL_OK")
</pallas_src>

<mosaic_0001>
module attributes {stable_mosaic.version = 11 : i64} {
  func.func @_mha_kernel(%arg0: i32, %arg1: memref<1x8x128xf32, #tpu.memory_space<vmem>>, %arg2: memref<128x1536xf32, #tpu.memory_space<vmem>>, %arg3: memref<1x1536xf32, #tpu.memory_space<vmem>>, %arg4: memref<512x128xf32, #tpu.memory_space<vmem>>, %arg5: memref<1x128xf32, #tpu.memory_space<vmem>>, %arg6: memref<1x1x8x8xf32, #tpu.memory_space<vmem>>, %arg7: memref<1x8x128xf32, #tpu.memory_space<vmem>>) attributes {dimension_semantics = [#tpu.dimension_semantics<parallel>], iteration_bounds = array<i64: 2>, scalar_prefetch = 0 : i64, scratch_operands = 0 : i64, tpu.core_type = #tpu.core_type<tc>, window_params = [{transform_indices = @transform_0, window_bounds = array<i64: 1, 8, 128>}, {pipeline_mode = #tpu.pipeline_mode<synchronous>, transform_indices = @transform_1, window_bounds = array<i64: 128, 1536>}, {pipeline_mode = #tpu.pipeline_mode<synchronous>, transform_indices = @transform_2, window_bounds = array<i64: 1, 1536>}, {pipeline_mode = #tpu.pipeline_mode<synchronous>, transform_indices = @transform_3, window_bounds = array<i64: 512, 128>}, {pipeline_mode = #tpu.pipeline_mode<synchronous>, transform_indices = @transform_4, window_bounds = array<i64: 1, 128>}, {pipeline_mode = #tpu.pipeline_mode<synchronous>, transform_indices = @transform_5, window_bounds = array<i64: 1, 1, 8, 8>}, {transform_indices = @transform_6, window_bounds = array<i64: 1, 8, 128>}]} {
    %c0 = arith.constant 0 : index
    %c0_0 = arith.constant 0 : index
    %c0_1 = arith.constant 0 : index
    %0 = vector.load %arg1[%c0, %c0_0, %c0_1] : memref<1x8x128xf32, #tpu.memory_space<vmem>>, vector<1x8x128xf32>
    %1 = vector.shape_cast %0 : vector<1x8x128xf32> to vector<8x128xf32>
    %c0_2 = arith.constant 0 : index
    %c0_3 = arith.constant 0 : index
    %2 = vector.load %arg2[%c0_2, %c0_3] : memref<128x1536xf32, #tpu.memory_space<vmem>>, vector<128x1536xf32>
    %cst = arith.constant dense<0.000000e+00> : vector<8x1536xf32>
    %3 = tpu.matmul %1, %2, %cst {dimension_numbers = #tpu.dot_dimension_numbers<[1], [0], [0], [1], [0, 0, 1, 1], [], []>} : vector<8x128xf32>, vector<128x1536xf32>, vector<8x1536xf32> -> vector<8x1536xf32>
    %c0_4 = arith.constant 0 : index
    %c0_5 = arith.constant 0 : index
    %4 = vector.load %arg3[%c0_4, %c0_5] : memref<1x1536xf32, #tpu.memory_space<vmem>>, vector<1x1536xf32>
    %5 = vector.broadcast %4 : vector<1x1536xf32> to vector<8x1536xf32>
    %6 = arith.addf %3, %5 : vector<8x1536xf32>
    %c0_6 = arith.constant 0 : index
    %c0_7 = arith.constant 0 : index
    %c0_8 = arith.constant 0 : index
    %c0_9 = arith.constant 0 : index
    %7 = vector.load %arg6[%c0_6, %c0_7, %c0_8, %c0_9] : memref<1x1x8x8xf32, #tpu.memory_space<vmem>>, vector<1x1x8x8xf32>
    %8 = vector.shape_cast %7 : vector<1x1x8x8xf32> to vector<1x8x8xf32>
    %9 = vector.extract_strided_slice %6 {offsets = [0, 0], sizes = [8, 128], strides = [1, 1]} : vector<8x1536xf32> to vector<8x128xf32>
    %10 = vector.shape_cast %9 : vector<8x128xf32> to vector<1x8x128xf32>
    %11 = vector.extract_strided_slice %6 {offsets = [0, 512], sizes = [8, 128], strides = [1, 1]} : vector<8x1536xf32> to vector<8x128xf32>
    %12 = vector.shape_cast %11 : vector<8x128xf32> to vector<1x8x128xf32>
    %13 = vector.extract_strided_slice %6 {offsets = [0, 1024], sizes = [8, 128], strides = [1, 1]} : vector<8x1536xf32> to vector<8x128xf32>
    %14 = vector.shape_cast %13 : vector<8x128xf32> to vector<1x8x128xf32>
    "tpu.trace_start"() <{level = 10 : i32, message = "bqd,bkd->bqk"}> : () -> ()
    %cst_10 = arith.constant dense<0.000000e+00> : vector<1x8x8xf32>
    %15 = tpu.matmul %10, %12, %cst_10 {dimension_numbers = #tpu.dot_dimension_numbers<[2], [2], [1], [1], [0, 0, 0, 1, 1, 1], [0], [0]>} : vector<1x8x128xf32>, vector<1x8x128xf32>, vector<1x8x8xf32> -> vector<1x8x8xf32>
    "tpu.trace_stop"() : () -> ()
    %16 = arith.addf %15, %8 : vector<1x8x8xf32>
    %cst_11 = arith.constant dense<0xFF800000> : vector<1x8xf32>
    %17 = vector.multi_reduction <maximumf>, %16, %cst_11 [2] : vector<1x8x8xf32> to vector<1x8xf32>
    %18 = vector.shape_cast %17 : vector<1x8xf32> to vector<1x8x1xf32>
    %19 = vector.broadcast %18 : vector<1x8x1xf32> to vector<1x8x8xf32>
    %20 = arith.subf %16, %19 : vector<1x8x8xf32>
    %21 = math.exp %20 : vector<1x8x8xf32>
    %cst_12 = arith.constant dense<0.000000e+00> : vector<1x8xf32>
    %22 = vector.multi_reduction <add>, %21, %cst_12 [2] : vector<1x8x8xf32> to vector<1x8xf32>
    %23 = vector.shape_cast %22 : vector<1x8xf32> to vector<1x8x1xf32>
    %24 = tpu.reciprocal %23 {approx = true} : vector<1x8x1xf32> -> vector<1x8x1xf32>
    %25 = vector.broadcast %24 : vector<1x8x1xf32> to vector<1x8x8xf32>
    %26 = arith.mulf %21, %25 : vector<1x8x8xf32>
    "tpu.trace_start"() <{level = 10 : i32, message = "bqk,bkd->bqd"}> : () -> ()
    %cst_13 = arith.constant dense<0.000000e+00> : vector<1x8x128xf32>
    %27 = tpu.matmul %26, %14, %cst_13 {dimension_numbers = #tpu.dot_dimension_numbers<[2], [1], [1], [2], [0, 0, 0, 1, 1, 2], [0], [0]>} : vector<1x8x8xf32>, vector<1x8x128xf32>, vector<1x8x128xf32> -> vector<1x8x128xf32>
    "tpu.trace_stop"() : () -> ()
    %28 = vector.shape_cast %27 : vector<1x8x128xf32> to vector<8x128xf32>
    %29 = vector.extract_strided_slice %6 {offsets = [0, 128], sizes = [8, 128], strides = [1, 1]} : vector<8x1536xf32> to vector<8x128xf32>
    %30 = vector.shape_cast %29 : vector<8x128xf32> to vector<1x8x128xf32>
    %31 = vector.extract_strided_slice %6 {offsets = [0, 640], sizes = [8, 128], strides = [1, 1]} : vector<8x1536xf32> to vector<8x128xf32>
    %32 = vector.shape_cast %31 : vector<8x128xf32> to vector<1x8x128xf32>
    %33 = vector.extract_strided_slice %6 {offsets = [0, 1152], sizes = [8, 128], strides = [1, 1]} : vector<8x1536xf32> to vector<8x128xf32>
    %34 = vector.shape_cast %33 : vector<8x128xf32> to vector<1x8x128xf32>
    "tpu.trace_start"() <{level = 10 : i32, message = "bqd,bkd->bqk"}> : () -> ()
    %cst_14 = arith.constant dense<0.000000e+00> : vector<1x8x8xf32>
    %35 = tpu.matmul %30, %32, %cst_14 {dimension_numbers = #tpu.dot_dimension_numbers<[2], [2], [1], [1], [0, 0, 0, 1, 1, 1], [0], [0]>} : vector<1x8x128xf32>, vector<1x8x128xf32>, vector<1x8x8xf32> -> vector<1x8x8xf32>
    "tpu.trace_stop"() : () -> ()
    %36 = arith.addf %35, %8 : vector<1x8x8xf32>
    %cst_15 = arith.constant dense<0xFF800000> : vector<1x8xf32>
    %37 = vector.multi_reduction <maximumf>, %36, %cst_15 [2] : vector<1x8x8xf32> to vector<1x8xf32>
    %38 = vector.shape_cast %37 : vector<1x8xf32> to vector<1x8x1xf32>
    %39 = vector.broadcast %38 : vector<1x8x1xf32> to vector<1x8x8xf32>
    %40 = arith.subf %36, %39 : vector<1x8x8xf32>
    %41 = math.exp %40 : vector<1x8x8xf32>
    %cst_16 = arith.constant dense<0.000000e+00> : vector<1x8xf32>
    %42 = vector.multi_reduction <add>, %41, %cst_16 [2] : vector<1x8x8xf32> to vector<1x8xf32>
    %43 = vector.shape_cast %42 : vector<1x8xf32> to vector<1x8x1xf32>
    %44 = tpu.reciprocal %43 {approx = true} : vector<1x8x1xf32> -> vector<1x8x1xf32>
    %45 = vector.broadcast %44 : vector<1x8x1xf32> to vector<1x8x8xf32>
    %46 = arith.mulf %41, %45 : vector<1x8x8xf32>
    "tpu.trace_start"() <{level = 10 : i32, message = "bqk,bkd->bqd"}> : () -> ()
    %cst_17 = arith.constant dense<0.000000e+00> : vector<1x8x128xf32>
    %47 = tpu.matmul %46, %34, %cst_17 {dimension_numbers = #tpu.dot_dimension_numbers<[2], [1], [1], [2], [0, 0, 0, 1, 1, 2], [0], [0]>} : vector<1x8x8xf32>, vector<1x8x128xf32>, vector<1x8x128xf32> -> vector<1x8x128xf32>
    "tpu.trace_stop"() : () -> ()
    %48 = vector.shape_cast %47 : vector<1x8x128xf32> to vector<8x128xf32>
    %49 = vector.extract_strided_slice %6 {offsets = [0, 256], sizes = [8, 128], strides = [1, 1]} : vector<8x1536xf32> to vector<8x128xf32>
    %50 = vector.shape_cast %49 : vector<8x128xf32> to vector<1x8x128xf32>
    %51 = vector.extract_strided_slice %6 {offsets = [0, 768], sizes = [8, 128], strides = [1, 1]} : vector<8x1536xf32> to vector<8x128xf32>
    %52 = vector.shape_cast %51 : vector<8x128xf32> to vector<1x8x128xf32>
    %53 = vector.extract_strided_slice %6 {offsets = [0, 1280], sizes = [8, 128], strides = [1, 1]} : vector<8x1536xf32> to vector<8x128xf32>
    %54 = vector.shape_cast %53 : vector<8x128xf32> to vector<1x8x128xf32>
    "tpu.trace_start"() <{level = 10 : i32, message = "bqd,bkd->bqk"}> : () -> ()
    %cst_18 = arith.constant dense<0.000000e+00> : vector<1x8x8xf32>
    %55 = tpu.matmul %50, %52, %cst_18 {dimension_numbers = #tpu.dot_dimension_numbers<[2], [2], [1], [1], [0, 0, 0, 1, 1, 1], [0], [0]>} : vector<1x8x128xf32>, vector<1x8x128xf32>, vector<1x8x8xf32> -> vector<1x8x8xf32>
    "tpu.trace_stop"() : () -> ()
    %56 = arith.addf %55, %8 : vector<1x8x8xf32>
    %cst_19 = arith.constant dense<0xFF800000> : vector<1x8xf32>
    %57 = vector.multi_reduction <maximumf>, %56, %cst_19 [2] : vector<1x8x8xf32> to vector<1x8xf32>
    %58 = vector.shape_cast %57 : vector<1x8xf32> to vector<1x8x1xf32>
    %59 = vector.broadcast %58 : vector<1x8x1xf32> to vector<1x8x8xf32>
    %60 = arith.subf %56, %59 : vector<1x8x8xf32>
    %61 = math.exp %60 : vector<1x8x8xf32>
    %cst_20 = arith.constant dense<0.000000e+00> : vector<1x8xf32>
    %62 = vector.multi_reduction <add>, %61, %cst_20 [2] : vector<1x8x8xf32> to vector<1x8xf32>
    %63 = vector.shape_cast %62 : vector<1x8xf32> to vector<1x8x1xf32>
    %64 = tpu.reciprocal %63 {approx = true} : vector<1x8x1xf32> -> vector<1x8x1xf32>
    %65 = vector.broadcast %64 : vector<1x8x1xf32> to vector<1x8x8xf32>
    %66 = arith.mulf %61, %65 : vector<1x8x8xf32>
    "tpu.trace_start"() <{level = 10 : i32, message = "bqk,bkd->bqd"}> : () -> ()
    %cst_21 = arith.constant dense<0.000000e+00> : vector<1x8x128xf32>
    %67 = tpu.matmul %66, %54, %cst_21 {dimension_numbers = #tpu.dot_dimension_numbers<[2], [1], [1], [2], [0, 0, 0, 1, 1, 2], [0], [0]>} : vector<1x8x8xf32>, vector<1x8x128xf32>, vector<1x8x128xf32> -> vector<1x8x128xf32>
    "tpu.trace_stop"() : () -> ()
    %68 = vector.shape_cast %67 : vector<1x8x128xf32> to vector<8x128xf32>
    %69 = vector.extract_strided_slice %6 {offsets = [0, 384], sizes = [8, 128], strides = [1, 1]} : vector<8x1536xf32> to vector<8x128xf32>
    %70 = vector.shape_cast %69 : vector<8x128xf32> to vector<1x8x128xf32>
    %71 = vector.extract_strided_slice %6 {offsets = [0, 896], sizes = [8, 128], strides = [1, 1]} : vector<8x1536xf32> to vector<8x128xf32>
    %72 = vector.shape_cast %71 : vector<8x128xf32> to vector<1x8x128xf32>
    %73 = vector.extract_strided_slice %6 {offsets = [0, 1408], sizes = [8, 128], strides = [1, 1]} : vector<8x1536xf32> to vector<8x128xf32>
    %74 = vector.shape_cast %73 : vector<8x128xf32> to vector<1x8x128xf32>
    "tpu.trace_start"() <{level = 10 : i32, message = "bqd,bkd->bqk"}> : () -> ()
    %cst_22 = arith.constant dense<0.000000e+00> : vector<1x8x8xf32>
    %75 = tpu.matmul %70, %72, %cst_22 {dimension_numbers = #tpu.dot_dimension_numbers<[2], [2], [1], [1], [0, 0, 0, 1, 1, 1], [0], [0]>} : vector<1x8x128xf32>, vector<1x8x128xf32>, vector<1x8x8xf32> -> vector<1x8x8xf32>
    "tpu.trace_stop"() : () -> ()
    %76 = arith.addf %75, %8 : vector<1x8x8xf32>
    %cst_23 = arith.constant dense<0xFF800000> : vector<1x8xf32>
    %77 = vector.multi_reduction <maximumf>, %76, %cst_23 [2] : vector<1x8x8xf32> to vector<1x8xf32>
    %78 = vector.shape_cast %77 : vector<1x8xf32> to vector<1x8x1xf32>
    %79 = vector.broadcast %78 : vector<1x8x1xf32> to vector<1x8x8xf32>
    %80 = arith.subf %76, %79 : vector<1x8x8xf32>
    %81 = math.exp %80 : vector<1x8x8xf32>
    %cst_24 = arith.constant dense<0.000000e+00> : vector<1x8xf32>
    %82 = vector.multi_reduction <add>, %81, %cst_24 [2] : vector<1x8x8xf32> to vector<1x8xf32>
    %83 = vector.shape_cast %82 : vector<1x8xf32> to vector<1x8x1xf32>
    %84 = tpu.reciprocal %83 {approx = true} : vector<1x8x1xf32> -> vector<1x8x1xf32>
    %85 = vector.broadcast %84 : vector<1x8x1xf32> to vector<1x8x8xf32>
    %86 = arith.mulf %81, %85 : vector<1x8x8xf32>
    "tpu.trace_start"() <{level = 10 : i32, message = "bqk,bkd->bqd"}> : () -> ()
    %cst_25 = arith.constant dense<0.000000e+00> : vector<1x8x128xf32>
    %87 = tpu.matmul %86, %74, %cst_25 {dimension_numbers = #tpu.dot_dimension_numbers<[2], [1], [1], [2], [0, 0, 0, 1, 1, 2], [0], [0]>} : vector<1x8x8xf32>, vector<1x8x128xf32>, vector<1x8x128xf32> -> vector<1x8x128xf32>
    "tpu.trace_stop"() : () -> ()
    %88 = vector.shape_cast %87 : vector<1x8x128xf32> to vector<8x128xf32>
    %89 = tpu.concatenate %28, %48, %68, %88 in 1 : vector<8x128xf32>, vector<8x128xf32>, vector<8x128xf32>, vector<8x128xf32> -> vector<8x512xf32>
    %c0_26 = arith.constant 0 : index
    %c0_27 = arith.constant 0 : index
    %90 = vector.load %arg4[%c0_26, %c0_27] : memref<512x128xf32, #tpu.memory_space<vmem>>, vector<512x128xf32>
    %cst_28 = arith.constant dense<0.000000e+00> : vector<8x128xf32>
    %91 = tpu.matmul %89, %90, %cst_28 {dimension_numbers = #tpu.dot_dimension_numbers<[1], [0], [0], [1], [0, 0, 1, 1], [], []>} : vector<8x512xf32>, vector<512x128xf32>, vector<8x128xf32> -> vector<8x128xf32>
    %c0_29 = arith.constant 0 : index
    %c0_30 = arith.constant 0 : index
    %92 = vector.load %arg5[%c0_29, %c0_30] : memref<1x128xf32, #tpu.memory_space<vmem>>, vector<1x128xf32>
    %93 = vector.broadcast %92 : vector<1x128xf32> to vector<8x128xf32>
    %94 = arith.addf %91, %93 : vector<8x128xf32>
    %95 = vector.shape_cast %94 : vector<8x128xf32> to vector<1x8x128xf32>
    %c0_31 = arith.constant 0 : index
    %c0_32 = arith.constant 0 : index
    %c0_33 = arith.constant 0 : index
    %96 = vector.load %arg7[%c0_31, %c0_32, %c0_33] : memref<1x8x128xf32, #tpu.memory_space<vmem>>, vector<1x8x128xf32>
    tpu.vector_store %arg7[%c0_31, %c0_32, %c0_33], %95 {strides = array<i32>} : memref<1x8x128xf32, #tpu.memory_space<vmem>>, vector<1x8x128xf32>,
    return
  }
  func.func @transform_0(%arg0: i32) -> (i32, i32, i32) {
    %c0_i32 = arith.constant 0 : i32
    %c0_i32_0 = arith.constant 0 : i32
    %c0_i32_1 = arith.constant 0 : i32
    return %arg0, %c0_i32, %c0_i32_0 : i32, i32, i32
  }
  func.func @transform_1(%arg0: i32) -> (i32, i32) {
    %c0_i32 = arith.constant 0 : i32
    %c0_i32_0 = arith.constant 0 : i32
    %c0_i32_1 = arith.constant 0 : i32
    return %c0_i32, %c0_i32_0 : i32, i32
  }
  func.func @transform_2(%arg0: i32) -> (i32, i32) {
    %c0_i32 = arith.constant 0 : i32
    %c0_i32_0 = arith.constant 0 : i32
    %c0_i32_1 = arith.constant 0 : i32
    return %c0_i32, %c0_i32_0 : i32, i32
  }
  func.func @transform_3(%arg0: i32) -> (i32, i32) {
    %c0_i32 = arith.constant 0 : i32
    %c0_i32_0 = arith.constant 0 : i32
    %c0_i32_1 = arith.constant 0 : i32
    return %c0_i32, %c0_i32_0 : i32, i32
  }
  func.func @transform_4(%arg0: i32) -> (i32, i32) {
    %c0_i32 = arith.constant 0 : i32
    %c0_i32_0 = arith.constant 0 : i32
    %c0_i32_1 = arith.constant 0 : i32
    return %c0_i32, %c0_i32_0 : i32, i32
  }
  func.func @transform_5(%arg0: i32) -> (i32, i32, i32, i32) {
    %c0_i32 = arith.constant 0 : i32
    %c0_i32_0 = arith.constant 0 : i32
    %c0_i32_1 = arith.constant 0 : i32
    %c0_i32_2 = arith.constant 0 : i32
    %c0_i32_3 = arith.constant 0 : i32
    return %c0_i32, %c0_i32_0, %c0_i32_1, %c0_i32_2 : i32, i32, i32, i32
  }
  func.func @transform_6(%arg0: i32) -> (i32, i32, i32) {
    %c0_i32 = arith.constant 0 : i32
    %c0_i32_0 = arith.constant 0 : i32
    %c0_i32_1 = arith.constant 0 : i32
    return %arg0, %c0_i32, %c0_i32_0 : i32, i32, i32
  }
}

module attributes {stable_mosaic.version = 11 : i64} {
  func.func @_mha_kernel(%arg0: i32, %arg1: memref<1x8x128xf32, #tpu.memory_space<vmem>>, %arg2: memref<128x1536xf32, #tpu.memory_space<vmem>>, %arg3: memref<1x1536xf32, #tpu.memory_space<vmem>>, %arg4: memref<512x128xf32, #tpu.memory_space<vmem>>, %arg5: memref<1x128xf32, #tpu.memory_space<vmem>>, %arg6: memref<1x1x8x8xf32, #tpu.memory_space<vmem>>, %arg7: memref<1x8x128xf32, #tpu.memory_space<vmem>>) attributes {dimension_semantics = [#tpu.dimension_semantics<parallel>], iteration_bounds = array<i64: 2>, scalar_prefetch = 0 : i64, scratch_operands = 0 : i64, tpu.core_type = #tpu.core_type<tc>, window_params = [{transform_indices = @transform_0, window_bounds = array<i64: 1, 8, 128>}, {pipeline_mode = #tpu.pipeline_mode<synchronous>, transform_indices = @transform_1, window_bounds = array<i64: 128, 1536>}, {pipeline_mode = #tpu.pipeline_mode<synchronous>, transform_indices = @transform_2, window_bounds = array<i64: 1, 1536>}, {pipeline_mode = #tpu.pipeline_mode<synchronous>, transform_indices = @transform_3, window_bounds = array<i64: 512, 128>}, {pipeline_mode = #tpu.pipeline_mode<synchronous>, transform_indices = @transform_4, window_bounds = array<i64: 1, 128>}, {pipeline_mode = #tpu.pipeline_mode<synchronous>, transform_indices = @transform_5, window_bounds = array<i64: 1, 1, 8, 8>}, {transform_indices = @transform_6, window_bounds = array<i64: 1, 8, 128>}]} {
    %c0 = arith.constant 0 : index
    %c0_0 = arith.constant 0 : index
    %c0_1 = arith.constant 0 : index
    %0 = vector.load %arg1[%c0, %c0_0, %c0_1] : memref<1x8x128xf32, #tpu.memory_space<vmem>>, vector<1x8x128xf32>
    %1 = vector.shape_cast %0 : vector<1x8x128xf32> to vector<8x128xf32>
    %c0_2 = arith.constant 0 : index
    %c0_3 = arith.constant 0 : index
    %2 = vector.load %arg2[%c0_2, %c0_3] : memref<128x1536xf32, #tpu.memory_space<vmem>>, vector<128x1536xf32>
    %cst = arith.constant dense<0.000000e+00> : vector<8x1536xf32>
    %3 = tpu.matmul %1, %2, %cst {dimension_numbers = #tpu.dot_dimension_numbers<[1], [0], [0], [1], [0, 0, 1, 1], [], []>} : vector<8x128xf32>, vector<128x1536xf32>, vector<8x1536xf32> -> vector<8x1536xf32>
    %c0_4 = arith.constant 0 : index
    %c0_5 = arith.constant 0 : index
    %4 = vector.load %arg3[%c0_4, %c0_5] : memref<1x1536xf32, #tpu.memory_space<vmem>>, vector<1x1536xf32>
    %5 = vector.broadcast %4 : vector<1x1536xf32> to vector<8x1536xf32>
    %6 = arith.addf %3, %5 : vector<8x1536xf32>
    %c0_6 = arith.constant 0 : index
    %c0_7 = arith.constant 0 : index
    %c0_8 = arith.constant 0 : index
    %c0_9 = arith.constant 0 : index
    %7 = vector.load %arg6[%c0_6, %c0_7, %c0_8, %c0_9] : memref<1x1x8x8xf32, #tpu.memory_space<vmem>>, vector<1x1x8x8xf32>
    %8 = vector.shape_cast %7 : vector<1x1x8x8xf32> to vector<1x8x8xf32>
    %9 = vector.extract_strided_slice %6 {offsets = [0, 0], sizes = [8, 128], strides = [1, 1]} : vector<8x1536xf32> to vector<8x128xf32>
    %10 = vector.shape_cast %9 : vector<8x128xf32> to vector<1x8x128xf32>
    %11 = vector.extract_strided_slice %6 {offsets = [0, 512], sizes = [8, 128], strides = [1, 1]} : vector<8x1536xf32> to vector<8x128xf32>
    %12 = vector.shape_cast %11 : vector<8x128xf32> to vector<1x8x128xf32>
    %13 = vector.extract_strided_slice %6 {offsets = [0, 1024], sizes = [8, 128], strides = [1, 1]} : vector<8x1536xf32> to vector<8x128xf32>
    %14 = vector.shape_cast %13 : vector<8x128xf32> to vector<1x8x128xf32>
    "tpu.trace_start"() <{level = 10 : i32, message = "bqd,bkd->bqk"}> : () -> ()
    %cst_10 = arith.constant dense<0.000000e+00> : vector<1x8x8xf32>
    %15 = tpu.matmul %10, %12, %cst_10 {dimension_numbers = #tpu.dot_dimension_numbers<[2], [2], [1], [1], [0, 0, 0, 1, 1, 1], [0], [0]>} : vector<1x8x128xf32>, vector<1x8x128xf32>, vector<1x8x8xf32> -> vector<1x8x8xf32>
    "tpu.trace_stop"() : () -> ()
    %16 = arith.addf %15, %8 : vector<1x8x8xf32>
    %cst_11 = arith.constant dense<0xFF800000> : vector<1x8xf32>
    %17 = vector.multi_reduction <maximumf>, %16, %cst_11 [2] : vector<1x8x8xf32> to vector<1x8xf32>
    %18 = vector.shape_cast %17 : vector<1x8xf32> to vector<1x8x1xf32>
    %19 = vector.broadcast %18 : vector<1x8x1xf32> to vector<1x8x8xf32>
    %20 = arith.subf %16, %19 : vector<1x8x8xf32>
    %21 = math.exp %20 : vector<1x8x8xf32>
    %cst_12 = arith.constant dense<0.000000e+00> : vector<1x8xf32>
    %22 = vector.multi_reduction <add>, %21, %cst_12 [2] : vector<1x8x8xf32> to vector<1x8xf32>
    %23 = vector.shape_cast %22 : vector<1x8xf32> to vector<1x8x1xf32>
    %24 = tpu.reciprocal %23 {approx = true} : vector<1x8x1xf32> -> vector<1x8x1xf32>
    %25 = vector.broadcast %24 : vector<1x8x1xf32> to vector<1x8x8xf32>
    %26 = arith.mulf %21, %25 : vector<1x8x8xf32>
    "tpu.trace_start"() <{level = 10 : i32, message = "bqk,bkd->bqd"}> : () -> ()
    %cst_13 = arith.constant dense<0.000000e+00> : vector<1x8x128xf32>
    %27 = tpu.matmul %26, %14, %cst_13 {dimension_numbers = #tpu.dot_dimension_numbers<[2], [1], [1], [2], [0, 0, 0, 1, 1, 2], [0], [0]>} : vector<1x8x8xf32>, vector<1x8x128xf32>, vector<1x8x128xf32> -> vector<1x8x128xf32>
    "tpu.trace_stop"() : () -> ()
    %28 = vector.shape_cast %27 : vector<1x8x128xf32> to vector<8x128xf32>
    %29 = vector.extract_strided_slice %6 {offsets = [0, 128], sizes = [8, 128], strides = [1, 1]} : vector<8x1536xf32> to vector<8x128xf32>
    %30 = vector.shape_cast %29 : vector<8x128xf32> to vector<1x8x128xf32>
    %31 = vector.extract_strided_slice %6 {offsets = [0, 640], sizes = [8, 128], strides = [1, 1]} : vector<8x1536xf32> to vector<8x128xf32>
    %32 = vector.shape_cast %31 : vector<8x128xf32> to vector<1x8x128xf32>
    %33 = vector.extract_strided_slice %6 {offsets = [0, 1152], sizes = [8, 128], strides = [1, 1]} : vector<8x1536xf32> to vector<8x128xf32>
    %34 = vector.shape_cast %33 : vector<8x128xf32> to vector<1x8x128xf32>
    "tpu.trace_start"() <{level = 10 : i32, message = "bqd,bkd->bqk"}> : () -> ()
    %cst_14 = arith.constant dense<0.000000e+00> : vector<1x8x8xf32>
    %35 = tpu.matmul %30, %32, %cst_14 {dimension_numbers = #tpu.dot_dimension_numbers<[2], [2], [1], [1], [0, 0, 0, 1, 1, 1], [0], [0]>} : vector<1x8x128xf32>, vector<1x8x128xf32>, vector<1x8x8xf32> -> vector<1x8x8xf32>
    "tpu.trace_stop"() : () -> ()
    %36 = arith.addf %35, %8 : vector<1x8x8xf32>
    %cst_15 = arith.constant dense<0xFF800000> : vector<1x8xf32>
    %37 = vector.multi_reduction <maximumf>, %36, %cst_15 [2] : vector<1x8x8xf32> to vector<1x8xf32>
    %38 = vector.shape_cast %37 : vector<1x8xf32> to vector<1x8x1xf32>
    %39 = vector.broadcast %38 : vector<1x8x1xf32> to vector<1x8x8xf32>
    %40 = arith.subf %36, %39 : vector<1x8x8xf32>
    %41 = math.exp %40 : vector<1x8x8xf32>
    %cst_16 = arith.constant dense<0.000000e+00> : vector<1x8xf32>
    %42 = vector.multi_reduction <add>, %41, %cst_16 [2] : vector<1x8x8xf32> to vector<1x8xf32>
    %43 = vector.shape_cast %42 : vector<1x8xf32> to vector<1x8x1xf32>
    %44 = tpu.reciprocal %43 {approx = true} : vector<1x8x1xf32> -> vector<1x8x1xf32>
    %45 = vector.broadcast %44 : vector<1x8x1xf32> to vector<1x8x8xf32>
    %46 = arith.mulf %41, %45 : vector<1x8x8xf32>
    "tpu.trace_start"() <{level = 10 : i32, message = "bqk,bkd->bqd"}> : () -> ()
    %cst_17 = arith.constant dense<0.000000e+00> : vector<1x8x128xf32>
    %47 = tpu.matmul %46, %34, %cst_17 {dimension_numbers = #tpu.dot_dimension_numbers<[2], [1], [1], [2], [0, 0, 0, 1, 1, 2], [0], [0]>} : vector<1x8x8xf32>, vector<1x8x128xf32>, vector<1x8x128xf32> -> vector<1x8x128xf32>
    "tpu.trace_stop"() : () -> ()
    %48 = vector.shape_cast %47 : vector<1x8x128xf32> to vector<8x128xf32>
    %49 = vector.extract_strided_slice %6 {offsets = [0, 256], sizes = [8, 128], strides = [1, 1]} : vector<8x1536xf32> to vector<8x128xf32>
    %50 = vector.shape_cast %49 : vector<8x128xf32> to vector<1x8x128xf32>
    %51 = vector.extract_strided_slice %6 {offsets = [0, 768], sizes = [8, 128], strides = [1, 1]} : vector<8x1536xf32> to vector<8x128xf32>
    %52 = vector.shape_cast %51 : vector<8x128xf32> to vector<1x8x128xf32>
    %53 = vector.extract_strided_slice %6 {offsets = [0, 1280], sizes = [8, 128], strides = [1, 1]} : vector<8x1536xf32> to vector<8x128xf32>
    %54 = vector.shape_cast %53 : vector<8x128xf32> to vector<1x8x128xf32>
    "tpu.trace_start"() <{level = 10 : i32, message = "bqd,bkd->bqk"}> : () -> ()
    %cst_18 = arith.constant dense<0.000000e+00> : vector<1x8x8xf32>
    %55 = tpu.matmul %50, %52, %cst_18 {dimension_numbers = #tpu.dot_dimension_numbers<[2], [2], [1], [1], [0, 0, 0, 1, 1, 1], [0], [0]>} : vector<1x8x128xf32>, vector<1x8x128xf32>, vector<1x8x8xf32> -> vector<1x8x8xf32>
    "tpu.trace_stop"() : () -> ()
    %56 = arith.addf %55, %8 : vector<1x8x8xf32>
    %cst_19 = arith.constant dense<0xFF800000> : vector<1x8xf32>
    %57 = vector.multi_reduction <maximumf>, %56, %cst_19 [2] : vector<1x8x8xf32> to vector<1x8xf32>
    %58 = vector.shape_cast %57 : vector<1x8xf32> to vector<1x8x1xf32>
    %59 = vector.broadcast %58 : vector<1x8x1xf32> to vector<1x8x8xf32>
    %60 = arith.subf %56, %59 : vector<1x8x8xf32>
    %61 = math.exp %60 : vector<1x8x8xf32>
    %cst_20 = arith.constant dense<0.000000e+00> : vector<1x8xf32>
    %62 = vector.multi_reduction <add>, %61, %cst_20 [2] : vector<1x8x8xf32> to vector<1x8xf32>
    %63 = vector.shape_cast %62 : vector<1x8xf32> to vector<1x8x1xf32>
    %64 = tpu.reciprocal %63 {approx = true} : vector<1x8x1xf32> -> vector<1x8x1xf32>
    %65 = vector.broadcast %64 : vector<1x8x1xf32> to vector<1x8x8xf32>
    %66 = arith.mulf %61, %65 : vector<1x8x8xf32>
    "tpu.trace_start"() <{level = 10 : i32, message = "bqk,bkd->bqd"}> : () -> ()
    %cst_21 = arith.constant dense<0.000000e+00> : vector<1x8x128xf32>
    %67 = tpu.matmul %66, %54, %cst_21 {dimension_numbers = #tpu.dot_dimension_numbers<[2], [1], [1], [2], [0, 0, 0, 1, 1, 2], [0], [0]>} : vector<1x8x8xf32>, vector<1x8x128xf32>, vector<1x8x128xf32> -> vector<1x8x128xf32>
    "tpu.trace_stop"() : () -> ()
    %68 = vector.shape_cast %67 : vector<1x8x128xf32> to vector<8x128xf32>
    %69 = vector.extract_strided_slice %6 {offsets = [0, 384], sizes = [8, 128], strides = [1, 1]} : vector<8x1536xf32> to vector<8x128xf32>
    %70 = vector.shape_cast %69 : vector<8x128xf32> to vector<1x8x128xf32>
    %71 = vector.extract_strided_slice %6 {offsets = [0, 896], sizes = [8, 128], strides = [1, 1]} : vector<8x1536xf32> to vector<8x128xf32>
    %72 = vector.shape_cast %71 : vector<8x128xf32> to vector<1x8x128xf32>
    %73 = vector.extract_strided_slice %6 {offsets = [0, 1408], sizes = [8, 128], strides = [1, 1]} : vector<8x1536xf32> to vector<8x128xf32>
    %74 = vector.shape_cast %73 : vector<8x128xf32> to vector<1x8x128xf32>
    "tpu.trace_start"() <{level = 10 : i32, message = "bqd,bkd->bqk"}> : () -> ()
    %cst_22 = arith.constant dense<0.000000e+00> : vector<1x8x8xf32>
    %75 = tpu.matmul %70, %72, %cst_22 {dimension_numbers = #tpu.dot_dimension_numbers<[2], [2], [1], [1], [0, 0, 0, 1, 1, 1], [0], [0]>} : vector<1x8x128xf32>, vector<1x8x128xf32>, vector<1x8x8xf32> -> vector<1x8x8xf32>
    "tpu.trace_stop"() : () -> ()
    %76 = arith.addf %75, %8 : vector<1x8x8xf32>
    %cst_23 = arith.constant dense<0xFF800000> : vector<1x8xf32>
    %77 = vector.multi_reduction <maximumf>, %76, %cst_23 [2] : vector<1x8x8xf32> to vector<1x8xf32>
    %78 = vector.shape_cast %77 : vector<1x8xf32> to vector<1x8x1xf32>
    %79 = vector.broadcast %78 : vector<1x8x1xf32> to vector<1x8x8xf32>
    %80 = arith.subf %76, %79 : vector<1x8x8xf32>
    %81 = math.exp %80 : vector<1x8x8xf32>
    %cst_24 = arith.constant dense<0.000000e+00> : vector<1x8xf32>
    %82 = vector.multi_reduction <add>, %81, %cst_24 [2] : vector<1x8x8xf32> to vector<1x8xf32>
    %83 = vector.shape_cast %82 : vector<1x8xf32> to vector<1x8x1xf32>
    %84 = tpu.reciprocal %83 {approx = true} : vector<1x8x1xf32> -> vector<1x8x1xf32>
    %85 = vector.broadcast %84 : vector<1x8x1xf32> to vector<1x8x8xf32>
    %86 = arith.mulf %81, %85 : vector<1x8x8xf32>
    "tpu.trace_start"() <{level = 10 : i32, message = "bqk,bkd->bqd"}> : () -> ()
    %cst_25 = arith.constant dense<0.000000e+00> : vector<1x8x128xf32>
    %87 = tpu.matmul %86, %74, %cst_25 {dimension_numbers = #tpu.dot_dimension_numbers<[2], [1], [1], [2], [0, 0, 0, 1, 1, 2], [0], [0]>} : vector<1x8x8xf32>, vector<1x8x128xf32>, vector<1x8x128xf32> -> vector<1x8x128xf32>
    "tpu.trace_stop"() : () -> ()
    %88 = vector.shape_cast %87 : vector<1x8x128xf32> to vector<8x128xf32>
    %89 = tpu.concatenate %28, %48, %68, %88 in 1 : vector<8x128xf32>, vector<8x128xf32>, vector<8x128xf32>, vector<8x128xf32> -> vector<8x512xf32>
    %c0_26 = arith.constant 0 : index
    %c0_27 = arith.constant 0 : index
    %90 = vector.load %arg4[%c0_26, %c0_27] : memref<512x128xf32, #tpu.memory_space<vmem>>, vector<512x128xf32>
    %cst_28 = arith.constant dense<0.000000e+00> : vector<8x128xf32>
    %91 = tpu.matmul %89, %90, %cst_28 {dimension_numbers = #tpu.dot_dimension_numbers<[1], [0], [0], [1], [0, 0, 1, 1], [], []>} : vector<8x512xf32>, vector<512x128xf32>, vector<8x128xf32> -> vector<8x128xf32>
    %c0_29 = arith.constant 0 : index
    %c0_30 = arith.constant 0 : index
    %92 = vector.load %arg5[%c0_29, %c0_30] : memref<1x128xf32, #tpu.memory_space<vmem>>, vector<1x128xf32>
    %93 = vector.broadcast %92 : vector<1x128xf32> to vector<8x128xf32>
    %94 = arith.addf %91, %93 : vector<8x128xf32>
    %95 = vector.shape_cast %94 : vector<8x128xf32> to vector<1x8x128xf32>
    %c0_31 = arith.constant 0 : index
    %c0_32 = arith.constant 0 : index
    %c0_33 = arith.constant 0 : index
    %96 = vector.load %arg7[%c0_31, %c0_32, %c0_33] : memref<1x8x128xf32, #tpu.memory_space<vmem>>, vector<1x8x128xf32>
    tpu.vector_store %arg7[%c0_31, %c0_32, %c0_33], %95 {strides = array<i32>} : memref<1x8x128xf32, #tpu.memory_space<vmem>>, vector<1x8x128xf32>,
    return
  }
  func.func @transform_0(%arg0: i32) -> (i32, i32, i32) {
    %c0_i32 = arith.constant 0 : i32
    %c0_i32_0 = arith.constant 0 : i32
    %c0_i32_1 = arith.constant 0 : i32
    return %arg0, %c0_i32, %c0_i32_0 : i32, i32, i32
  }
  func.func @transform_1(%arg0: i32) -> (i32, i32) {
    %c0_i32 = arith.constant 0 : i32
    %c0_i32_0 = arith.constant 0 : i32
    %c0_i32_1 = arith.constant 0 : i32
    return %c0_i32, %c0_i32_0 : i32, i32
  }
  func.func @transform_2(%arg0: i32) -> (i32, i32) {
    %c0_i32 = arith.constant 0 : i32
    %c0_i32_0 = arith.constant 0 : i32
    %c0_i32_1 = arith.constant 0 : i32
    return %c0_i32, %c0_i32_0 : i32, i32
  }
  func.func @transform_3(%arg0: i32) -> (i32, i32) {
    %c0_i32 = arith.constant 0 : i32
    %c0_i32_0 = arith.constant 0 : i32
    %c0_i32_1 = arith.constant 0 : i32
    return %c0_i32, %c0_i32_0 : i32, i32
  }
  func.func @transform_4(%arg0: i32) -> (i32, i32) {
    %c0_i32 = arith.constant 0 : i32
    %c0_i32_0 = arith.constant 0 : i32
    %c0_i32_1 = arith.constant 0 : i32
    return %c0_i32, %c0_i32_0 : i32, i32
  }
  func.func @transform_5(%arg0: i32) -> (i32, i32, i32, i32) {
    %c0_i32 = arith.constant 0 : i32
    %c0_i32_0 = arith.constant 0 : i32
    %c0_i32_1 = arith.constant 0 : i32
    %c0_i32_2 = arith.constant 0 : i32
    %c0_i32_3 = arith.constant 0 : i32
    return %c0_i32, %c0_i32_0, %c0_i32_1, %c0_i32_2 : i32, i32, i32, i32
  }
  func.func @transform_6(%arg0: i32) -> (i32, i32, i32) {
    %c0_i32 = arith.constant 0 : i32
    %c0_i32_0 = arith.constant 0 : i32
    %c0_i32_1 = arith.constant 0 : i32
    return %arg0, %c0_i32, %c0_i32_0 : i32, i32, i32
  }
}

</mosaic_0001>

<llo_original>
// kernel: tpu_custom_call.1
$region0: #{tpu_custom_call.1}
  #allocation0 [shape = 'u32[]', space=smem, size = 0x4, offset = 0x4, fixed_abs, tag = 'smem constant byte address 0x4 - core index']
  #allocation1 [shape = 'u32[144,128]{1,0:T(1,128)}', space=vmem, size = 0x12000, scoped, tag = 'internal scratch']
  %s0 = inlined_call_operand.hbm [shape: f32[2,8,128], index: 0, kind: input, shape index: {}]
  %s1 = inlined_call_operand.hbm [shape: f32[128,1536], index: 1, kind: input, shape index: {}]
  %s2 = inlined_call_operand.hbm [shape: f32[1,1536], index: 2, kind: input, shape index: {}]
  %s3 = inlined_call_operand.hbm [shape: f32[512,128], index: 3, kind: input, shape index: {}]
  %s4 = inlined_call_operand.vmem [shape: f32[1,128], index: 4, kind: input, shape index: {}]
  %s5 = inlined_call_operand.vmem [shape: f32[1,1,8,8], index: 5, kind: input, shape index: {}]
  %s6 = inlined_call_operand.hbm [shape: f32[2,8,128], index: 6, kind: output, shape index: {}]
  %s7 = sld [smem:[#allocation0]]
  $region73: #{tpu_custom_call.1} parent=0
    _
  %s9 = ssub.s32 1, %s7
  %s10 = scalar_select 0, %s9, %s7
  $region1: #{tpu_custom_call.1} parent=0
    #allocation2 [shape = 'u8[8192]{0}', space=vmem, size = 0x2000, scoped, tag = 'input window, operand 0']
    #allocation3 [shape = 's32[2]{0}', space=sflag, size = 0x8, scoped, tag = 'scoped memory for tpu_custom_call.1']
    #allocation4 [shape = 's32[2]{0}', space=sflag, size = 0x8, scoped, tag = 'scoped memory for tpu_custom_call.1']
    #allocation5 [shape = 'u8[786432]{0}', space=vmem, size = 0xc0000, scoped, tag = 'input window, operand 1, single buffered']
    #allocation6 [shape = 's32[1]{0}', space=sflag, size = 0x4, scoped, tag = 'scoped memory for tpu_custom_call.1']
    #allocation7 [shape = 'u8[6144]{0}', space=vmem, size = 0x1800, scoped, tag = 'input window, operand 2, single buffered']
    #allocation8 [shape = 'u8[262144]{0}', space=vmem, size = 0x40000, scoped, tag = 'input window, operand 3, single buffered']
    #allocation9 [shape = 's32[1]{0}', space=sflag, size = 0x4, scoped, tag = 'scoped memory for tpu_custom_call.1']
    #allocation10 [shape = 'u8[8192]{0}', space=vmem, size = 0x2000, scoped, tag = 'output window, operand 0']
    %11 = vsyncpa [#allocation3], 0
    %s12 = scalar_lea.sflag [#allocation3], 1
    %13 = vsyncpa %s12, 0
    %14 = vsyncpa [#allocation6], 0
    %15 = vsyncpa [#allocation9], 0
    %16 = vsyncpa [#allocation4], 0
    %s17 = scalar_lea.sflag [#allocation4], 1
    %18 = vsyncpa %s17, 0
    loop: start=0, step=1, limit=4
    $region2: #{tpu_custom_call.1} parent=1 // loop_pre_header
      _
    $region3: #{tpu_custom_call.1} parent=1 // loop_header
      %s20 = sphi 0, %s24
      %p21 = scmp.ge.s32.totalorder %s20, 4
      %s30 = sphi 0, %s32
      %s33 = sphi 0, %s30
      %s34 = sphi 0, %s33
      %s50 = sphi 0, %s34
      %s54 = sphi 0, %s54
      %s56 = sphi 0, %s54
      %s57 = sphi 0, %s56
      %s71 = sphi 0, %s57
      %s75 = sphi 0, %s75
      %s77 = sphi 0, %s75
      %s78 = sphi 0, %s77
      %s92 = sphi 0, %s78
      %s96 = sphi 0, %s96
      %s98 = sphi 0, %s96
      %s99 = sphi 0, %s98
      %s113 = sphi 0, %s99
      %s117 = sphi 0, %s117
      %s119 = sphi 0, %s117
      %s120 = sphi 0, %s119
      %s134 = sphi 0, %s120
      %s138 = sphi 0, %s138
      %s140 = sphi 0, %s138
      %s141 = sphi 0, %s140
      %s155 = sphi 0, %s141
      %s161 = sphi 0, %s163
      %s164 = sphi 0, %s161
      %s165 = sphi 0, %s164
      %s181 = sphi 0, %s165
    $region4: #{tpu_custom_call.1} parent=1 // loop_header_branch
      %23 = sbr.rel (%p21) target = $region8
    $region5: #{tpu_custom_call.1} parent=1 // loop_body
      %s25 = ssub.s32 %s20, 1
      %s26 = ssub.s32 %s20, 2
      %s27 = sadd.s32 %s20, 1
      %s28 = ssub.s32 %s20, %s27
      %p29 = scmp.eq.s32.totalorder %s28, 0
      %s31 = sadd.s32 %s30, 1
      %s32 = scalar_select %p29, %s30, %s31
      %p35 = pneg %p29
      %p36 = scmp.eq.s32.totalorder %s20, 1
      %p37 = por %p35, %p36
      %p38 = scmp.ne.s32.totalorder %s30, %s33
      %p39 = scmp.eq.s32.totalorder %s20, 0
      %p40 = por %p38, %p39
      %p41 = scmp.ne.s32.totalorder %s30, %s33
      %p42 = scmp.eq.s32.totalorder %s25, 1
      %p43 = por %p41, %p42
      %p44 = scmp.ne.s32.totalorder %s33, %s34
      %p45 = scmp.eq.s32.totalorder %s25, 0
      %p46 = por %p44, %p45
      %p47 = scmp.ne.s32.totalorder %s33, %s34
      %p48 = scmp.eq.s32.totalorder %s26, 1
      %p49 = por %p47, %p48
      %p51 = scmp.ne.s32.totalorder %s34, %s50
      %p52 = scmp.eq.s32.totalorder %s26, 0
      %p53 = por %p51, %p52
      %s55 = sadd.s32 %s54, 1
      %p58 = scmp.eq.s32.totalorder %s20, 1
      %p59 = scmp.ne.s32.totalorder %s54, %s56
      %p60 = scmp.eq.s32.totalorder %s20, 0
      %p61 = por %p59, %p60
      %p62 = scmp.ne.s32.totalorder %s54, %s56
      %p63 = scmp.eq.s32.totalorder %s25, 1
      %p64 = por %p62, %p63
      %p65 = scmp.ne.s32.totalorder %s56, %s57
      %p66 = scmp.eq.s32.totalorder %s25, 0
      %p67 = por %p65, %p66
      %p68 = scmp.ne.s32.totalorder %s56, %s57
      %p69 = scmp.eq.s32.totalorder %s26, 1
      %p70 = por %p68, %p69
      %p72 = scmp.ne.s32.totalorder %s57, %s71
      %p73 = scmp.eq.s32.totalorder %s26, 0
      %p74 = por %p72, %p73
      %s76 = sadd.s32 %s75, 1
      %p79 = scmp.eq.s32.totalorder %s20, 1
      %p80 = scmp.ne.s32.totalorder %s75, %s77
      %p81 = scmp.eq.s32.totalorder %s20, 0
      %p82 = por %p80, %p81
      %p83 = scmp.ne.s32.totalorder %s75, %s77
      %p84 = scmp.eq.s32.totalorder %s25, 1
      %p85 = por %p83, %p84
      %p86 = scmp.ne.s32.totalorder %s77, %s78
      %p87 = scmp.eq.s32.totalorder %s25, 0
      %p88 = por %p86, %p87
      %p89 = scmp.ne.s32.totalorder %s77, %s78
      %p90 = scmp.eq.s32.totalorder %s26, 1
      %p91 = por %p89, %p90
      %p93 = scmp.ne.s32.totalorder %s78, %s92
      %p94 = scmp.eq.s32.totalorder %s26, 0
      %p95 = por %p93, %p94
      %s97 = sadd.s32 %s96, 1
      %p100 = scmp.eq.s32.totalorder %s20, 1
      %p101 = scmp.ne.s32.totalorder %s96, %s98
      %p102 = scmp.eq.s32.totalorder %s20, 0
      %p103 = por %p101, %p102
      %p104 = scmp.ne.s32.totalorder %s96, %s98
      %p105 = scmp.eq.s32.totalorder %s25, 1
      %p106 = por %p104, %p105
      %p107 = scmp.ne.s32.totalorder %s98, %s99
      %p108 = scmp.eq.s32.totalorder %s25, 0
      %p109 = por %p107, %p108
      %p110 = scmp.ne.s32.totalorder %s98, %s99
      %p111 = scmp.eq.s32.totalorder %s26, 1
      %p112 = por %p110, %p111
      %p114 = scmp.ne.s32.totalorder %s99, %s113
      %p115 = scmp.eq.s32.totalorder %s26, 0
      %p116 = por %p114, %p115
      %s118 = sadd.s32 %s117, 1
      %p121 = scmp.eq.s32.totalorder %s20, 1
      %p122 = scmp.ne.s32.totalorder %s117, %s119
      %p123 = scmp.eq.s32.totalorder %s20, 0
      %p124 = por %p122, %p123
      %p125 = scmp.ne.s32.totalorder %s117, %s119
      %p126 = scmp.eq.s32.totalorder %s25, 1
      %p127 = por %p125, %p126
      %p128 = scmp.ne.s32.totalorder %s119, %s120
      %p129 = scmp.eq.s32.totalorder %s25, 0
      %p130 = por %p128, %p129
      %p131 = scmp.ne.s32.totalorder %s119, %s120
      %p132 = scmp.eq.s32.totalorder %s26, 1
      %p133 = por %p131, %p132
      %p135 = scmp.ne.s32.totalorder %s120, %s134
      %p136 = scmp.eq.s32.totalorder %s26, 0
      %p137 = por %p135, %p136
      %s139 = sadd.s32 %s138, 1
      %p142 = scmp.eq.s32.totalorder %s20, 1
      %p143 = scmp.ne.s32.totalorder %s138, %s140
      %p144 = scmp.eq.s32.totalorder %s20, 0
      %p145 = por %p143, %p144
      %p146 = scmp.ne.s32.totalorder %s138, %s140
      %p147 = scmp.eq.s32.totalorder %s25, 1
      %p148 = por %p146, %p147
      %p149 = scmp.ne.s32.totalorder %s140, %s141
      %p150 = scmp.eq.s32.totalorder %s25, 0
      %p151 = por %p149, %p150
      %p152 = scmp.ne.s32.totalorder %s140, %s141
      %p153 = scmp.eq.s32.totalorder %s26, 1
      %p154 = por %p152, %p153
      %p156 = scmp.ne.s32.totalorder %s141, %s155
      %p157 = scmp.eq.s32.totalorder %s26, 0
      %p158 = por %p156, %p157
      %s159 = ssub.s32 %s20, %s27
      %p160 = scmp.eq.s32.totalorder %s159, 0
      %s162 = sadd.s32 %s161, 1
      %s163 = scalar_select %p160, %s161, %s162
      %p166 = pneg %p160
      %p167 = scmp.eq.s32.totalorder %s20, 1
      %p168 = por %p166, %p167
      %p169 = scmp.ne.s32.totalorder %s161, %s164
      %p170 = scmp.eq.s32.totalorder %s20, 0
      %p171 = por %p169, %p170
      %p172 = scmp.ne.s32.totalorder %s161, %s164
      %p173 = scmp.eq.s32.totalorder %s25, 1
      %p174 = por %p172, %p173
      %p175 = scmp.ne.s32.totalorder %s164, %s165
      %p176 = scmp.eq.s32.totalorder %s25, 0
      %p177 = por %p175, %p176
      %p178 = scmp.ne.s32.totalorder %s164, %s165
      %p179 = scmp.eq.s32.totalorder %s26, 1
      %p180 = por %p178, %p179
      %p182 = scmp.ne.s32.totalorder %s165, %s181
      %p183 = scmp.eq.s32.totalorder %s26, 0
      %p184 = por %p182, %p183
      %p185 = scmp.le.s32.totalorder 1, %s20
      %p186 = scmp.lt.s32.totalorder %s20, 3
      %p187 = pnand %p185, %p186
      %p188 = pneg %p187
      // Predicated region
      $region9: #{tpu_custom_call.1} parent=5 // pred_check
        _
      $region10: #{tpu_custom_call.1} parent=5 // pred_check_branch
        %190 = sbr.rel (%p187) target = $region12
      $region11: #{tpu_custom_call.1} parent=5 // pred_region
        %s191 = ssub.s32 %s20, 1
        // Predicated region
        $region13: #{tpu_custom_call.1} parent=11 // pred_check
          %p192 = pneg %p67
        $region14: #{tpu_custom_call.1} parent=11 // pred_check_branch
          %194 = sbr.rel (%p192) target = $region16
        $region15: #{tpu_custom_call.1} parent=11 // pred_region
          %s196 = ssub.s32 24576, 24576
          %197 = vsyncadd [#allocation6], %s196
          %s198 = sshll.u32 [#allocation5], 4
          %s199 = int_to_ptr.vmem [resolvable:$true] %s198
          %204 = dma.hbm_to_vmem [thread:$0]  %s1, 24576, %s199, [#allocation6], 1536, 1536, 96
        $region16: #{tpu_custom_call.1} parent=11 // pred_fallthru
          _
        // Predicated region
        $region17: #{tpu_custom_call.1} parent=11 // pred_check
          %p205 = pneg %p88
        $region18: #{tpu_custom_call.1} parent=11 // pred_check_branch
          %207 = sbr.rel (%p205) target = $region20
        $region19: #{tpu_custom_call.1} parent=11 // pred_region
          %s209 = ssub.s32 192, 192
          %210 = vsyncadd [#allocation6], %s209
          %s212 = sshll.u32 [#allocation7], 4
          %s213 = int_to_ptr.vmem [resolvable:$true] %s212
          %215 = dma.hbm_to_vmem [thread:$0]  %s2, 192, %s213, [#allocation6]
        $region20: #{tpu_custom_call.1} parent=11 // pred_fallthru
          _
        // Predicated region
        $region21: #{tpu_custom_call.1} parent=11 // pred_check
          %p216 = pneg %p109
        $region22: #{tpu_custom_call.1} parent=11 // pred_check_branch
          %218 = sbr.rel (%p216) target = $region24
        $region23: #{tpu_custom_call.1} parent=11 // pred_region
          %s220 = ssub.s32 8192, 8192
          %221 = vsyncadd [#allocation9], %s220
          %s222 = sshll.u32 [#allocation8], 4
          %s223 = int_to_ptr.vmem [resolvable:$true] %s222
          %228 = dma.hbm_to_vmem [thread:$0]  %s3, 8192, %s223, [#allocation9], 128, 128, 8
        $region24: #{tpu_custom_call.1} parent=11 // pred_fallthru
          _
        // Predicated region
        $region25: #{tpu_custom_call.1} parent=11 // pred_check
          %p229 = pneg %p130
        $region26: #{tpu_custom_call.1} parent=11 // pred_check_branch
          %231 = sbr.rel (%p229) target = $region28
        $region27: #{tpu_custom_call.1} parent=11 // pred_region
          _
        $region28: #{tpu_custom_call.1} parent=11 // pred_fallthru
          _
        // Predicated region
        $region29: #{tpu_custom_call.1} parent=11 // pred_check
          %p232 = pneg %p151
        $region30: #{tpu_custom_call.1} parent=11 // pred_check_branch
          %234 = sbr.rel (%p232) target = $region32
        $region31: #{tpu_custom_call.1} parent=11 // pred_region
          _
        $region32: #{tpu_custom_call.1} parent=11 // pred_fallthru
          _
      $region12: #{tpu_custom_call.1} parent=5 // pred_fallthru
        _
      %p235 = scmp.lt.s32.totalorder %s20, 2
      // Predicated region
      $region33: #{tpu_custom_call.1} parent=5 // pred_check
        %p236 = pneg %p235
      $region34: #{tpu_custom_call.1} parent=5 // pred_check_branch
        %238 = sbr.rel (%p236) target = $region36
      $region35: #{tpu_custom_call.1} parent=5 // pred_region
        // Predicated region
        $region37: #{tpu_custom_call.1} parent=35 // pred_check
          %p239 = pneg %p40
        $region38: #{tpu_custom_call.1} parent=35 // pred_check_branch
          %241 = sbr.rel (%p239) target = $region40
        $region39: #{tpu_custom_call.1} parent=35 // pred_region
          %s242 = sand.u32 %s30, 1
          %s243 = scalar_lea.sflag [#allocation3], %s242
          %s244 = sand.u32 %s30, 1
          %s245 = smul.addr %s244, 8
          %s246 = scalar_lea.vmem [#allocation2], %s245
          %s248 = ssub.s32 128, 128
          %249 = vsyncadd %s243, %s248
          %s250 = smul.addr %s20, 128
          %s251 = scalar_lea.hbm %s0, %s250
          %s253 = sshll.u32 %s246, 4
          %s254 = int_to_ptr.vmem [resolvable:$true] %s253
          %256 = dma.hbm_to_vmem [thread:$0]  %s251, 128, %s254, %s243
        $region40: #{tpu_custom_call.1} parent=35 // pred_fallthru
          _
      $region36: #{tpu_custom_call.1} parent=5 // pred_fallthru
        _
      %p257 = scmp.le.s32.totalorder 1, %s20
      %p258 = scmp.lt.s32.totalorder %s20, 3
      %p259 = pnand %p257, %p258
      %p260 = pneg %p259
      // Predicated region
      $region41: #{tpu_custom_call.1} parent=5 // pred_check
        _
      $region42: #{tpu_custom_call.1} parent=5 // pred_check_branch
        %262 = sbr.rel (%p259) target = $region44
      $region43: #{tpu_custom_call.1} parent=5 // pred_region
        %s263 = ssub.s32 %s20, 1
        %s264 = sand.u32 %s33, 1
        %s265 = scalar_lea.sflag [#allocation3], %s264
        %s266 = sand.u32 %s33, 1
        %s267 = smul.addr %s266, 8
        %s268 = scalar_lea.vmem [#allocation2], %s267
        // Predicated region
        $region45: #{tpu_custom_call.1} parent=43 // pred_check
          %p269 = pneg %p46
        $region46: #{tpu_custom_call.1} parent=43 // pred_check_branch
          %271 = sbr.rel (%p269) target = $region48
        $region47: #{tpu_custom_call.1} parent=43 // pred_region
          %272 = dma.done %s265, 128
        $region48: #{tpu_custom_call.1} parent=43 // pred_fallthru
          _
        // Predicated region
        $region49: #{tpu_custom_call.1} parent=43 // pred_check
          %p273 = pneg %p67
        $region50: #{tpu_custom_call.1} parent=43 // pred_check_branch
          %275 = sbr.rel (%p273) target = $region52
        $region51: #{tpu_custom_call.1} parent=43 // pred_region
          %276 = dma.done [#allocation6], 24576
        $region52: #{tpu_custom_call.1} parent=43 // pred_fallthru
          _
        // Predicated region
        $region53: #{tpu_custom_call.1} parent=43 // pred_check
          %p277 = pneg %p88
        $region54: #{tpu_custom_call.1} parent=43 // pred_check_branch
          %279 = sbr.rel (%p277) target = $region56
        $region55: #{tpu_custom_call.1} parent=43 // pred_region
          %280 = dma.done [#allocation6], 192
        $region56: #{tpu_custom_call.1} parent=43 // pred_fallthru
          _
        // Predicated region
        $region57: #{tpu_custom_call.1} parent=43 // pred_check
          %p281 = pneg %p109
        $region58: #{tpu_custom_call.1} parent=43 // pred_check_branch
          %283 = sbr.rel (%p281) target = $region60
        $region59: #{tpu_custom_call.1} parent=43 // pred_region
          %284 = dma.done [#allocation9], 8192
        $region60: #{tpu_custom_call.1} parent=43 // pred_fallthru
          _
        %s285 = sand.u32 %s33, 1
        %s286 = scalar_lea.sflag [#allocation3], %s285
        %s287 = sand.u32 %s33, 1
        %s288 = smul.addr %s287, 8
        %s289 = scalar_lea.vmem [#allocation2], %s288
        %p290 = pneg %p46
        %p291 = pneg %p43
        %p292 = pneg %p67
        %p293 = pneg %p64
        %p294 = pneg %p88
        %p295 = pneg %p85
        %p296 = pneg %p109
        %p297 = pneg %p106
        %p298 = pneg %p130
        %p299 = pneg %p127
        %p300 = pneg %p151
        %p301 = pneg %p148
        %p302 = pneg %p177
        %p303 = pneg %p174
        %s304 = sand.u32 %s164, 1
        %s305 = scalar_lea.sflag [#allocation4], %s304
        %s306 = sand.u32 %s164, 1
        %s307 = smul.addr %s306, 8
        %s308 = scalar_lea.vmem [#allocation10], %s307
        %v309 = vld [vmem:[%s268] sm:$0xff]
        %v310 = vld [vmem:[#allocation5] sm:$0xff]
        %v311 = vld [vmem:[#allocation5 + $0x8] sm:$0xff]
        %v312 = vld [vmem:[#allocation5 + $0x10] sm:$0xff]
        %v313 = vld [vmem:[#allocation5 + $0x18] sm:$0xff]
        %v314 = vld [vmem:[#allocation5 + $0x20] sm:$0xff]
        %v315 = vld [vmem:[#allocation5 + $0x28] sm:$0xff]
        %v316 = vld [vmem:[#allocation5 + $0x30] sm:$0xff]
        %v317 = vld [vmem:[#allocation5 + $0x38] sm:$0xff]
        %v318 = vld [vmem:[#allocation5 + $0x40] sm:$0xff]
        %v319 = vld [vmem:[#allocation5 + $0x48] sm:$0xff]
        %v320 = vld [vmem:[#allocation5 + $0x50] sm:$0xff]
        %v321 = vld [vmem:[#allocation5 + $0x58] sm:$0xff]
        %v322 = vld [vmem:[#allocation5 + $0x60] sm:$0xff]
        %v323 = vld [vmem:[#allocation5 + $0x68] sm:$0xff]
        %v324 = vld [vmem:[#allocation5 + $0x70] sm:$0xff]
        %v325 = vld [vmem:[#allocation5 + $0x78] sm:$0xff]
        %v326 = vld [vmem:[#allocation5 + $0x80] sm:$0xff]
        %v327 = vld [vmem:[#allocation5 + $0x88] sm:$0xff]
        %v328 = vld [vmem:[#allocation5 + $0x90] sm:$0xff]
        %v329 = vld [vmem:[#allocation5 + $0x98] sm:$0xff]
        %v330 = vld [vmem:[#allocation5 + $0xa0] sm:$0xff]
        %v331 = vld [vmem:[#allocation5 + $0xa8] sm:$0xff]
        %v332 = vld [vmem:[#allocation5 + $0xb0] sm:$0xff]
        %v333 = vld [vmem:[#allocation5 + $0xb8] sm:$0xff]
        %v334 = vld [vmem:[#allocation5 + $0xc0] sm:$0xff]
        %v335 = vld [vmem:[#allocation5 + $0xc8] sm:$0xff]
        %v336 = vld [vmem:[#allocation5 + $0xd0] sm:$0xff]
        %v337 = vld [vmem:[#allocation5 + $0xd8] sm:$0xff]
        %v338 = vld [vmem:[#allocation5 + $0xe0] sm:$0xff]
        %v339 = vld [vmem:[#allocation5 + $0xe8] sm:$0xff]
        %v340 = vld [vmem:[#allocation5 + $0xf0] sm:$0xff]
        %v341 = vld [vmem:[#allocation5 + $0xf8] sm:$0xff]
        %v342 = vld [vmem:[#allocation5 + $0x100] sm:$0xff]
        %v343 = vld [vmem:[#allocation5 + $0x108] sm:$0xff]
        %v344 = vld [vmem:[#allocation5 + $0x110] sm:$0xff]
        %v345 = vld [vmem:[#allocation5 + $0x118] sm:$0xff]
        %v346 = vld [vmem:[#allocation5 + $0x120] sm:$0xff]
        %v347 = vld [vmem:[#allocation5 + $0x128] sm:$0xff]
        %v348 = vld [vmem:[#allocation5 + $0x130] sm:$0xff]
        %v349 = vld [vmem:[#allocation5 + $0x138] sm:$0xff]
        %v350 = vld [vmem:[#allocation5 + $0x140] sm:$0xff]
        %v351 = vld [vmem:[#allocation5 + $0x148] sm:$0xff]
        %v352 = vld [vmem:[#allocation5 + $0x150] sm:$0xff]
        %v353 = vld [vmem:[#allocation5 + $0x158] sm:$0xff]
        %v354 = vld [vmem:[#allocation5 + $0x160] sm:$0xff]
        %v355 = vld [vmem:[#allocation5 + $0x168] sm:$0xff]
        %v356 = vld [vmem:[#allocation5 + $0x170] sm:$0xff]
        %v357 = vld [vmem:[#allocation5 + $0x178] sm:$0xff]
        %v358 = vld [vmem:[#allocation5 + $0x180] sm:$0xff]
        %v359 = vld [vmem:[#allocation5 + $0x188] sm:$0xff]
        %v360 = vld [vmem:[#allocation5 + $0x190] sm:$0xff]
        %v361 = vld [vmem:[#allocation5 + $0x198] sm:$0xff]
        %v362 = vld [vmem:[#allocation5 + $0x1a0] sm:$0xff]
        %v363 = vld [vmem:[#allocation5 + $0x1a8] sm:$0xff]
        %v364 = vld [vmem:[#allocation5 + $0x1b0] sm:$0xff]
        %v365 = vld [vmem:[#allocation5 + $0x1b8] sm:$0xff]
        %v366 = vld [vmem:[#allocation5 + $0x1c0] sm:$0xff]
        %v367 = vld [vmem:[#allocation5 + $0x1c8] sm:$0xff]
        %v368 = vld [vmem:[#allocation5 + $0x1d0] sm:$0xff]
        %v369 = vld [vmem:[#allocation5 + $0x1d8] sm:$0xff]
        %v370 = vld [vmem:[#allocation5 + $0x1e0] sm:$0xff]
        %v371 = vld [vmem:[#allocation5 + $0x1e8] sm:$0xff]
        %v372 = vld [vmem:[#allocation5 + $0x1f0] sm:$0xff]
        %v373 = vld [vmem:[#allocation5 + $0x1f8] sm:$0xff]
        %v374 = vld [vmem:[#allocation5 + $0x200] sm:$0xff]
        %v375 = vld [vmem:[#allocation5 + $0x208] sm:$0xff]
        %v376 = vld [vmem:[#allocation5 + $0x210] sm:$0xff]
        %v377 = vld [vmem:[#allocation5 + $0x218] sm:$0xff]
        %v378 = vld [vmem:[#allocation5 + $0x220] sm:$0xff]
        %v379 = vld [vmem:[#allocation5 + $0x228] sm:$0xff]
        %v380 = vld [vmem:[#allocation5 + $0x230] sm:$0xff]
        %v381 = vld [vmem:[#allocation5 + $0x238] sm:$0xff]
        %v382 = vld [vmem:[#allocation5 + $0x240] sm:$0xff]
        %v383 = vld [vmem:[#allocation5 + $0x248] sm:$0xff]
        %v384 = vld [vmem:[#allocation5 + $0x250] sm:$0xff]
        %v385 = vld [vmem:[#allocation5 + $0x258] sm:$0xff]
        %v386 = vld [vmem:[#allocation5 + $0x260] sm:$0xff]
        %v387 = vld [vmem:[#allocation5 + $0x268] sm:$0xff]
        %v388 = vld [vmem:[#allocation5 + $0x270] sm:$0xff]
        %v389 = vld [vmem:[#allocation5 + $0x278] sm:$0xff]
        %v390 = vld [vmem:[#allocation5 + $0x280] sm:$0xff]
        %v391 = vld [vmem:[#allocation5 + $0x288] sm:$0xff]
        %v392 = vld [vmem:[#allocation5 + $0x290] sm:$0xff]
        %v393 = vld [vmem:[#allocation5 + $0x298] sm:$0xff]
        %v394 = vld [vmem:[#allocation5 + $0x2a0] sm:$0xff]
        %v395 = vld [vmem:[#allocation5 + $0x2a8] sm:$0xff]
        %v396 = vld [vmem:[#allocation5 + $0x2b0] sm:$0xff]
        %v397 = vld [vmem:[#allocation5 + $0x2b8] sm:$0xff]
        %v398 = vld [vmem:[#allocation5 + $0x2c0] sm:$0xff]
        %v399 = vld [vmem:[#allocation5 + $0x2c8] sm:$0xff]
        %v400 = vld [vmem:[#allocation5 + $0x2d0] sm:$0xff]
        %v401 = vld [vmem:[#allocation5 + $0x2d8] sm:$0xff]
        %v402 = vld [vmem:[#allocation5 + $0x2e0] sm:$0xff]
        %v403 = vld [vmem:[#allocation5 + $0x2e8] sm:$0xff]
        %v404 = vld [vmem:[#allocation5 + $0x2f0] sm:$0xff]
        %v405 = vld [vmem:[#allocation5 + $0x2f8] sm:$0xff]
        %v406 = vld [vmem:[#allocation5 + $0x300] sm:$0xff]
        %v407 = vld [vmem:[#allocation5 + $0x308] sm:$0xff]
        %v408 = vld [vmem:[#allocation5 + $0x310] sm:$0xff]
        %v409 = vld [vmem:[#allocation5 + $0x318] sm:$0xff]
        %v410 = vld [vmem:[#allocation5 + $0x320] sm:$0xff]
        %v411 = vld [vmem:[#allocation5 + $0x328] sm:$0xff]
        %v412 = vld [vmem:[#allocation5 + $0x330] sm:$0xff]
        %v413 = vld [vmem:[#allocation5 + $0x338] sm:$0xff]
        %v414 = vld [vmem:[#allocation5 + $0x340] sm:$0xff]
        %v415 = vld [vmem:[#allocation5 + $0x348] sm:$0xff]
        %v416 = vld [vmem:[#allocation5 + $0x350] sm:$0xff]
        %v417 = vld [vmem:[#allocation5 + $0x358] sm:$0xff]
        %v418 = vld [vmem:[#allocation5 + $0x360] sm:$0xff]
        %v419 = vld [vmem:[#allocation5 + $0x368] sm:$0xff]
        %v420 = vld [vmem:[#allocation5 + $0x370] sm:$0xff]
        %v421 = vld [vmem:[#allocation5 + $0x378] sm:$0xff]
        %v422 = vld [vmem:[#allocation5 + $0x380] sm:$0xff]
        %v423 = vld [vmem:[#allocation5 + $0x388] sm:$0xff]
        %v424 = vld [vmem:[#allocation5 + $0x390] sm:$0xff]
        %v425 = vld [vmem:[#allocation5 + $0x398] sm:$0xff]
        %v426 = vld [vmem:[#allocation5 + $0x3a0] sm:$0xff]
        %v427 = vld [vmem:[#allocation5 + $0x3a8] sm:$0xff]
        %v428 = vld [vmem:[#allocation5 + $0x3b0] sm:$0xff]
        %v429 = vld [vmem:[#allocation5 + $0x3b8] sm:$0xff]
        %v430 = vld [vmem:[#allocation5 + $0x3c0] sm:$0xff]
        %v431 = vld [vmem:[#allocation5 + $0x3c8] sm:$0xff]
        %v432 = vld [vmem:[#allocation5 + $0x3d0] sm:$0xff]
        %v433 = vld [vmem:[#allocation5 + $0x3d8] sm:$0xff]
        %v434 = vld [vmem:[#allocation5 + $0x3e0] sm:$0xff]
        %v435 = vld [vmem:[#allocation5 + $0x3e8] sm:$0xff]
        %v436 = vld [vmem:[#allocation5 + $0x3f0] sm:$0xff]
        %v437 = vld [vmem:[#allocation5 + $0x3f8] sm:$0xff]
        %v438 = vld [vmem:[#allocation5 + $0x400] sm:$0xff]
        %v439 = vld [vmem:[#allocation5 + $0x408] sm:$0xff]
        %v440 = vld [vmem:[#allocation5 + $0x410] sm:$0xff]
        %v441 = vld [vmem:[#allocation5 + $0x418] sm:$0xff]
        %v442 = vld [vmem:[#allocation5 + $0x420] sm:$0xff]
        %v443 = vld [vmem:[#allocation5 + $0x428] sm:$0xff]
        %v444 = vld [vmem:[#allocation5 + $0x430] sm:$0xff]
        %v445 = vld [vmem:[#allocation5 + $0x438] sm:$0xff]
        %v446 = vld [vmem:[#allocation5 + $0x440] sm:$0xff]
        %v447 = vld [vmem:[#allocation5 + $0x448] sm:$0xff]
        %v448 = vld [vmem:[#allocation5 + $0x450] sm:$0xff]
        %v449 = vld [vmem:[#allocation5 + $0x458] sm:$0xff]
        %v450 = vld [vmem:[#allocation5 + $0x460] sm:$0xff]
        %v451 = vld [vmem:[#allocation5 + $0x468] sm:$0xff]
        %v452 = vld [vmem:[#allocation5 + $0x470] sm:$0xff]
        %v453 = vld [vmem:[#allocation5 + $0x478] sm:$0xff]
        %v454 = vld [vmem:[#allocation5 + $0x480] sm:$0xff]
        %v455 = vld [vmem:[#allocation5 + $0x488] sm:$0xff]
        %v456 = vld [vmem:[#allocation5 + $0x490] sm:$0xff]
        %v457 = vld [vmem:[#allocation5 + $0x498] sm:$0xff]
        %v458 = vld [vmem:[#allocation5 + $0x4a0] sm:$0xff]
        %v459 = vld [vmem:[#allocation5 + $0x4a8] sm:$0xff]
        %v460 = vld [vmem:[#allocation5 + $0x4b0] sm:$0xff]
        %v461 = vld [vmem:[#allocation5 + $0x4b8] sm:$0xff]
        %v462 = vld [vmem:[#allocation5 + $0x4c0] sm:$0xff]
        %v463 = vld [vmem:[#allocation5 + $0x4c8] sm:$0xff]
        %v464 = vld [vmem:[#allocation5 + $0x4d0] sm:$0xff]
        %v465 = vld [vmem:[#allocation5 + $0x4d8] sm:$0xff]
        %v466 = vld [vmem:[#allocation5 + $0x4e0] sm:$0xff]
        %v467 = vld [vmem:[#allocation5 + $0x4e8] sm:$0xff]
        %v468 = vld [vmem:[#allocation5 + $0x4f0] sm:$0xff]
        %v469 = vld [vmem:[#allocation5 + $0x4f8] sm:$0xff]
        %v470 = vld [vmem:[#allocation5 + $0x500] sm:$0xff]
        %v471 = vld [vmem:[#allocation5 + $0x508] sm:$0xff]
        %v472 = vld [vmem:[#allocation5 + $0x510] sm:$0xff]
        %v473 = vld [vmem:[#allocation5 + $0x518] sm:$0xff]
        %v474 = vld [vmem:[#allocation5 + $0x520] sm:$0xff]
        %v475 = vld [vmem:[#allocation5 + $0x528] sm:$0xff]
        %v476 = vld [vmem:[#allocation5 + $0x530] sm:$0xff]
        %v477 = vld [vmem:[#allocation5 + $0x538] sm:$0xff]
        %v478 = vld [vmem:[#allocation5 + $0x540] sm:$0xff]
        %v479 = vld [vmem:[#allocation5 + $0x548] sm:$0xff]
        %v480 = vld [vmem:[#allocation5 + $0x550] sm:$0xff]
        %v481 = vld [vmem:[#allocation5 + $0x558] sm:$0xff]
        %v482 = vld [vmem:[#allocation5 + $0x560] sm:$0xff]
        %v483 = vld [vmem:[#allocation5 + $0x568] sm:$0xff]
        %v484 = vld [vmem:[#allocation5 + $0x570] sm:$0xff]
        %v485 = vld [vmem:[#allocation5 + $0x578] sm:$0xff]
        %v486 = vld [vmem:[#allocation5 + $0x580] sm:$0xff]
        %v487 = vld [vmem:[#allocation5 + $0x588] sm:$0xff]
        %v488 = vld [vmem:[#allocation5 + $0x590] sm:$0xff]
        %v489 = vld [vmem:[#allocation5 + $0x598] sm:$0xff]
        %v490 = vld [vmem:[#allocation5 + $0x5a0] sm:$0xff]
        %v491 = vld [vmem:[#allocation5 + $0x5a8] sm:$0xff]
        %v492 = vld [vmem:[#allocation5 + $0x5b0] sm:$0xff]
        %v493 = vld [vmem:[#allocation5 + $0x5b8] sm:$0xff]
        %v494 = vld [vmem:[#allocation5 + $0x5c0] sm:$0xff]
        %v495 = vld [vmem:[#allocation5 + $0x5c8] sm:$0xff]
        %v496 = vld [vmem:[#allocation5 + $0x5d0] sm:$0xff]
        %v497 = vld [vmem:[#allocation5 + $0x5d8] sm:$0xff]
        %v498 = vld [vmem:[#allocation5 + $0x5e0] sm:$0xff]
        %v499 = vld [vmem:[#allocation5 + $0x5e8] sm:$0xff]
        %v500 = vld [vmem:[#allocation5 + $0x5f0] sm:$0xff]
        %v501 = vld [vmem:[#allocation5 + $0x5f8] sm:$0xff]
        %v502 = vld [vmem:[#allocation7] sm:$0xff]
        %v503 = vld [vmem:[#allocation7 + $0x8] sm:$0xf]
        %v506 = vlaneseq
        %v507 = vshrl.u32 %v506, 7
        %v508 = vsub.s32 0, %v507
        %v509 = vrot.slane %v502, %v508
        %v510 = vlaneseq
        %v511 = vshrl.u32 %v510, 7
        %v512 = vsub.s32 1, %v511
        %v513 = vrot.slane %v502, %v512
        %v514 = vlaneseq
        %v515 = vshrl.u32 %v514, 7
        %v516 = vsub.s32 2, %v515
        %v517 = vrot.slane %v502, %v516
        %v518 = vlaneseq
        %v519 = vshrl.u32 %v518, 7
        %v520 = vsub.s32 3, %v519
        %v521 = vrot.slane %v502, %v520
        %v522 = vlaneseq
        %v523 = vshrl.u32 %v522, 7
        %v524 = vsub.s32 4, %v523
        %v525 = vrot.slane %v502, %v524
        %v526 = vlaneseq
        %v527 = vshrl.u32 %v526, 7
        %v528 = vsub.s32 5, %v527
        %v529 = vrot.slane %v502, %v528
        %v530 = vlaneseq
        %v531 = vshrl.u32 %v530, 7
        %v532 = vsub.s32 6, %v531
        %v533 = vrot.slane %v502, %v532
        %v534 = vlaneseq
        %v535 = vshrl.u32 %v534, 7
        %v536 = vsub.s32 7, %v535
        %v537 = vrot.slane %v502, %v536
        %v538 = vlaneseq
        %v539 = vshrl.u32 %v538, 7
        %v540 = vsub.s32 0, %v539
        %v541 = vrot.slane %v503, %v540
        %v542 = vlaneseq
        %v543 = vshrl.u32 %v542, 7
        %v544 = vsub.s32 1, %v543
        %v545 = vrot.slane %v503, %v544
        %v546 = vlaneseq
        %v547 = vshrl.u32 %v546, 7
        %v548 = vsub.s32 2, %v547
        %v549 = vrot.slane %v503, %v548
        %v550 = vlaneseq
        %v551 = vshrl.u32 %v550, 7
        %v552 = vsub.s32 3, %v551
        %v553 = vrot.slane %v503, %v552
        %566 = vmatprep.subr.mxu0 %v311
        %567 = vmatpush1.msra.mxu0 %v310
        %568 = vmatprep.subr.mxu0 %v323
        %569 = vmatpush1.msra.mxu0 %v322
        %570 = vmatprep.subr.mxu0 %v335
        %571 = vmatpush1.msra.mxu0 %v334
        %572 = vmatprep.subr.mxu0 %v347
        %573 = vmatpush1.msra.mxu0 %v346
        %574 = vmatprep.subr.mxu0 %v359
        %575 = vmatpush1.msra.mxu0 %v358
        %576 = vmatprep.subr.mxu0 %v371
        %577 = vmatpush1.msra.mxu0 %v370
        %578 = vmatprep.subr.mxu0 %v383
        %579 = vmatpush1.msra.mxu0 %v382
        %580 = vmatprep.subr.mxu0 %v395
        %581 = vmatpush1.msra.mxu0 %v394
        %582 = vmatprep.subr.mxu0 %v407
        %583 = vmatpush1.msra.mxu0 %v406
        %584 = vmatprep.subr.mxu0 %v419
        %585 = vmatpush1.msra.mxu0 %v418
        %586 = vmatprep.subr.mxu0 %v431
        %587 = vmatpush1.msra.mxu0 %v430
        %588 = vmatprep.subr.mxu0 %v443
        %589 = vmatpush1.msra.mxu0 %v442
        %590 = vmatprep.subr.mxu0 %v455
        %591 = vmatpush1.msra.mxu0 %v454
        %592 = vmatprep.subr.mxu0 %v467
        %593 = vmatpush1.msra.mxu0 %v466
        %594 = vmatprep.subr.mxu0 %v479
        %595 = vmatpush1.msra.mxu0 %v478
        %596 = vmatprep.subr.mxu0 %v491
        %597 = vmatpush1.msra.mxu0 %v490
        %598 = vmatprep.subr.mxu0 0.0
        %599 = vmatpush1.msra.mxu0 0.0
        %600 = vmatprep.subr.mxu0 0.0
        %601 = vmatpush1.msra.mxu0 0.0
        %602 = vmatprep.subr.mxu0 0.0
        %603 = vmatpush1.msra.mxu0 0.0
        %604 = vmatprep.subr.mxu0 0.0
        %605 = vmatpush1.msra.mxu0 0.0
        %606 = vmatprep.subr.mxu0 0.0
        %607 = vmatpush1.msra.mxu0 0.0
        %608 = vmatprep.subr.mxu0 0.0
        %609 = vmatpush1.msra.mxu0 0.0
        %610 = vmatprep.subr.mxu0 0.0
        %611 = vmatpush1.msra.mxu0 0.0
        %612 = vmatprep.subr.mxu0 0.0
        %613 = vmatpush1.msra.mxu0 0.0
        %614 = vmatprep.subr.mxu0 0.0
        %615 = vmatpush1.msra.mxu0 0.0
        %616 = vmatprep.subr.mxu0 0.0
        %617 = vmatpush1.msra.mxu0 0.0
        %618 = vmatprep.subr.mxu0 0.0
        %619 = vmatpush1.msra.mxu0 0.0
        %620 = vmatprep.subr.mxu0 0.0
        %621 = vmatpush1.msra.mxu0 0.0
        %622 = vmatprep.subr.mxu0 0.0
        %623 = vmatpush1.msra.mxu0 0.0
        %624 = vmatprep.subr.mxu0 0.0
        %625 = vmatpush1.msra.mxu0 0.0
        %626 = vmatprep.subr.mxu0 0.0
        %627 = vmatpush1.msra.mxu0 0.0
        %628 = vmatprep.subr.mxu0 0.0
        %629 = vmatpush1.msra.mxu0 0.0
        %630 = vmatprep.mubr.f32.mxu0 0.0
        %631 = vmatmul.mubr.f32.gmra.mrb[0].mxu0 %v309
        %v632 = vpop.f32.mrb[0].mxu0
        %v633 = vadd.f32 %v509, %v632
        %v634 = vpop.f32.mrb[0].mxu0
        %v635 = vadd.f32 %v513, %v634
        %636 = vdwg.mxu0
        %637 = vmatprep.subr.mxu0 %v313
        %638 = vmatpush1.msra.mxu0 %v312
        %639 = vmatprep.subr.mxu0 %v325
        %640 = vmatpush1.msra.mxu0 %v324
        %641 = vmatprep.subr.mxu0 %v337
        %642 = vmatpush1.msra.mxu0 %v336
        %643 = vmatprep.subr.mxu0 %v349
        %644 = vmatpush1.msra.mxu0 %v348
        %645 = vmatprep.subr.mxu0 %v361
        %646 = vmatpush1.msra.mxu0 %v360
        %647 = vmatprep.subr.mxu0 %v373
        %648 = vmatpush1.msra.mxu0 %v372
        %649 = vmatprep.subr.mxu0 %v385
        %650 = vmatpush1.msra.mxu0 %v384
        %651 = vmatprep.subr.mxu0 %v397
        %652 = vmatpush1.msra.mxu0 %v396
        %653 = vmatprep.subr.mxu0 %v409
        %654 = vmatpush1.msra.mxu0 %v408
        %655 = vmatprep.subr.mxu0 %v421
        %656 = vmatpush1.msra.mxu0 %v420
        %657 = vmatprep.subr.mxu0 %v433
        %658 = vmatpush1.msra.mxu0 %v432
        %659 = vmatprep.subr.mxu0 %v445
        %660 = vmatpush1.msra.mxu0 %v444
        %661 = vmatprep.subr.mxu0 %v457
        %662 = vmatpush1.msra.mxu0 %v456
        %663 = vmatprep.subr.mxu0 %v469
        %664 = vmatpush1.msra.mxu0 %v468
        %665 = vmatprep.subr.mxu0 %v481
        %666 = vmatpush1.msra.mxu0 %v480
        %667 = vmatprep.subr.mxu0 %v493
        %668 = vmatpush1.msra.mxu0 %v492
        %669 = vmatprep.subr.mxu0 0.0
        %670 = vmatpush1.msra.mxu0 0.0
        %671 = vmatprep.subr.mxu0 0.0
        %672 = vmatpush1.msra.mxu0 0.0
        %673 = vmatprep.subr.mxu0 0.0
        %674 = vmatpush1.msra.mxu0 0.0
        %675 = vmatprep.subr.mxu0 0.0
        %676 = vmatpush1.msra.mxu0 0.0
        %677 = vmatprep.subr.mxu0 0.0
        %678 = vmatpush1.msra.mxu0 0.0
        %679 = vmatprep.subr.mxu0 0.0
        %680 = vmatpush1.msra.mxu0 0.0
        %681 = vmatprep.subr.mxu0 0.0
        %682 = vmatpush1.msra.mxu0 0.0
        %683 = vmatprep.subr.mxu0 0.0
        %684 = vmatpush1.msra.mxu0 0.0
        %685 = vmatprep.subr.mxu0 0.0
        %686 = vmatpush1.msra.mxu0 0.0
        %687 = vmatprep.subr.mxu0 0.0
        %688 = vmatpush1.msra.mxu0 0.0
        %689 = vmatprep.subr.mxu0 0.0
        %690 = vmatpush1.msra.mxu0 0.0
        %691 = vmatprep.subr.mxu0 0.0
        %692 = vmatpush1.msra.mxu0 0.0
        %693 = vmatprep.subr.mxu0 0.0
        %694 = vmatpush1.msra.mxu0 0.0
        %695 = vmatprep.subr.mxu0 0.0
        %696 = vmatpush1.msra.mxu0 0.0
        %697 = vmatprep.subr.mxu0 0.0
        %698 = vmatpush1.msra.mxu0 0.0
        %699 = vmatprep.subr.mxu0 0.0
        %700 = vmatpush1.msra.mxu0 0.0
        %701 = vmatprep.mubr.f32.mxu0 0.0
        %702 = vmatmul.mubr.f32.gmra.mrb[0].mxu0 %v309
        %v703 = vpop.f32.mrb[0].mxu0
        %v704 = vadd.f32 %v517, %v703
        %v705 = vpop.f32.mrb[0].mxu0
        %v706 = vadd.f32 %v521, %v705
        %707 = vdwg.mxu0
        %708 = vmatprep.subr.mxu0 %v315
        %709 = vmatpush1.msra.mxu0 %v314
        %710 = vmatprep.subr.mxu0 %v327
        %711 = vmatpush1.msra.mxu0 %v326
        %712 = vmatprep.subr.mxu0 %v339
        %713 = vmatpush1.msra.mxu0 %v338
        %714 = vmatprep.subr.mxu0 %v351
        %715 = vmatpush1.msra.mxu0 %v350
        %716 = vmatprep.subr.mxu0 %v363
        %717 = vmatpush1.msra.mxu0 %v362
        %718 = vmatprep.subr.mxu0 %v375
        %719 = vmatpush1.msra.mxu0 %v374
        %720 = vmatprep.subr.mxu0 %v387
        %721 = vmatpush1.msra.mxu0 %v386
        %722 = vmatprep.subr.mxu0 %v399
        %723 = vmatpush1.msra.mxu0 %v398
        %724 = vmatprep.subr.mxu0 %v411
        %725 = vmatpush1.msra.mxu0 %v410
        %726 = vmatprep.subr.mxu0 %v423
        %727 = vmatpush1.msra.mxu0 %v422
        %728 = vmatprep.subr.mxu0 %v435
        %729 = vmatpush1.msra.mxu0 %v434
        %730 = vmatprep.subr.mxu0 %v447
        %731 = vmatpush1.msra.mxu0 %v446
        %732 = vmatprep.subr.mxu0 %v459
        %733 = vmatpush1.msra.mxu0 %v458
        %734 = vmatprep.subr.mxu0 %v471
        %735 = vmatpush1.msra.mxu0 %v470
        %736 = vmatprep.subr.mxu0 %v483
        %737 = vmatpush1.msra.mxu0 %v482
        %738 = vmatprep.subr.mxu0 %v495
        %739 = vmatpush1.msra.mxu0 %v494
        %740 = vmatprep.subr.mxu0 0.0
        %741 = vmatpush1.msra.mxu0 0.0
        %742 = vmatprep.subr.mxu0 0.0
        %743 = vmatpush1.msra.mxu0 0.0
        %744 = vmatprep.subr.mxu0 0.0
        %745 = vmatpush1.msra.mxu0 0.0
        %746 = vmatprep.subr.mxu0 0.0
        %747 = vmatpush1.msra.mxu0 0.0
        %748 = vmatprep.subr.mxu0 0.0
        %749 = vmatpush1.msra.mxu0 0.0
        %750 = vmatprep.subr.mxu0 0.0
        %751 = vmatpush1.msra.mxu0 0.0
        %752 = vmatprep.subr.mxu0 0.0
        %753 = vmatpush1.msra.mxu0 0.0
        %754 = vmatprep.subr.mxu0 0.0
        %755 = vmatpush1.msra.mxu0 0.0
        %756 = vmatprep.subr.mxu0 0.0
        %757 = vmatpush1.msra.mxu0 0.0
        %758 = vmatprep.subr.mxu0 0.0
        %759 = vmatpush1.msra.mxu0 0.0
        %760 = vmatprep.subr.mxu0 0.0
        %761 = vmatpush1.msra.mxu0 0.0
        %762 = vmatprep.subr.mxu0 0.0
        %763 = vmatpush1.msra.mxu0 0.0
        %764 = vmatprep.subr.mxu0 0.0
        %765 = vmatpush1.msra.mxu0 0.0
        %766 = vmatprep.subr.mxu0 0.0
        %767 = vmatpush1.msra.mxu0 0.0
        %768 = vmatprep.subr.mxu0 0.0
        %769 = vmatpush1.msra.mxu0 0.0
        %770 = vmatprep.subr.mxu0 0.0
        %771 = vmatpush1.msra.mxu0 0.0
        %772 = vmatprep.mubr.f32.mxu0 0.0
        %773 = vmatmul.mubr.f32.gmra.mrb[0].mxu0 %v309
        %v774 = vpop.f32.mrb[0].mxu0
        %v775 = vadd.f32 %v525, %v774
        %v776 = vpop.f32.mrb[0].mxu0
        %v777 = vadd.f32 %v529, %v776
        %778 = vdwg.mxu0
        %779 = vmatprep.subr.mxu0 %v317
        %780 = vmatpush1.msra.mxu0 %v316
        %781 = vmatprep.subr.mxu0 %v329
        %782 = vmatpush1.msra.mxu0 %v328
        %783 = vmatprep.subr.mxu0 %v341
        %784 = vmatpush1.msra.mxu0 %v340
        %785 = vmatprep.subr.mxu0 %v353
        %786 = vmatpush1.msra.mxu0 %v352
        %787 = vmatprep.subr.mxu0 %v365
        %788 = vmatpush1.msra.mxu0 %v364
        %789 = vmatprep.subr.mxu0 %v377
        %790 = vmatpush1.msra.mxu0 %v376
        %791 = vmatprep.subr.mxu0 %v389
        %792 = vmatpush1.msra.mxu0 %v388
        %793 = vmatprep.subr.mxu0 %v401
        %794 = vmatpush1.msra.mxu0 %v400
        %795 = vmatprep.subr.mxu0 %v413
        %796 = vmatpush1.msra.mxu0 %v412
        %797 = vmatprep.subr.mxu0 %v425
        %798 = vmatpush1.msra.mxu0 %v424
        %799 = vmatprep.subr.mxu0 %v437
        %800 = vmatpush1.msra.mxu0 %v436
        %801 = vmatprep.subr.mxu0 %v449
        %802 = vmatpush1.msra.mxu0 %v448
        %803 = vmatprep.subr.mxu0 %v461
        %804 = vmatpush1.msra.mxu0 %v460
        %805 = vmatprep.subr.mxu0 %v473
        %806 = vmatpush1.msra.mxu0 %v472
        %807 = vmatprep.subr.mxu0 %v485
        %808 = vmatpush1.msra.mxu0 %v484
        %809 = vmatprep.subr.mxu0 %v497
        %810 = vmatpush1.msra.mxu0 %v496
        %811 = vmatprep.subr.mxu0 0.0
        %812 = vmatpush1.msra.mxu0 0.0
        %813 = vmatprep.subr.mxu0 0.0
        %814 = vmatpush1.msra.mxu0 0.0
        %815 = vmatprep.subr.mxu0 0.0
        %816 = vmatpush1.msra.mxu0 0.0
        %817 = vmatprep.subr.mxu0 0.0
        %818 = vmatpush1.msra.mxu0 0.0
        %819 = vmatprep.subr.mxu0 0.0
        %820 = vmatpush1.msra.mxu0 0.0
        %821 = vmatprep.subr.mxu0 0.0
        %822 = vmatpush1.msra.mxu0 0.0
        %823 = vmatprep.subr.mxu0 0.0
        %824 = vmatpush1.msra.mxu0 0.0
        %825 = vmatprep.subr.mxu0 0.0
        %826 = vmatpush1.msra.mxu0 0.0
        %827 = vmatprep.subr.mxu0 0.0
        %828 = vmatpush1.msra.mxu0 0.0
        %829 = vmatprep.subr.mxu0 0.0
        %830 = vmatpush1.msra.mxu0 0.0
        %831 = vmatprep.subr.mxu0 0.0
        %832 = vmatpush1.msra.mxu0 0.0
        %833 = vmatprep.subr.mxu0 0.0
        %834 = vmatpush1.msra.mxu0 0.0
        %835 = vmatprep.subr.mxu0 0.0
        %836 = vmatpush1.msra.mxu0 0.0
        %837 = vmatprep.subr.mxu0 0.0
        %838 = vmatpush1.msra.mxu0 0.0
        %839 = vmatprep.subr.mxu0 0.0
        %840 = vmatpush1.msra.mxu0 0.0
        %841 = vmatprep.subr.mxu0 0.0
        %842 = vmatpush1.msra.mxu0 0.0
        %843 = vmatprep.mubr.f32.mxu0 0.0
        %844 = vmatmul.mubr.f32.gmra.mrb[0].mxu0 %v309
        %v845 = vpop.f32.mrb[0].mxu0
        %v846 = vadd.f32 %v533, %v845
        %v847 = vpop.f32.mrb[0].mxu0
        %v848 = vadd.f32 %v537, %v847
        %849 = vdwg.mxu0
        %850 = vmatprep.subr.mxu0 %v319
        %851 = vmatpush1.msra.mxu0 %v318
        %852 = vmatprep.subr.mxu0 %v331
        %853 = vmatpush1.msra.mxu0 %v330
        %854 = vmatprep.subr.mxu0 %v343
        %855 = vmatpush1.msra.mxu0 %v342
        %856 = vmatprep.subr.mxu0 %v355
        %857 = vmatpush1.msra.mxu0 %v354
        %858 = vmatprep.subr.mxu0 %v367
        %859 = vmatpush1.msra.mxu0 %v366
        %860 = vmatprep.subr.mxu0 %v379
        %861 = vmatpush1.msra.mxu0 %v378
        %862 = vmatprep.subr.mxu0 %v391
        %863 = vmatpush1.msra.mxu0 %v390
        %864 = vmatprep.subr.mxu0 %v403
        %865 = vmatpush1.msra.mxu0 %v402
        %866 = vmatprep.subr.mxu0 %v415
        %867 = vmatpush1.msra.mxu0 %v414
        %868 = vmatprep.subr.mxu0 %v427
        %869 = vmatpush1.msra.mxu0 %v426
        %870 = vmatprep.subr.mxu0 %v439
        %871 = vmatpush1.msra.mxu0 %v438
        %872 = vmatprep.subr.mxu0 %v451
        %873 = vmatpush1.msra.mxu0 %v450
        %874 = vmatprep.subr.mxu0 %v463
        %875 = vmatpush1.msra.mxu0 %v462
        %876 = vmatprep.subr.mxu0 %v475
        %877 = vmatpush1.msra.mxu0 %v474
        %878 = vmatprep.subr.mxu0 %v487
        %879 = vmatpush1.msra.mxu0 %v486
        %880 = vmatprep.subr.mxu0 %v499
        %881 = vmatpush1.msra.mxu0 %v498
        %882 = vmatprep.subr.mxu0 0.0
        %883 = vmatpush1.msra.mxu0 0.0
        %884 = vmatprep.subr.mxu0 0.0
        %885 = vmatpush1.msra.mxu0 0.0
        %886 = vmatprep.subr.mxu0 0.0
        %887 = vmatpush1.msra.mxu0 0.0
        %888 = vmatprep.subr.mxu0 0.0
        %889 = vmatpush1.msra.mxu0 0.0
        %890 = vmatprep.subr.mxu0 0.0
        %891 = vmatpush1.msra.mxu0 0.0
        %892 = vmatprep.subr.mxu0 0.0
        %893 = vmatpush1.msra.mxu0 0.0
        %894 = vmatprep.subr.mxu0 0.0
        %895 = vmatpush1.msra.mxu0 0.0
        %896 = vmatprep.subr.mxu0 0.0
        %897 = vmatpush1.msra.mxu0 0.0
        %898 = vmatprep.subr.mxu0 0.0
        %899 = vmatpush1.msra.mxu0 0.0
        %900 = vmatprep.subr.mxu0 0.0
        %901 = vmatpush1.msra.mxu0 0.0
        %902 = vmatprep.subr.mxu0 0.0
        %903 = vmatpush1.msra.mxu0 0.0
        %904 = vmatprep.subr.mxu0 0.0
        %905 = vmatpush1.msra.mxu0 0.0
        %906 = vmatprep.subr.mxu0 0.0
        %907 = vmatpush1.msra.mxu0 0.0
        %908 = vmatprep.subr.mxu0 0.0
        %909 = vmatpush1.msra.mxu0 0.0
        %910 = vmatprep.subr.mxu0 0.0
        %911 = vmatpush1.msra.mxu0 0.0
        %912 = vmatprep.subr.mxu0 0.0
        %913 = vmatpush1.msra.mxu0 0.0
        %914 = vmatprep.mubr.f32.mxu0 0.0
        %915 = vmatmul.mubr.f32.gmra.mrb[0].mxu0 %v309
        %v916 = vpop.f32.mrb[0].mxu0
        %v917 = vadd.f32 %v541, %v916
        %v918 = vpop.f32.mrb[0].mxu0
        %v919 = vadd.f32 %v545, %v918
        %920 = vdwg.mxu0
        %921 = vmatprep.subr.mxu0 %v321
        %922 = vmatpush1.msra.mxu0 %v320
        %923 = vmatprep.subr.mxu0 %v333
        %924 = vmatpush1.msra.mxu0 %v332
        %925 = vmatprep.subr.mxu0 %v345
        %926 = vmatpush1.msra.mxu0 %v344
        %927 = vmatprep.subr.mxu0 %v357
        %928 = vmatpush1.msra.mxu0 %v356
        %929 = vmatprep.subr.mxu0 %v369
        %930 = vmatpush1.msra.mxu0 %v368
        %931 = vmatprep.subr.mxu0 %v381
        %932 = vmatpush1.msra.mxu0 %v380
        %933 = vmatprep.subr.mxu0 %v393
        %934 = vmatpush1.msra.mxu0 %v392
        %935 = vmatprep.subr.mxu0 %v405
        %936 = vmatpush1.msra.mxu0 %v404
        %937 = vmatprep.subr.mxu0 %v417
        %938 = vmatpush1.msra.mxu0 %v416
        %939 = vmatprep.subr.mxu0 %v429
        %940 = vmatpush1.msra.mxu0 %v428
        %941 = vmatprep.subr.mxu0 %v441
        %942 = vmatpush1.msra.mxu0 %v440
        %943 = vmatprep.subr.mxu0 %v453
        %944 = vmatpush1.msra.mxu0 %v452
        %945 = vmatprep.subr.mxu0 %v465
        %946 = vmatpush1.msra.mxu0 %v464
        %947 = vmatprep.subr.mxu0 %v477
        %948 = vmatpush1.msra.mxu0 %v476
        %949 = vmatprep.subr.mxu0 %v489
        %950 = vmatpush1.msra.mxu0 %v488
        %951 = vmatprep.subr.mxu0 %v501
        %952 = vmatpush1.msra.mxu0 %v500
        %953 = vmatprep.subr.mxu0 0.0
        %954 = vmatpush1.msra.mxu0 0.0
        %955 = vmatprep.subr.mxu0 0.0
        %956 = vmatpush1.msra.mxu0 0.0
        %957 = vmatprep.subr.mxu0 0.0
        %958 = vmatpush1.msra.mxu0 0.0
        %959 = vmatprep.subr.mxu0 0.0
        %960 = vmatpush1.msra.mxu0 0.0
        %961 = vmatprep.subr.mxu0 0.0
        %962 = vmatpush1.msra.mxu0 0.0
        %963 = vmatprep.subr.mxu0 0.0
        %964 = vmatpush1.msra.mxu0 0.0
        %965 = vmatprep.subr.mxu0 0.0
        %966 = vmatpush1.msra.mxu0 0.0
        %967 = vmatprep.subr.mxu0 0.0
        %968 = vmatpush1.msra.mxu0 0.0
        %969 = vmatprep.subr.mxu0 0.0
        %970 = vmatpush1.msra.mxu0 0.0
        %971 = vmatprep.subr.mxu0 0.0
        %972 = vmatpush1.msra.mxu0 0.0
        %973 = vmatprep.subr.mxu0 0.0
        %974 = vmatpush1.msra.mxu0 0.0
        %975 = vmatprep.subr.mxu0 0.0
        %976 = vmatpush1.msra.mxu0 0.0
        %977 = vmatprep.subr.mxu0 0.0
        %978 = vmatpush1.msra.mxu0 0.0
        %979 = vmatprep.subr.mxu0 0.0
        %980 = vmatpush1.msra.mxu0 0.0
        %981 = vmatprep.subr.mxu0 0.0
        %982 = vmatpush1.msra.mxu0 0.0
        %983 = vmatprep.subr.mxu0 0.0
        %984 = vmatpush1.msra.mxu0 0.0
        %985 = vmatprep.mubr.f32.mxu0 0.0
        %986 = vmatmul.mubr.f32.gmra.mrb[0].mxu0 %v309
        %v987 = vpop.f32.mrb[0].mxu0
        %v988 = vadd.f32 %v549, %v987
        %v989 = vpop.f32.mrb[0].mxu0
        %v990 = vadd.f32 %v553, %v989
        %991 = vdwg.mxu0
        %v992 = vld [vmem:[%s5] sm:$0xff]
        %993 = vmatprep.subr.mxu0 0.0
        %994 = vmatpush1.xpose.msra.mxu0 %v775
        %995 = vmatprep.subr.mxu0 0.0
        %996 = vmatpush1.xpose.msra.mxu0 0.0
        %997 = vmatprep.subr.mxu0 0.0
        %998 = vmatpush1.xpose.msra.mxu0 0.0
        %999 = vmatprep.subr.mxu0 0.0
        %1000 = vmatpush1.xpose.msra.mxu0 0.0
        %1001 = vmatprep.subr.mxu0 0.0
        %1002 = vmatpush1.xpose.msra.mxu0 0.0
        %1003 = vmatprep.subr.mxu0 0.0
        %1004 = vmatpush1.xpose.msra.mxu0 0.0
        %1005 = vmatprep.subr.mxu0 0.0
        %1006 = vmatpush1.xpose.msra.mxu0 0.0
        %1007 = vmatprep.subr.mxu0 0.0
        %1008 = vmatpush1.xpose.msra.mxu0 0.0
        %1009 = vmatprep.subr.mxu0 0.0
        %1010 = vmatpush1.xpose.msra.mxu0 0.0
        %1011 = vmatprep.subr.mxu0 0.0
        %1012 = vmatpush1.xpose.msra.mxu0 0.0
        %1013 = vmatprep.subr.mxu0 0.0
        %1014 = vmatpush1.xpose.msra.mxu0 0.0
        %1015 = vmatprep.subr.mxu0 0.0
        %1016 = vmatpush1.xpose.msra.mxu0 0.0
        %1017 = vmatprep.subr.mxu0 0.0
        %1018 = vmatpush1.xpose.msra.mxu0 0.0
        %1019 = vmatprep.subr.mxu0 0.0
        %1020 = vmatpush1.xpose.msra.mxu0 0.0
        %1021 = vmatprep.subr.mxu0 0.0
        %1022 = vmatpush1.xpose.msra.mxu0 0.0
        %1023 = vmatprep.subr.mxu0 0.0
        %1024 = vmatpush1.xpose.msra.mxu0 0.0
        %1025 = vmatprep.subr.mxu0 0.0
        %1026 = vmatpush1.xpose.msra.mxu0 0.0
        %1027 = vmatprep.subr.mxu0 0.0
        %1028 = vmatpush1.xpose.msra.mxu0 0.0
        %1029 = vmatprep.subr.mxu0 0.0
        %1030 = vmatpush1.xpose.msra.mxu0 0.0
        %1031 = vmatprep.subr.mxu0 0.0
        %1032 = vmatpush1.xpose.msra.mxu0 0.0
        %1033 = vmatprep.subr.mxu0 0.0
        %1034 = vmatpush1.xpose.msra.mxu0 0.0
        %1035 = vmatprep.subr.mxu0 0.0
        %1036 = vmatpush1.xpose.msra.mxu0 0.0
        %1037 = vmatprep.subr.mxu0 0.0
        %1038 = vmatpush1.xpose.msra.mxu0 0.0
        %1039 = vmatprep.subr.mxu0 0.0
        %1040 = vmatpush1.xpose.msra.mxu0 0.0
        %1041 = vmatprep.subr.mxu0 0.0
        %1042 = vmatpush1.xpose.msra.mxu0 0.0
        %1043 = vmatprep.subr.mxu0 0.0
        %1044 = vmatpush1.xpose.msra.mxu0 0.0
        %1045 = vmatprep.subr.mxu0 0.0
        %1046 = vmatpush1.xpose.msra.mxu0 0.0
        %1047 = vmatprep.subr.mxu0 0.0
        %1048 = vmatpush1.xpose.msra.mxu0 0.0
        %1049 = vmatprep.subr.mxu0 0.0
        %1050 = vmatpush1.xpose.msra.mxu0 0.0
        %1051 = vmatprep.subr.mxu0 0.0
        %1052 = vmatpush1.xpose.msra.mxu0 0.0
        %1053 = vmatprep.subr.mxu0 0.0
        %1054 = vmatpush1.xpose.msra.mxu0 0.0
        %1055 = vmatprep.subr.mxu0 0.0
        %1056 = vmatpush1.xpose.msra.mxu0 0.0
        %1057 = vmatprep.mubr.f32.mxu0 0.0
        %1058 = vmatmul.mubr.f32.gmra.mrb[0].mxu0 %v633
        %v1059 = vpop.f32.mrb[0].mxu0
        %v1060 = vadd.f32 %v992, %v1059
        %v1061 = vpop.f32.mrb[0].mxu0
        %1062 = vdwg.mxu0
        %vm1063 = vcmask 64512
        %v1064 = vsel %vm1063, %v1060, -inf
        %1065 = vmax.xlane.f32.xlu0 %v1064
        %v1066 = vpop.xlane.xlu0 %1065
        %v1067 = vsub.f32 %v1060, %v1066
        %v1068 = vmul.f32 %v1067, 1.442695
        %v1069 = vpow.pop %v1068
        %v1070 = vsel %vm1063, %v1069, 0.0
        %1071 = vadd.xlane.f32.xlu0 %v1070
        %v1072 = vpop.xlane.xlu0 %1071
        %v1073 = vrcp.pop %v1072
        %v1074 = vmul.f32 %v1069, %v1073
        %v1076 = vsel %vm1063, %v1074, 0
        %1078 = vmatprep.subr.mxu0 0.0
        %1079 = vmatpush1.msra.mxu0 %v917
        %1080 = vmatprep.subr.mxu0 0.0
        %1081 = vmatpush1.msra.mxu0 0.0
        %1082 = vmatprep.subr.mxu0 0.0
        %1083 = vmatpush1.msra.mxu0 0.0
        %1084 = vmatprep.subr.mxu0 0.0
        %1085 = vmatpush1.msra.mxu0 0.0
        %1086 = vmatprep.subr.mxu0 0.0
        %1087 = vmatpush1.msra.mxu0 0.0
        %1088 = vmatprep.subr.mxu0 0.0
        %1089 = vmatpush1.msra.mxu0 0.0
        %1090 = vmatprep.subr.mxu0 0.0
        %1091 = vmatpush1.msra.mxu0 0.0
        %1092 = vmatprep.subr.mxu0 0.0
        %1093 = vmatpush1.msra.mxu0 0.0
        %1094 = vmatprep.subr.mxu0 0.0
        %1095 = vmatpush1.msra.mxu0 0.0
        %1096 = vmatprep.subr.mxu0 0.0
        %1097 = vmatpush1.msra.mxu0 0.0
        %1098 = vmatprep.subr.mxu0 0.0
        %1099 = vmatpush1.msra.mxu0 0.0
        %1100 = vmatprep.subr.mxu0 0.0
        %1101 = vmatpush1.msra.mxu0 0.0
        %1102 = vmatprep.subr.mxu0 0.0
        %1103 = vmatpush1.msra.mxu0 0.0
        %1104 = vmatprep.subr.mxu0 0.0
        %1105 = vmatpush1.msra.mxu0 0.0
        %1106 = vmatprep.subr.mxu0 0.0
        %1107 = vmatpush1.msra.mxu0 0.0
        %1108 = vmatprep.subr.mxu0 0.0
        %1109 = vmatpush1.msra.mxu0 0.0
        %1110 = vmatprep.subr.mxu0 0.0
        %1111 = vmatpush1.msra.mxu0 0.0
        %1112 = vmatprep.subr.mxu0 0.0
        %1113 = vmatpush1.msra.mxu0 0.0
        %1114 = vmatprep.subr.mxu0 0.0
        %1115 = vmatpush1.msra.mxu0 0.0
        %1116 = vmatprep.subr.mxu0 0.0
        %1117 = vmatpush1.msra.mxu0 0.0
        %1118 = vmatprep.subr.mxu0 0.0
        %1119 = vmatpush1.msra.mxu0 0.0
        %1120 = vmatprep.subr.mxu0 0.0
        %1121 = vmatpush1.msra.mxu0 0.0
        %1122 = vmatprep.subr.mxu0 0.0
        %1123 = vmatpush1.msra.mxu0 0.0
        %1124 = vmatprep.subr.mxu0 0.0
        %1125 = vmatpush1.msra.mxu0 0.0
        %1126 = vmatprep.subr.mxu0 0.0
        %1127 = vmatpush1.msra.mxu0 0.0
        %1128 = vmatprep.subr.mxu0 0.0
        %1129 = vmatpush1.msra.mxu0 0.0
        %1130 = vmatprep.subr.mxu0 0.0
        %1131 = vmatpush1.msra.mxu0 0.0
        %1132 = vmatprep.subr.mxu0 0.0
        %1133 = vmatpush1.msra.mxu0 0.0
        %1134 = vmatprep.subr.mxu0 0.0
        %1135 = vmatpush1.msra.mxu0 0.0
        %1136 = vmatprep.subr.mxu0 0.0
        %1137 = vmatpush1.msra.mxu0 0.0
        %1138 = vmatprep.subr.mxu0 0.0
        %1139 = vmatpush1.msra.mxu0 0.0
        %1140 = vmatprep.subr.mxu0 0.0
        %1141 = vmatpush1.msra.mxu0 0.0
        %1142 = vmatprep.mubr.f32.mxu0 0.0
        %1143 = vmatmul.mubr.f32.gmra.mrb[0].mxu0 %v1076
        %v1144 = vpop.f32.mrb[0].mxu0
        %v1145 = vadd.f32 0.0, %v1144
        %v1146 = vpop.f32.mrb[0].mxu0
        %1147 = vdwg.mxu0
        %1148 = vmatprep.subr.mxu0 0.0
        %1149 = vmatpush1.xpose.msra.mxu0 %v777
        %1150 = vmatprep.subr.mxu0 0.0
        %1151 = vmatpush1.xpose.msra.mxu0 0.0
        %1152 = vmatprep.subr.mxu0 0.0
        %1153 = vmatpush1.xpose.msra.mxu0 0.0
        %1154 = vmatprep.subr.mxu0 0.0
        %1155 = vmatpush1.xpose.msra.mxu0 0.0
        %1156 = vmatprep.subr.mxu0 0.0
        %1157 = vmatpush1.xpose.msra.mxu0 0.0
        %1158 = vmatprep.subr.mxu0 0.0
        %1159 = vmatpush1.xpose.msra.mxu0 0.0
        %1160 = vmatprep.subr.mxu0 0.0
        %1161 = vmatpush1.xpose.msra.mxu0 0.0
        %1162 = vmatprep.subr.mxu0 0.0
        %1163 = vmatpush1.xpose.msra.mxu0 0.0
        %1164 = vmatprep.subr.mxu0 0.0
        %1165 = vmatpush1.xpose.msra.mxu0 0.0
        %1166 = vmatprep.subr.mxu0 0.0
        %1167 = vmatpush1.xpose.msra.mxu0 0.0
        %1168 = vmatprep.subr.mxu0 0.0
        %1169 = vmatpush1.xpose.msra.mxu0 0.0
        %1170 = vmatprep.subr.mxu0 0.0
        %1171 = vmatpush1.xpose.msra.mxu0 0.0
        %1172 = vmatprep.subr.mxu0 0.0
        %1173 = vmatpush1.xpose.msra.mxu0 0.0
        %1174 = vmatprep.subr.mxu0 0.0
        %1175 = vmatpush1.xpose.msra.mxu0 0.0
        %1176 = vmatprep.subr.mxu0 0.0
        %1177 = vmatpush1.xpose.msra.mxu0 0.0
        %1178 = vmatprep.subr.mxu0 0.0
        %1179 = vmatpush1.xpose.msra.mxu0 0.0
        %1180 = vmatprep.subr.mxu0 0.0
        %1181 = vmatpush1.xpose.msra.mxu0 0.0
        %1182 = vmatprep.subr.mxu0 0.0
        %1183 = vmatpush1.xpose.msra.mxu0 0.0
        %1184 = vmatprep.subr.mxu0 0.0
        %1185 = vmatpush1.xpose.msra.mxu0 0.0
        %1186 = vmatprep.subr.mxu0 0.0
        %1187 = vmatpush1.xpose.msra.mxu0 0.0
        %1188 = vmatprep.subr.mxu0 0.0
        %1189 = vmatpush1.xpose.msra.mxu0 0.0
        %1190 = vmatprep.subr.mxu0 0.0
        %1191 = vmatpush1.xpose.msra.mxu0 0.0
        %1192 = vmatprep.subr.mxu0 0.0
        %1193 = vmatpush1.xpose.msra.mxu0 0.0
        %1194 = vmatprep.subr.mxu0 0.0
        %1195 = vmatpush1.xpose.msra.mxu0 0.0
        %1196 = vmatprep.subr.mxu0 0.0
        %1197 = vmatpush1.xpose.msra.mxu0 0.0
        %1198 = vmatprep.subr.mxu0 0.0
        %1199 = vmatpush1.xpose.msra.mxu0 0.0
        %1200 = vmatprep.subr.mxu0 0.0
        %1201 = vmatpush1.xpose.msra.mxu0 0.0
        %1202 = vmatprep.subr.mxu0 0.0
        %1203 = vmatpush1.xpose.msra.mxu0 0.0
        %1204 = vmatprep.subr.mxu0 0.0
        %1205 = vmatpush1.xpose.msra.mxu0 0.0
        %1206 = vmatprep.subr.mxu0 0.0
        %1207 = vmatpush1.xpose.msra.mxu0 0.0
        %1208 = vmatprep.subr.mxu0 0.0
        %1209 = vmatpush1.xpose.msra.mxu0 0.0
        %1210 = vmatprep.subr.mxu0 0.0
        %1211 = vmatpush1.xpose.msra.mxu0 0.0
        %1212 = vmatprep.mubr.f32.mxu0 0.0
        %1213 = vmatmul.mubr.f32.gmra.mrb[0].mxu0 %v635
        %v1214 = vpop.f32.mrb[0].mxu0
        %v1215 = vadd.f32 %v992, %v1214
        %v1216 = vpop.f32.mrb[0].mxu0
        %1217 = vdwg.mxu0
        %v1218 = vsel %vm1063, %v1215, -inf
        %1219 = vmax.xlane.f32.xlu0 %v1218
        %v1220 = vpop.xlane.xlu0 %1219
        %v1221 = vsub.f32 %v1215, %v1220
        %v1222 = vmul.f32 %v1221, 1.442695
        %v1223 = vpow.pop %v1222
        %v1224 = vsel %vm1063, %v1223, 0.0
        %1225 = vadd.xlane.f32.xlu0 %v1224
        %v1226 = vpop.xlane.xlu0 %1225
        %v1227 = vrcp.pop %v1226
        %v1228 = vmul.f32 %v1223, %v1227
        %v1230 = vsel %vm1063, %v1228, 0
        %1232 = vmatprep.subr.mxu0 0.0
        %1233 = vmatpush1.msra.mxu0 %v919
        %1234 = vmatprep.subr.mxu0 0.0
        %1235 = vmatpush1.msra.mxu0 0.0
        %1236 = vmatprep.subr.mxu0 0.0
        %1237 = vmatpush1.msra.mxu0 0.0
        %1238 = vmatprep.subr.mxu0 0.0
        %1239 = vmatpush1.msra.mxu0 0.0
        %1240 = vmatprep.subr.mxu0 0.0
        %1241 = vmatpush1.msra.mxu0 0.0
        %1242 = vmatprep.subr.mxu0 0.0
        %1243 = vmatpush1.msra.mxu0 0.0
        %1244 = vmatprep.subr.mxu0 0.0
        %1245 = vmatpush1.msra.mxu0 0.0
        %1246 = vmatprep.subr.mxu0 0.0
        %1247 = vmatpush1.msra.mxu0 0.0
        %1248 = vmatprep.subr.mxu0 0.0
        %1249 = vmatpush1.msra.mxu0 0.0
        %1250 = vmatprep.subr.mxu0 0.0
        %1251 = vmatpush1.msra.mxu0 0.0
        %1252 = vmatprep.subr.mxu0 0.0
        %1253 = vmatpush1.msra.mxu0 0.0
        %1254 = vmatprep.subr.mxu0 0.0
        %1255 = vmatpush1.msra.mxu0 0.0
        %1256 = vmatprep.subr.mxu0 0.0
        %1257 = vmatpush1.msra.mxu0 0.0
        %1258 = vmatprep.subr.mxu0 0.0
        %1259 = vmatpush1.msra.mxu0 0.0
        %1260 = vmatprep.subr.mxu0 0.0
        %1261 = vmatpush1.msra.mxu0 0.0
        %1262 = vmatprep.subr.mxu0 0.0
        %1263 = vmatpush1.msra.mxu0 0.0
        %1264 = vmatprep.subr.mxu0 0.0
        %1265 = vmatpush1.msra.mxu0 0.0
        %1266 = vmatprep.subr.mxu0 0.0
        %1267 = vmatpush1.msra.mxu0 0.0
        %1268 = vmatprep.subr.mxu0 0.0
        %1269 = vmatpush1.msra.mxu0 0.0
        %1270 = vmatprep.subr.mxu0 0.0
        %1271 = vmatpush1.msra.mxu0 0.0
        %1272 = vmatprep.subr.mxu0 0.0
        %1273 = vmatpush1.msra.mxu0 0.0
        %1274 = vmatprep.subr.mxu0 0.0
        %1275 = vmatpush1.msra.mxu0 0.0
        %1276 = vmatprep.subr.mxu0 0.0
        %1277 = vmatpush1.msra.mxu0 0.0
        %1278 = vmatprep.subr.mxu0 0.0
        %1279 = vmatpush1.msra.mxu0 0.0
        %1280 = vmatprep.subr.mxu0 0.0
        %1281 = vmatpush1.msra.mxu0 0.0
        %1282 = vmatprep.subr.mxu0 0.0
        %1283 = vmatpush1.msra.mxu0 0.0
        %1284 = vmatprep.subr.mxu0 0.0
        %1285 = vmatpush1.msra.mxu0 0.0
        %1286 = vmatprep.subr.mxu0 0.0
        %1287 = vmatpush1.msra.mxu0 0.0
        %1288 = vmatprep.subr.mxu0 0.0
        %1289 = vmatpush1.msra.mxu0 0.0
        %1290 = vmatprep.subr.mxu0 0.0
        %1291 = vmatpush1.msra.mxu0 0.0
        %1292 = vmatprep.subr.mxu0 0.0
        %1293 = vmatpush1.msra.mxu0 0.0
        %1294 = vmatprep.subr.mxu0 0.0
        %1295 = vmatpush1.msra.mxu0 0.0
        %1296 = vmatprep.mubr.f32.mxu0 0.0
        %1297 = vmatmul.mubr.f32.gmra.mrb[0].mxu0 %v1230
        %v1298 = vpop.f32.mrb[0].mxu0
        %v1299 = vadd.f32 0.0, %v1298
        %v1300 = vpop.f32.mrb[0].mxu0
        %1301 = vdwg.mxu0
        %1302 = vmatprep.subr.mxu0 0.0
        %1303 = vmatpush1.xpose.msra.mxu0 %v846
        %1304 = vmatprep.subr.mxu0 0.0
        %1305 = vmatpush1.xpose.msra.mxu0 0.0
        %1306 = vmatprep.subr.mxu0 0.0
        %1307 = vmatpush1.xpose.msra.mxu0 0.0
        %1308 = vmatprep.subr.mxu0 0.0
        %1309 = vmatpush1.xpose.msra.mxu0 0.0
        %1310 = vmatprep.subr.mxu0 0.0
        %1311 = vmatpush1.xpose.msra.mxu0 0.0
        %1312 = vmatprep.subr.mxu0 0.0
        %1313 = vmatpush1.xpose.msra.mxu0 0.0
        %1314 = vmatprep.subr.mxu0 0.0
        %1315 = vmatpush1.xpose.msra.mxu0 0.0
        %1316 = vmatprep.subr.mxu0 0.0
        %1317 = vmatpush1.xpose.msra.mxu0 0.0
        %1318 = vmatprep.subr.mxu0 0.0
        %1319 = vmatpush1.xpose.msra.mxu0 0.0
        %1320 = vmatprep.subr.mxu0 0.0
        %1321 = vmatpush1.xpose.msra.mxu0 0.0
        %1322 = vmatprep.subr.mxu0 0.0
        %1323 = vmatpush1.xpose.msra.mxu0 0.0
        %1324 = vmatprep.subr.mxu0 0.0
        %1325 = vmatpush1.xpose.msra.mxu0 0.0
        %1326 = vmatprep.subr.mxu0 0.0
        %1327 = vmatpush1.xpose.msra.mxu0 0.0
        %1328 = vmatprep.subr.mxu0 0.0
        %1329 = vmatpush1.xpose.msra.mxu0 0.0
        %1330 = vmatprep.subr.mxu0 0.0
        %1331 = vmatpush1.xpose.msra.mxu0 0.0
        %1332 = vmatprep.subr.mxu0 0.0
        %1333 = vmatpush1.xpose.msra.mxu0 0.0
        %1334 = vmatprep.subr.mxu0 0.0
        %1335 = vmatpush1.xpose.msra.mxu0 0.0
        %1336 = vmatprep.subr.mxu0 0.0
        %1337 = vmatpush1.xpose.msra.mxu0 0.0
        %1338 = vmatprep.subr.mxu0 0.0
        %1339 = vmatpush1.xpose.msra.mxu0 0.0
        %1340 = vmatprep.subr.mxu0 0.0
        %1341 = vmatpush1.xpose.msra.mxu0 0.0
        %1342 = vmatprep.subr.mxu0 0.0
        %1343 = vmatpush1.xpose.msra.mxu0 0.0
        %1344 = vmatprep.subr.mxu0 0.0
        %1345 = vmatpush1.xpose.msra.mxu0 0.0
        %1346 = vmatprep.subr.mxu0 0.0
        %1347 = vmatpush1.xpose.msra.mxu0 0.0
        %1348 = vmatprep.subr.mxu0 0.0
        %1349 = vmatpush1.xpose.msra.mxu0 0.0
        %1350 = vmatprep.subr.mxu0 0.0
        %1351 = vmatpush1.xpose.msra.mxu0 0.0
        %1352 = vmatprep.subr.mxu0 0.0
        %1353 = vmatpush1.xpose.msra.mxu0 0.0
        %1354 = vmatprep.subr.mxu0 0.0
        %1355 = vmatpush1.xpose.msra.mxu0 0.0
        %1356 = vmatprep.subr.mxu0 0.0
        %1357 = vmatpush1.xpose.msra.mxu0 0.0
        %1358 = vmatprep.subr.mxu0 0.0
        %1359 = vmatpush1.xpose.msra.mxu0 0.0
        %1360 = vmatprep.subr.mxu0 0.0
        %1361 = vmatpush1.xpose.msra.mxu0 0.0
        %1362 = vmatprep.subr.mxu0 0.0
        %1363 = vmatpush1.xpose.msra.mxu0 0.0
        %1364 = vmatprep.subr.mxu0 0.0
        %1365 = vmatpush1.xpose.msra.mxu0 0.0
        %1366 = vmatprep.mubr.f32.mxu0 0.0
        %1367 = vmatmul.mubr.f32.gmra.mrb[0].mxu0 %v704
        %v1368 = vpop.f32.mrb[0].mxu0
        %v1369 = vadd.f32 %v992, %v1368
        %v1370 = vpop.f32.mrb[0].mxu0
        %1371 = vdwg.mxu0
        %v1372 = vsel %vm1063, %v1369, -inf
        %1373 = vmax.xlane.f32.xlu0 %v1372
        %v1374 = vpop.xlane.xlu0 %1373
        %v1375 = vsub.f32 %v1369, %v1374
        %v1376 = vmul.f32 %v1375, 1.442695
        %v1377 = vpow.pop %v1376
        %v1378 = vsel %vm1063, %v1377, 0.0
        %1379 = vadd.xlane.f32.xlu0 %v1378
        %v1380 = vpop.xlane.xlu0 %1379
        %v1381 = vrcp.pop %v1380
        %v1382 = vmul.f32 %v1377, %v1381
        %v1384 = vsel %vm1063, %v1382, 0
        %1386 = vmatprep.subr.mxu0 0.0
        %1387 = vmatpush1.msra.mxu0 %v988
        %1388 = vmatprep.subr.mxu0 0.0
        %1389 = vmatpush1.msra.mxu0 0.0
        %1390 = vmatprep.subr.mxu0 0.0
        %1391 = vmatpush1.msra.mxu0 0.0
        %1392 = vmatprep.subr.mxu0 0.0
        %1393 = vmatpush1.msra.mxu0 0.0
        %1394 = vmatprep.subr.mxu0 0.0
        %1395 = vmatpush1.msra.mxu0 0.0
        %1396 = vmatprep.subr.mxu0 0.0
        %1397 = vmatpush1.msra.mxu0 0.0
        %1398 = vmatprep.subr.mxu0 0.0
        %1399 = vmatpush1.msra.mxu0 0.0
        %1400 = vmatprep.subr.mxu0 0.0
        %1401 = vmatpush1.msra.mxu0 0.0
        %1402 = vmatprep.subr.mxu0 0.0
        %1403 = vmatpush1.msra.mxu0 0.0
        %1404 = vmatprep.subr.mxu0 0.0
        %1405 = vmatpush1.msra.mxu0 0.0
        %1406 = vmatprep.subr.mxu0 0.0
        %1407 = vmatpush1.msra.mxu0 0.0
        %1408 = vmatprep.subr.mxu0 0.0
        %1409 = vmatpush1.msra.mxu0 0.0
        %1410 = vmatprep.subr.mxu0 0.0
        %1411 = vmatpush1.msra.mxu0 0.0
        %1412 = vmatprep.subr.mxu0 0.0
        %1413 = vmatpush1.msra.mxu0 0.0
        %1414 = vmatprep.subr.mxu0 0.0
        %1415 = vmatpush1.msra.mxu0 0.0
        %1416 = vmatprep.subr.mxu0 0.0
        %1417 = vmatpush1.msra.mxu0 0.0
        %1418 = vmatprep.subr.mxu0 0.0
        %1419 = vmatpush1.msra.mxu0 0.0
        %1420 = vmatprep.subr.mxu0 0.0
        %1421 = vmatpush1.msra.mxu0 0.0
        %1422 = vmatprep.subr.mxu0 0.0
        %1423 = vmatpush1.msra.mxu0 0.0
        %1424 = vmatprep.subr.mxu0 0.0
        %1425 = vmatpush1.msra.mxu0 0.0
        %1426 = vmatprep.subr.mxu0 0.0
        %1427 = vmatpush1.msra.mxu0 0.0
        %1428 = vmatprep.subr.mxu0 0.0
        %1429 = vmatpush1.msra.mxu0 0.0
        %1430 = vmatprep.subr.mxu0 0.0
        %1431 = vmatpush1.msra.mxu0 0.0
        %1432 = vmatprep.subr.mxu0 0.0
        %1433 = vmatpush1.msra.mxu0 0.0
        %1434 = vmatprep.subr.mxu0 0.0
        %1435 = vmatpush1.msra.mxu0 0.0
        %1436 = vmatprep.subr.mxu0 0.0
        %1437 = vmatpush1.msra.mxu0 0.0
        %1438 = vmatprep.subr.mxu0 0.0
        %1439 = vmatpush1.msra.mxu0 0.0
        %1440 = vmatprep.subr.mxu0 0.0
        %1441 = vmatpush1.msra.mxu0 0.0
        %1442 = vmatprep.subr.mxu0 0.0
        %1443 = vmatpush1.msra.mxu0 0.0
        %1444 = vmatprep.subr.mxu0 0.0
        %1445 = vmatpush1.msra.mxu0 0.0
        %1446 = vmatprep.subr.mxu0 0.0
        %1447 = vmatpush1.msra.mxu0 0.0
        %1448 = vmatprep.subr.mxu0 0.0
        %1449 = vmatpush1.msra.mxu0 0.0
        %1450 = vmatprep.mubr.f32.mxu0 0.0
        %1451 = vmatmul.mubr.f32.gmra.mrb[0].mxu0 %v1384
        %v1452 = vpop.f32.mrb[0].mxu0
        %v1453 = vadd.f32 0.0, %v1452
        %v1454 = vpop.f32.mrb[0].mxu0
        %1455 = vdwg.mxu0
        %1456 = vmatprep.subr.mxu0 0.0
        %1457 = vmatpush1.xpose.msra.mxu0 %v848
        %1458 = vmatprep.subr.mxu0 0.0
        %1459 = vmatpush1.xpose.msra.mxu0 0.0
        %1460 = vmatprep.subr.mxu0 0.0
        %1461 = vmatpush1.xpose.msra.mxu0 0.0
        %1462 = vmatprep.subr.mxu0 0.0
        %1463 = vmatpush1.xpose.msra.mxu0 0.0
        %1464 = vmatprep.subr.mxu0 0.0
        %1465 = vmatpush1.xpose.msra.mxu0 0.0
        %1466 = vmatprep.subr.mxu0 0.0
        %1467 = vmatpush1.xpose.msra.mxu0 0.0
        %1468 = vmatprep.subr.mxu0 0.0
        %1469 = vmatpush1.xpose.msra.mxu0 0.0
        %1470 = vmatprep.subr.mxu0 0.0
        %1471 = vmatpush1.xpose.msra.mxu0 0.0
        %1472 = vmatprep.subr.mxu0 0.0
        %1473 = vmatpush1.xpose.msra.mxu0 0.0
        %1474 = vmatprep.subr.mxu0 0.0
        %1475 = vmatpush1.xpose.msra.mxu0 0.0
        %1476 = vmatprep.subr.mxu0 0.0
        %1477 = vmatpush1.xpose.msra.mxu0 0.0
        %1478 = vmatprep.subr.mxu0 0.0
        %1479 = vmatpush1.xpose.msra.mxu0 0.0
        %1480 = vmatprep.subr.mxu0 0.0
        %1481 = vmatpush1.xpose.msra.mxu0 0.0
        %1482 = vmatprep.subr.mxu0 0.0
        %1483 = vmatpush1.xpose.msra.mxu0 0.0
        %1484 = vmatprep.subr.mxu0 0.0
        %1485 = vmatpush1.xpose.msra.mxu0 0.0
        %1486 = vmatprep.subr.mxu0 0.0
        %1487 = vmatpush1.xpose.msra.mxu0 0.0
        %1488 = vmatprep.subr.mxu0 0.0
        %1489 = vmatpush1.xpose.msra.mxu0 0.0
        %1490 = vmatprep.subr.mxu0 0.0
        %1491 = vmatpush1.xpose.msra.mxu0 0.0
        %1492 = vmatprep.subr.mxu0 0.0
        %1493 = vmatpush1.xpose.msra.mxu0 0.0
        %1494 = vmatprep.subr.mxu0 0.0
        %1495 = vmatpush1.xpose.msra.mxu0 0.0
        %1496 = vmatprep.subr.mxu0 0.0
        %1497 = vmatpush1.xpose.msra.mxu0 0.0
        %1498 = vmatprep.subr.mxu0 0.0
        %1499 = vmatpush1.xpose.msra.mxu0 0.0
        %1500 = vmatprep.subr.mxu0 0.0
        %1501 = vmatpush1.xpose.msra.mxu0 0.0
        %1502 = vmatprep.subr.mxu0 0.0
        %1503 = vmatpush1.xpose.msra.mxu0 0.0
        %1504 = vmatprep.subr.mxu0 0.0
        %1505 = vmatpush1.xpose.msra.mxu0 0.0
        %1506 = vmatprep.subr.mxu0 0.0
        %1507 = vmatpush1.xpose.msra.mxu0 0.0
        %1508 = vmatprep.subr.mxu0 0.0
        %1509 = vmatpush1.xpose.msra.mxu0 0.0
        %1510 = vmatprep.subr.mxu0 0.0
        %1511 = vmatpush1.xpose.msra.mxu0 0.0
        %1512 = vmatprep.subr.mxu0 0.0
        %1513 = vmatpush1.xpose.msra.mxu0 0.0
        %1514 = vmatprep.subr.mxu0 0.0
        %1515 = vmatpush1.xpose.msra.mxu0 0.0
        %1516 = vmatprep.subr.mxu0 0.0
        %1517 = vmatpush1.xpose.msra.mxu0 0.0
        %1518 = vmatprep.subr.mxu0 0.0
        %1519 = vmatpush1.xpose.msra.mxu0 0.0
        %1520 = vmatprep.mubr.f32.mxu0 0.0
        %1521 = vmatmul.mubr.f32.gmra.mrb[0].mxu0 %v706
        %v1522 = vpop.f32.mrb[0].mxu0
        %v1523 = vadd.f32 %v992, %v1522
        %v1524 = vpop.f32.mrb[0].mxu0
        %1525 = vdwg.mxu0
        %v1526 = vsel %vm1063, %v1523, -inf
        %1527 = vmax.xlane.f32.xlu0 %v1526
        %v1528 = vpop.xlane.xlu0 %1527
        %v1529 = vsub.f32 %v1523, %v1528
        %v1530 = vmul.f32 %v1529, 1.442695
        %v1531 = vpow.pop %v1530
        %v1532 = vsel %vm1063, %v1531, 0.0
        %1533 = vadd.xlane.f32.xlu0 %v1532
        %v1534 = vpop.xlane.xlu0 %1533
        %v1535 = vrcp.pop %v1534
        %v1536 = vmul.f32 %v1531, %v1535
        %v1538 = vsel %vm1063, %v1536, 0
        %1540 = vmatprep.subr.mxu0 0.0
        %1541 = vmatpush1.msra.mxu0 %v990
        %1542 = vmatprep.subr.mxu0 0.0
        %1543 = vmatpush1.msra.mxu0 0.0
        %1544 = vmatprep.subr.mxu0 0.0
        %1545 = vmatpush1.msra.mxu0 0.0
        %1546 = vmatprep.subr.mxu0 0.0
        %1547 = vmatpush1.msra.mxu0 0.0
        %1548 = vmatprep.subr.mxu0 0.0
        %1549 = vmatpush1.msra.mxu0 0.0
        %1550 = vmatprep.subr.mxu0 0.0
        %1551 = vmatpush1.msra.mxu0 0.0
        %1552 = vmatprep.subr.mxu0 0.0
        %1553 = vmatpush1.msra.mxu0 0.0
        %1554 = vmatprep.subr.mxu0 0.0
        %1555 = vmatpush1.msra.mxu0 0.0
        %1556 = vmatprep.subr.mxu0 0.0
        %1557 = vmatpush1.msra.mxu0 0.0
        %1558 = vmatprep.subr.mxu0 0.0
        %1559 = vmatpush1.msra.mxu0 0.0
        %1560 = vmatprep.subr.mxu0 0.0
        %1561 = vmatpush1.msra.mxu0 0.0
        %1562 = vmatprep.subr.mxu0 0.0
        %1563 = vmatpush1.msra.mxu0 0.0
        %1564 = vmatprep.subr.mxu0 0.0
        %1565 = vmatpush1.msra.mxu0 0.0
        %1566 = vmatprep.subr.mxu0 0.0
        %1567 = vmatpush1.msra.mxu0 0.0
        %1568 = vmatprep.subr.mxu0 0.0
        %1569 = vmatpush1.msra.mxu0 0.0
        %1570 = vmatprep.subr.mxu0 0.0
        %1571 = vmatpush1.msra.mxu0 0.0
        %1572 = vmatprep.subr.mxu0 0.0
        %1573 = vmatpush1.msra.mxu0 0.0
        %1574 = vmatprep.subr.mxu0 0.0
        %1575 = vmatpush1.msra.mxu0 0.0
        %1576 = vmatprep.subr.mxu0 0.0
        %1577 = vmatpush1.msra.mxu0 0.0
        %1578 = vmatprep.subr.mxu0 0.0
        %1579 = vmatpush1.msra.mxu0 0.0
        %1580 = vmatprep.subr.mxu0 0.0
        %1581 = vmatpush1.msra.mxu0 0.0
        %1582 = vmatprep.subr.mxu0 0.0
        %1583 = vmatpush1.msra.mxu0 0.0
        %1584 = vmatprep.subr.mxu0 0.0
        %1585 = vmatpush1.msra.mxu0 0.0
        %1586 = vmatprep.subr.mxu0 0.0
        %1587 = vmatpush1.msra.mxu0 0.0
        %1588 = vmatprep.subr.mxu0 0.0
        %1589 = vmatpush1.msra.mxu0 0.0
        %1590 = vmatprep.subr.mxu0 0.0
        %1591 = vmatpush1.msra.mxu0 0.0
        %1592 = vmatprep.subr.mxu0 0.0
        %1593 = vmatpush1.msra.mxu0 0.0
        %1594 = vmatprep.subr.mxu0 0.0
        %1595 = vmatpush1.msra.mxu0 0.0
        %1596 = vmatprep.subr.mxu0 0.0
        %1597 = vmatpush1.msra.mxu0 0.0
        %1598 = vmatprep.subr.mxu0 0.0
        %1599 = vmatpush1.msra.mxu0 0.0
        %1600 = vmatprep.subr.mxu0 0.0
        %1601 = vmatpush1.msra.mxu0 0.0
        %1602 = vmatprep.subr.mxu0 0.0
        %1603 = vmatpush1.msra.mxu0 0.0
        %1604 = vmatprep.mubr.f32.mxu0 0.0
        %1605 = vmatmul.mubr.f32.gmra.mrb[0].mxu0 %v1538
        %v1606 = vpop.f32.mrb[0].mxu0
        %v1607 = vadd.f32 0.0, %v1606
        %v1608 = vpop.f32.mrb[0].mxu0
        %1609 = vdwg.mxu0
        %v1610 = vld [vmem:[#allocation8] sm:$0xff]
        %v1611 = vld [vmem:[#allocation8 + $0x8] sm:$0xff]
        %v1612 = vld [vmem:[#allocation8 + $0x10] sm:$0xff]
        %v1613 = vld [vmem:[#allocation8 + $0x18] sm:$0xff]
        %v1614 = vld [vmem:[#allocation8 + $0x20] sm:$0xff]
        %v1615 = vld [vmem:[#allocation8 + $0x28] sm:$0xff]
        %v1616 = vld [vmem:[#allocation8 + $0x30] sm:$0xff]
        %v1617 = vld [vmem:[#allocation8 + $0x38] sm:$0xff]
        %v1618 = vld [vmem:[#allocation8 + $0x40] sm:$0xff]
        %v1619 = vld [vmem:[#allocation8 + $0x48] sm:$0xff]
        %v1620 = vld [vmem:[#allocation8 + $0x50] sm:$0xff]
        %v1621 = vld [vmem:[#allocation8 + $0x58] sm:$0xff]
        %v1622 = vld [vmem:[#allocation8 + $0x60] sm:$0xff]
        %v1623 = vld [vmem:[#allocation8 + $0x68] sm:$0xff]
        %v1624 = vld [vmem:[#allocation8 + $0x70] sm:$0xff]
        %v1625 = vld [vmem:[#allocation8 + $0x78] sm:$0xff]
        %v1626 = vld [vmem:[#allocation8 + $0x80] sm:$0xff]
        %v1627 = vld [vmem:[#allocation8 + $0x88] sm:$0xff]
        %v1628 = vld [vmem:[#allocation8 + $0x90] sm:$0xff]
        %v1629 = vld [vmem:[#allocation8 + $0x98] sm:$0xff]
        %v1630 = vld [vmem:[#allocation8 + $0xa0] sm:$0xff]
        %v1631 = vld [vmem:[#allocation8 + $0xa8] sm:$0xff]
        %v1632 = vld [vmem:[#allocation8 + $0xb0] sm:$0xff]
        %v1633 = vld [vmem:[#allocation8 + $0xb8] sm:$0xff]
        %v1634 = vld [vmem:[#allocation8 + $0xc0] sm:$0xff]
        %v1635 = vld [vmem:[#allocation8 + $0xc8] sm:$0xff]
        %v1636 = vld [vmem:[#allocation8 + $0xd0] sm:$0xff]
        %v1637 = vld [vmem:[#allocation8 + $0xd8] sm:$0xff]
        %v1638 = vld [vmem:[#allocation8 + $0xe0] sm:$0xff]
        %v1639 = vld [vmem:[#allocation8 + $0xe8] sm:$0xff]
        %v1640 = vld [vmem:[#allocation8 + $0xf0] sm:$0xff]
        %v1641 = vld [vmem:[#allocation8 + $0xf8] sm:$0xff]
        %v1642 = vld [vmem:[#allocation8 + $0x100] sm:$0xff]
        %v1643 = vld [vmem:[#allocation8 + $0x108] sm:$0xff]
        %v1644 = vld [vmem:[#allocation8 + $0x110] sm:$0xff]
        %v1645 = vld [vmem:[#allocation8 + $0x118] sm:$0xff]
        %v1646 = vld [vmem:[#allocation8 + $0x120] sm:$0xff]
        %v1647 = vld [vmem:[#allocation8 + $0x128] sm:$0xff]
        %v1648 = vld [vmem:[#allocation8 + $0x130] sm:$0xff]
        %v1649 = vld [vmem:[#allocation8 + $0x138] sm:$0xff]
        %v1650 = vld [vmem:[#allocation8 + $0x140] sm:$0xff]
        %v1651 = vld [vmem:[#allocation8 + $0x148] sm:$0xff]
        %v1652 = vld [vmem:[#allocation8 + $0x150] sm:$0xff]
        %v1653 = vld [vmem:[#allocation8 + $0x158] sm:$0xff]
        %v1654 = vld [vmem:[#allocation8 + $0x160] sm:$0xff]
        %v1655 = vld [vmem:[#allocation8 + $0x168] sm:$0xff]
        %v1656 = vld [vmem:[#allocation8 + $0x170] sm:$0xff]
        %v1657 = vld [vmem:[#allocation8 + $0x178] sm:$0xff]
        %v1658 = vld [vmem:[#allocation8 + $0x180] sm:$0xff]
        %v1659 = vld [vmem:[#allocation8 + $0x188] sm:$0xff]
        %v1660 = vld [vmem:[#allocation8 + $0x190] sm:$0xff]
        %v1661 = vld [vmem:[#allocation8 + $0x198] sm:$0xff]
        %v1662 = vld [vmem:[#allocation8 + $0x1a0] sm:$0xff]
        %v1663 = vld [vmem:[#allocation8 + $0x1a8] sm:$0xff]
        %v1664 = vld [vmem:[#allocation8 + $0x1b0] sm:$0xff]
        %v1665 = vld [vmem:[#allocation8 + $0x1b8] sm:$0xff]
        %v1666 = vld [vmem:[#allocation8 + $0x1c0] sm:$0xff]
        %v1667 = vld [vmem:[#allocation8 + $0x1c8] sm:$0xff]
        %v1668 = vld [vmem:[#allocation8 + $0x1d0] sm:$0xff]
        %v1669 = vld [vmem:[#allocation8 + $0x1d8] sm:$0xff]
        %v1670 = vld [vmem:[#allocation8 + $0x1e0] sm:$0xff]
        %v1671 = vld [vmem:[#allocation8 + $0x1e8] sm:$0xff]
        %v1672 = vld [vmem:[#allocation8 + $0x1f0] sm:$0xff]
        %v1673 = vld [vmem:[#allocation8 + $0x1f8] sm:$0xff]
        %v1674 = vld [vmem:[%s4] sm:$0x1]
        %v1676 = vlaneseq
        %v1677 = vshrl.u32 %v1676, 7
        %v1678 = vsub.s32 0, %v1677
        %v1679 = vrot.slane %v1674, %v1678
        %1681 = vmatprep.subr.mxu0 0.0
        %1682 = vmatpush1.msra.mxu0 %v1610
        %1683 = vmatprep.subr.mxu0 0.0
        %1684 = vmatpush1.msra.mxu0 %v1611
        %1685 = vmatprep.subr.mxu0 0.0
        %1686 = vmatpush1.msra.mxu0 %v1612
        %1687 = vmatprep.subr.mxu0 0.0
        %1688 = vmatpush1.msra.mxu0 %v1613
        %1689 = vmatprep.subr.mxu0 0.0
        %1690 = vmatpush1.msra.mxu0 %v1614
        %1691 = vmatprep.subr.mxu0 0.0
        %1692 = vmatpush1.msra.mxu0 %v1615
        %1693 = vmatprep.subr.mxu0 0.0
        %1694 = vmatpush1.msra.mxu0 %v1616
        %1695 = vmatprep.subr.mxu0 0.0
        %1696 = vmatpush1.msra.mxu0 %v1617
        %1697 = vmatprep.subr.mxu0 0.0
        %1698 = vmatpush1.msra.mxu0 %v1618
        %1699 = vmatprep.subr.mxu0 0.0
        %1700 = vmatpush1.msra.mxu0 %v1619
        %1701 = vmatprep.subr.mxu0 0.0
        %1702 = vmatpush1.msra.mxu0 %v1620
        %1703 = vmatprep.subr.mxu0 0.0
        %1704 = vmatpush1.msra.mxu0 %v1621
        %1705 = vmatprep.subr.mxu0 0.0
        %1706 = vmatpush1.msra.mxu0 %v1622
        %1707 = vmatprep.subr.mxu0 0.0
        %1708 = vmatpush1.msra.mxu0 %v1623
        %1709 = vmatprep.subr.mxu0 0.0
        %1710 = vmatpush1.msra.mxu0 %v1624
        %1711 = vmatprep.subr.mxu0 0.0
        %1712 = vmatpush1.msra.mxu0 %v1625
        %1713 = vmatprep.subr.mxu0 0.0
        %1714 = vmatpush1.msra.mxu0 %v1626
        %1715 = vmatprep.subr.mxu0 0.0
        %1716 = vmatpush1.msra.mxu0 %v1627
        %1717 = vmatprep.subr.mxu0 0.0
        %1718 = vmatpush1.msra.mxu0 %v1628
        %1719 = vmatprep.subr.mxu0 0.0
        %1720 = vmatpush1.msra.mxu0 %v1629
        %1721 = vmatprep.subr.mxu0 0.0
        %1722 = vmatpush1.msra.mxu0 %v1630
        %1723 = vmatprep.subr.mxu0 0.0
        %1724 = vmatpush1.msra.mxu0 %v1631
        %1725 = vmatprep.subr.mxu0 0.0
        %1726 = vmatpush1.msra.mxu0 %v1632
        %1727 = vmatprep.subr.mxu0 0.0
        %1728 = vmatpush1.msra.mxu0 %v1633
        %1729 = vmatprep.subr.mxu0 0.0
        %1730 = vmatpush1.msra.mxu0 %v1634
        %1731 = vmatprep.subr.mxu0 0.0
        %1732 = vmatpush1.msra.mxu0 %v1635
        %1733 = vmatprep.subr.mxu0 0.0
        %1734 = vmatpush1.msra.mxu0 %v1636
        %1735 = vmatprep.subr.mxu0 0.0
        %1736 = vmatpush1.msra.mxu0 %v1637
        %1737 = vmatprep.subr.mxu0 0.0
        %1738 = vmatpush1.msra.mxu0 %v1638
        %1739 = vmatprep.subr.mxu0 0.0
        %1740 = vmatpush1.msra.mxu0 %v1639
        %1741 = vmatprep.subr.mxu0 0.0
        %1742 = vmatpush1.msra.mxu0 %v1640
        %1743 = vmatprep.subr.mxu0 0.0
        %1744 = vmatpush1.msra.mxu0 %v1641
        %1745 = vmatprep.mubr.f32.mxu0 %v1299
        %1746 = vmatmul.mubr.f32.gmra.mrb[0].mxu0 %v1145
        %v1747 = vpop.f32.mrb[0].mxu0
        %v1748 = vadd.f32 %v1679, %v1747
        %v1749 = vpop.f32.mrb[0].mxu0
        %1750 = vdwg.mxu0
        %1751 = vmatprep.subr.mxu0 0.0
        %1752 = vmatpush1.msra.mxu0 %v1642
        %1753 = vmatprep.subr.mxu0 0.0
        %1754 = vmatpush1.msra.mxu0 %v1643
        %1755 = vmatprep.subr.mxu0 0.0
        %1756 = vmatpush1.msra.mxu0 %v1644
        %1757 = vmatprep.subr.mxu0 0.0
        %1758 = vmatpush1.msra.mxu0 %v1645
        %1759 = vmatprep.subr.mxu0 0.0
        %1760 = vmatpush1.msra.mxu0 %v1646
        %1761 = vmatprep.subr.mxu0 0.0
        %1762 = vmatpush1.msra.mxu0 %v1647
        %1763 = vmatprep.subr.mxu0 0.0
        %1764 = vmatpush1.msra.mxu0 %v1648
        %1765 = vmatprep.subr.mxu0 0.0
        %1766 = vmatpush1.msra.mxu0 %v1649
        %1767 = vmatprep.subr.mxu0 0.0
        %1768 = vmatpush1.msra.mxu0 %v1650
        %1769 = vmatprep.subr.mxu0 0.0
        %1770 = vmatpush1.msra.mxu0 %v1651
        %1771 = vmatprep.subr.mxu0 0.0
        %1772 = vmatpush1.msra.mxu0 %v1652
        %1773 = vmatprep.subr.mxu0 0.0
        %1774 = vmatpush1.msra.mxu0 %v1653
        %1775 = vmatprep.subr.mxu0 0.0
        %1776 = vmatpush1.msra.mxu0 %v1654
        %1777 = vmatprep.subr.mxu0 0.0
        %1778 = vmatpush1.msra.mxu0 %v1655
        %1779 = vmatprep.subr.mxu0 0.0
        %1780 = vmatpush1.msra.mxu0 %v1656
        %1781 = vmatprep.subr.mxu0 0.0
        %1782 = vmatpush1.msra.mxu0 %v1657
        %1783 = vmatprep.subr.mxu0 0.0
        %1784 = vmatpush1.msra.mxu0 %v1658
        %1785 = vmatprep.subr.mxu0 0.0
        %1786 = vmatpush1.msra.mxu0 %v1659
        %1787 = vmatprep.subr.mxu0 0.0
        %1788 = vmatpush1.msra.mxu0 %v1660
        %1789 = vmatprep.subr.mxu0 0.0
        %1790 = vmatpush1.msra.mxu0 %v1661
        %1791 = vmatprep.subr.mxu0 0.0
        %1792 = vmatpush1.msra.mxu0 %v1662
        %1793 = vmatprep.subr.mxu0 0.0
        %1794 = vmatpush1.msra.mxu0 %v1663
        %1795 = vmatprep.subr.mxu0 0.0
        %1796 = vmatpush1.msra.mxu0 %v1664
        %1797 = vmatprep.subr.mxu0 0.0
        %1798 = vmatpush1.msra.mxu0 %v1665
        %1799 = vmatprep.subr.mxu0 0.0
        %1800 = vmatpush1.msra.mxu0 %v1666
        %1801 = vmatprep.subr.mxu0 0.0
        %1802 = vmatpush1.msra.mxu0 %v1667
        %1803 = vmatprep.subr.mxu0 0.0
        %1804 = vmatpush1.msra.mxu0 %v1668
        %1805 = vmatprep.subr.mxu0 0.0
        %1806 = vmatpush1.msra.mxu0 %v1669
        %1807 = vmatprep.subr.mxu0 0.0
        %1808 = vmatpush1.msra.mxu0 %v1670
        %1809 = vmatprep.subr.mxu0 0.0
        %1810 = vmatpush1.msra.mxu0 %v1671
        %1811 = vmatprep.subr.mxu0 0.0
        %1812 = vmatpush1.msra.mxu0 %v1672
        %1813 = vmatprep.subr.mxu0 0.0
        %1814 = vmatpush1.msra.mxu0 %v1673
        %1815 = vmatprep.mubr.f32.mxu0 %v1607
        %1816 = vmatmul.mubr.f32.gmra.mrb[0].mxu0 %v1453
        %v1817 = vpop.f32.mrb[0].mxu0
        %v1818 = vadd.f32 %v1748, %v1817
        %v1819 = vpop.f32.mrb[0].mxu0
        %1820 = vdwg.mxu0
        %1821 = vst [vmem:[%s308] sm:$0xff] %v1818
        %s1822 = sand.u32 %s164, 1
        %s1823 = scalar_lea.sflag [#allocation4], %s1822
        %s1824 = sand.u32 %s164, 1
        %s1825 = smul.addr %s1824, 8
        %s1826 = scalar_lea.vmem [#allocation10], %s1825
        // Predicated region
        $region61: #{tpu_custom_call.1} parent=43 // pred_check
          %p1827 = pneg %p174
        $region62: #{tpu_custom_call.1} parent=43 // pred_check_branch
          %1829 = sbr.rel (%p1827) target = $region64
        $region63: #{tpu_custom_call.1} parent=43 // pred_region
          %s1831 = ssub.s32 128, 128
          %1832 = vsyncadd %s1823, %s1831
          %s1833 = smul.addr %s25, 128
          %s1834 = scalar_lea.hbm %s6, %s1833
          %s1836 = sshll.u32 %s1826, 4
          %s1837 = int_to_ptr.vmem [resolvable:$true] %s1836
          %1839 = dma.vmem_to_hbm [thread:$0]  %s1837, 128, %s1834, %s1823
        $region64: #{tpu_custom_call.1} parent=43 // pred_fallthru
          _
      $region44: #{tpu_custom_call.1} parent=5 // pred_fallthru
        _
      %p1840 = scmp.le.s32.totalorder 2, %s20
      // Predicated region
      $region65: #{tpu_custom_call.1} parent=5 // pred_check
        %p1841 = pneg %p1840
      $region66: #{tpu_custom_call.1} parent=5 // pred_check_branch
        %1843 = sbr.rel (%p1841) target = $region68
      $region67: #{tpu_custom_call.1} parent=5 // pred_region
        %s1844 = ssub.s32 %s20, 2
        // Predicated region
        $region69: #{tpu_custom_call.1} parent=67 // pred_check
          %p1845 = pneg %p180
        $region70: #{tpu_custom_call.1} parent=67 // pred_check_branch
          %1847 = sbr.rel (%p1845) target = $region72
        $region71: #{tpu_custom_call.1} parent=67 // pred_region
          %s1848 = sand.u32 %s165, 1
          %s1849 = scalar_lea.sflag [#allocation4], %s1848
          %s1850 = sand.u32 %s165, 1
          %s1851 = smul.addr %s1850, 8
          %s1852 = scalar_lea.vmem [#allocation10], %s1851
          %1853 = dma.done %s1849, 128
        $region72: #{tpu_custom_call.1} parent=67 // pred_fallthru
          _
      $region68: #{tpu_custom_call.1} parent=5 // pred_fallthru
        _
    $region6: #{tpu_custom_call.1} parent=1 // loop_footer
      %s24 = sadd.s32 1, %s20
    $region7: #{tpu_custom_call.1} parent=1 // loop_footer_branch
      %19 = sbr.rel target = $region3
    $region8: #{tpu_custom_call.1} parent=1 // loop_exit
      _
    %1854 = vsyncpa [#allocation3], 1
    %s1855 = scalar_lea.sflag [#allocation3], 1
    %1856 = vsyncpa %s1855, 1
    %1857 = vsyncpa [#allocation6], 1
    %1858 = vsyncpa [#allocation9], 1
    %1859 = vsyncpa [#allocation4], 1
    %s1860 = scalar_lea.sflag [#allocation4], 1
    %1861 = vsyncpa %s1860, 1

// kernel: tpu_custom_call.1
$region0: #{tpu_custom_call.1}
  #allocation0 [shape = 'u32[]', space=smem, size = 0x4, offset = 0x4, fixed_abs, tag = 'smem constant byte address 0x4 - core index']
  #allocation1 [shape = 'u32[144,128]{1,0:T(1,128)}', space=vmem, size = 0x12000, scoped, tag = 'internal scratch']
  %s0 = inlined_call_operand.hbm [shape: f32[2,8,128], index: 0, kind: input, shape index: {}]
  %s1 = inlined_call_operand.hbm [shape: f32[128,1536], index: 1, kind: input, shape index: {}]
  %s2 = inlined_call_operand.hbm [shape: f32[1,1536], index: 2, kind: input, shape index: {}]
  %s3 = inlined_call_operand.hbm [shape: f32[512,128], index: 3, kind: input, shape index: {}]
  %s4 = inlined_call_operand.vmem [shape: f32[1,128], index: 4, kind: input, shape index: {}]
  %s5 = inlined_call_operand.vmem [shape: f32[1,1,8,8], index: 5, kind: input, shape index: {}]
  %s6 = inlined_call_operand.hbm [shape: f32[2,8,128], index: 6, kind: output, shape index: {}]
  %s7 = sld [smem:[#allocation0]]
  $region73: #{tpu_custom_call.1} parent=0
    _
  %s9 = ssub.s32 1, %s7
  %s10 = scalar_select 0, %s9, %s7
  $region1: #{tpu_custom_call.1} parent=0
    #allocation2 [shape = 'u8[8192]{0}', space=vmem, size = 0x2000, scoped, tag = 'input window, operand 0']
    #allocation3 [shape = 's32[2]{0}', space=sflag, size = 0x8, scoped, tag = 'scoped memory for tpu_custom_call.1']
    #allocation4 [shape = 's32[2]{0}', space=sflag, size = 0x8, scoped, tag = 'scoped memory for tpu_custom_call.1']
    #allocation5 [shape = 'u8[786432]{0}', space=vmem, size = 0xc0000, scoped, tag = 'input window, operand 1, single buffered']
    #allocation6 [shape = 's32[1]{0}', space=sflag, size = 0x4, scoped, tag = 'scoped memory for tpu_custom_call.1']
    #allocation7 [shape = 'u8[6144]{0}', space=vmem, size = 0x1800, scoped, tag = 'input window, operand 2, single buffered']
    #allocation8 [shape = 'u8[262144]{0}', space=vmem, size = 0x40000, scoped, tag = 'input window, operand 3, single buffered']
    #allocation9 [shape = 's32[1]{0}', space=sflag, size = 0x4, scoped, tag = 'scoped memory for tpu_custom_call.1']
    #allocation10 [shape = 'u8[8192]{0}', space=vmem, size = 0x2000, scoped, tag = 'output window, operand 0']
    %11 = vsyncpa [#allocation3], 0
    %s12 = scalar_lea.sflag [#allocation3], 1
    %13 = vsyncpa %s12, 0
    %14 = vsyncpa [#allocation6], 0
    %15 = vsyncpa [#allocation9], 0
    %16 = vsyncpa [#allocation4], 0
    %s17 = scalar_lea.sflag [#allocation4], 1
    %18 = vsyncpa %s17, 0
    loop: start=0, step=1, limit=4
    $region2: #{tpu_custom_call.1} parent=1 // loop_pre_header
      _
    $region3: #{tpu_custom_call.1} parent=1 // loop_header
      %s20 = sphi 0, %s24
      %p21 = scmp.ge.s32.totalorder %s20, 4
      %s30 = sphi 0, %s32
      %s33 = sphi 0, %s30
      %s34 = sphi 0, %s33
      %s50 = sphi 0, %s34
      %s54 = sphi 0, %s54
      %s56 = sphi 0, %s54
      %s57 = sphi 0, %s56
      %s71 = sphi 0, %s57
      %s75 = sphi 0, %s75
      %s77 = sphi 0, %s75
      %s78 = sphi 0, %s77
      %s92 = sphi 0, %s78
      %s96 = sphi 0, %s96
      %s98 = sphi 0, %s96
      %s99 = sphi 0, %s98
      %s113 = sphi 0, %s99
      %s117 = sphi 0, %s117
      %s119 = sphi 0, %s117
      %s120 = sphi 0, %s119
      %s134 = sphi 0, %s120
      %s138 = sphi 0, %s138
      %s140 = sphi 0, %s138
      %s141 = sphi 0, %s140
      %s155 = sphi 0, %s141
      %s161 = sphi 0, %s163
      %s164 = sphi 0, %s161
      %s165 = sphi 0, %s164
      %s181 = sphi 0, %s165
    $region4: #{tpu_custom_call.1} parent=1 // loop_header_branch
      %23 = sbr.rel (%p21) target = $region8
    $region5: #{tpu_custom_call.1} parent=1 // loop_body
      %s25 = ssub.s32 %s20, 1
      %s26 = ssub.s32 %s20, 2
      %s27 = sadd.s32 %s20, 1
      %s28 = ssub.s32 %s20, %s27
      %p29 = scmp.eq.s32.totalorder %s28, 0
      %s31 = sadd.s32 %s30, 1
      %s32 = scalar_select %p29, %s30, %s31
      %p35 = pneg %p29
      %p36 = scmp.eq.s32.totalorder %s20, 1
      %p37 = por %p35, %p36
      %p38 = scmp.ne.s32.totalorder %s30, %s33
      %p39 = scmp.eq.s32.totalorder %s20, 0
      %p40 = por %p38, %p39
      %p41 = scmp.ne.s32.totalorder %s30, %s33
      %p42 = scmp.eq.s32.totalorder %s25, 1
      %p43 = por %p41, %p42
      %p44 = scmp.ne.s32.totalorder %s33, %s34
      %p45 = scmp.eq.s32.totalorder %s25, 0
      %p46 = por %p44, %p45
      %p47 = scmp.ne.s32.totalorder %s33, %s34
      %p48 = scmp.eq.s32.totalorder %s26, 1
      %p49 = por %p47, %p48
      %p51 = scmp.ne.s32.totalorder %s34, %s50
      %p52 = scmp.eq.s32.totalorder %s26, 0
      %p53 = por %p51, %p52
      %s55 = sadd.s32 %s54, 1
      %p58 = scmp.eq.s32.totalorder %s20, 1
      %p59 = scmp.ne.s32.totalorder %s54, %s56
      %p60 = scmp.eq.s32.totalorder %s20, 0
      %p61 = por %p59, %p60
      %p62 = scmp.ne.s32.totalorder %s54, %s56
      %p63 = scmp.eq.s32.totalorder %s25, 1
      %p64 = por %p62, %p63
      %p65 = scmp.ne.s32.totalorder %s56, %s57
      %p66 = scmp.eq.s32.totalorder %s25, 0
      %p67 = por %p65, %p66
      %p68 = scmp.ne.s32.totalorder %s56, %s57
      %p69 = scmp.eq.s32.totalorder %s26, 1
      %p70 = por %p68, %p69
      %p72 = scmp.ne.s32.totalorder %s57, %s71
      %p73 = scmp.eq.s32.totalorder %s26, 0
      %p74 = por %p72, %p73
      %s76 = sadd.s32 %s75, 1
      %p79 = scmp.eq.s32.totalorder %s20, 1
      %p80 = scmp.ne.s32.totalorder %s75, %s77
      %p81 = scmp.eq.s32.totalorder %s20, 0
      %p82 = por %p80, %p81
      %p83 = scmp.ne.s32.totalorder %s75, %s77
      %p84 = scmp.eq.s32.totalorder %s25, 1
      %p85 = por %p83, %p84
      %p86 = scmp.ne.s32.totalorder %s77, %s78
      %p87 = scmp.eq.s32.totalorder %s25, 0
      %p88 = por %p86, %p87
      %p89 = scmp.ne.s32.totalorder %s77, %s78
      %p90 = scmp.eq.s32.totalorder %s26, 1
      %p91 = por %p89, %p90
      %p93 = scmp.ne.s32.totalorder %s78, %s92
      %p94 = scmp.eq.s32.totalorder %s26, 0
      %p95 = por %p93, %p94
      %s97 = sadd.s32 %s96, 1
      %p100 = scmp.eq.s32.totalorder %s20, 1
      %p101 = scmp.ne.s32.totalorder %s96, %s98
      %p102 = scmp.eq.s32.totalorder %s20, 0
      %p103 = por %p101, %p102
      %p104 = scmp.ne.s32.totalorder %s96, %s98
      %p105 = scmp.eq.s32.totalorder %s25, 1
      %p106 = por %p104, %p105
      %p107 = scmp.ne.s32.totalorder %s98, %s99
      %p108 = scmp.eq.s32.totalorder %s25, 0
      %p109 = por %p107, %p108
      %p110 = scmp.ne.s32.totalorder %s98, %s99
      %p111 = scmp.eq.s32.totalorder %s26, 1
      %p112 = por %p110, %p111
      %p114 = scmp.ne.s32.totalorder %s99, %s113
      %p115 = scmp.eq.s32.totalorder %s26, 0
      %p116 = por %p114, %p115
      %s118 = sadd.s32 %s117, 1
      %p121 = scmp.eq.s32.totalorder %s20, 1
      %p122 = scmp.ne.s32.totalorder %s117, %s119
      %p123 = scmp.eq.s32.totalorder %s20, 0
      %p124 = por %p122, %p123
      %p125 = scmp.ne.s32.totalorder %s117, %s119
      %p126 = scmp.eq.s32.totalorder %s25, 1
      %p127 = por %p125, %p126
      %p128 = scmp.ne.s32.totalorder %s119, %s120
      %p129 = scmp.eq.s32.totalorder %s25, 0
      %p130 = por %p128, %p129
      %p131 = scmp.ne.s32.totalorder %s119, %s120
      %p132 = scmp.eq.s32.totalorder %s26, 1
      %p133 = por %p131, %p132
      %p135 = scmp.ne.s32.totalorder %s120, %s134
      %p136 = scmp.eq.s32.totalorder %s26, 0
      %p137 = por %p135, %p136
      %s139 = sadd.s32 %s138, 1
      %p142 = scmp.eq.s32.totalorder %s20, 1
      %p143 = scmp.ne.s32.totalorder %s138, %s140
      %p144 = scmp.eq.s32.totalorder %s20, 0
      %p145 = por %p143, %p144
      %p146 = scmp.ne.s32.totalorder %s138, %s140
      %p147 = scmp.eq.s32.totalorder %s25, 1
      %p148 = por %p146, %p147
      %p149 = scmp.ne.s32.totalorder %s140, %s141
      %p150 = scmp.eq.s32.totalorder %s25, 0
      %p151 = por %p149, %p150
      %p152 = scmp.ne.s32.totalorder %s140, %s141
      %p153 = scmp.eq.s32.totalorder %s26, 1
      %p154 = por %p152, %p153
      %p156 = scmp.ne.s32.totalorder %s141, %s155
      %p157 = scmp.eq.s32.totalorder %s26, 0
      %p158 = por %p156, %p157
      %s159 = ssub.s32 %s20, %s27
      %p160 = scmp.eq.s32.totalorder %s159, 0
      %s162 = sadd.s32 %s161, 1
      %s163 = scalar_select %p160, %s161, %s162
      %p166 = pneg %p160
      %p167 = scmp.eq.s32.totalorder %s20, 1
      %p168 = por %p166, %p167
      %p169 = scmp.ne.s32.totalorder %s161, %s164
      %p170 = scmp.eq.s32.totalorder %s20, 0
      %p171 = por %p169, %p170
      %p172 = scmp.ne.s32.totalorder %s161, %s164
      %p173 = scmp.eq.s32.totalorder %s25, 1
      %p174 = por %p172, %p173
      %p175 = scmp.ne.s32.totalorder %s164, %s165
      %p176 = scmp.eq.s32.totalorder %s25, 0
      %p177 = por %p175, %p176
      %p178 = scmp.ne.s32.totalorder %s164, %s165
      %p179 = scmp.eq.s32.totalorder %s26, 1
      %p180 = por %p178, %p179
      %p182 = scmp.ne.s32.totalorder %s165, %s181
      %p183 = scmp.eq.s32.totalorder %s26, 0
      %p184 = por %p182, %p183
      %p185 = scmp.le.s32.totalorder 1, %s20
      %p186 = scmp.lt.s32.totalorder %s20, 3
      %p187 = pnand %p185, %p186
      %p188 = pneg %p187
      // Predicated region
      $region9: #{tpu_custom_call.1} parent=5 // pred_check
        _
      $region10: #{tpu_custom_call.1} parent=5 // pred_check_branch
        %190 = sbr.rel (%p187) target = $region12
      $region11: #{tpu_custom_call.1} parent=5 // pred_region
        %s191 = ssub.s32 %s20, 1
        // Predicated region
        $region13: #{tpu_custom_call.1} parent=11 // pred_check
          %p192 = pneg %p67
        $region14: #{tpu_custom_call.1} parent=11 // pred_check_branch
          %194 = sbr.rel (%p192) target = $region16
        $region15: #{tpu_custom_call.1} parent=11 // pred_region
          %s196 = ssub.s32 24576, 24576
          %197 = vsyncadd [#allocation6], %s196
          %s198 = sshll.u32 [#allocation5], 4
          %s199 = int_to_ptr.vmem [resolvable:$true] %s198
          %204 = dma.hbm_to_vmem [thread:$0]  %s1, 24576, %s199, [#allocation6], 1536, 1536, 96
        $region16: #{tpu_custom_call.1} parent=11 // pred_fallthru
          _
        // Predicated region
        $region17: #{tpu_custom_call.1} parent=11 // pred_check
          %p205 = pneg %p88
        $region18: #{tpu_custom_call.1} parent=11 // pred_check_branch
          %207 = sbr.rel (%p205) target = $region20
        $region19: #{tpu_custom_call.1} parent=11 // pred_region
          %s209 = ssub.s32 192, 192
          %210 = vsyncadd [#allocation6], %s209
          %s212 = sshll.u32 [#allocation7], 4
          %s213 = int_to_ptr.vmem [resolvable:$true] %s212
          %215 = dma.hbm_to_vmem [thread:$0]  %s2, 192, %s213, [#allocation6]
        $region20: #{tpu_custom_call.1} parent=11 // pred_fallthru
          _
        // Predicated region
        $region21: #{tpu_custom_call.1} parent=11 // pred_check
          %p216 = pneg %p109
        $region22: #{tpu_custom_call.1} parent=11 // pred_check_branch
          %218 = sbr.rel (%p216) target = $region24
        $region23: #{tpu_custom_call.1} parent=11 // pred_region
          %s220 = ssub.s32 8192, 8192
          %221 = vsyncadd [#allocation9], %s220
          %s222 = sshll.u32 [#allocation8], 4
          %s223 = int_to_ptr.vmem [resolvable:$true] %s222
          %228 = dma.hbm_to_vmem [thread:$0]  %s3, 8192, %s223, [#allocation9], 128, 128, 8
        $region24: #{tpu_custom_call.1} parent=11 // pred_fallthru
          _
        // Predicated region
        $region25: #{tpu_custom_call.1} parent=11 // pred_check
          %p229 = pneg %p130
        $region26: #{tpu_custom_call.1} parent=11 // pred_check_branch
          %231 = sbr.rel (%p229) target = $region28
        $region27: #{tpu_custom_call.1} parent=11 // pred_region
          _
        $region28: #{tpu_custom_call.1} parent=11 // pred_fallthru
          _
        // Predicated region
        $region29: #{tpu_custom_call.1} parent=11 // pred_check
          %p232 = pneg %p151
        $region30: #{tpu_custom_call.1} parent=11 // pred_check_branch
          %234 = sbr.rel (%p232) target = $region32
        $region31: #{tpu_custom_call.1} parent=11 // pred_region
          _
        $region32: #{tpu_custom_call.1} parent=11 // pred_fallthru
          _
      $region12: #{tpu_custom_call.1} parent=5 // pred_fallthru
        _
      %p235 = scmp.lt.s32.totalorder %s20, 2
      // Predicated region
      $region33: #{tpu_custom_call.1} parent=5 // pred_check
        %p236 = pneg %p235
      $region34: #{tpu_custom_call.1} parent=5 // pred_check_branch
        %238 = sbr.rel (%p236) target = $region36
      $region35: #{tpu_custom_call.1} parent=5 // pred_region
        // Predicated region
        $region37: #{tpu_custom_call.1} parent=35 // pred_check
          %p239 = pneg %p40
        $region38: #{tpu_custom_call.1} parent=35 // pred_check_branch
          %241 = sbr.rel (%p239) target = $region40
        $region39: #{tpu_custom_call.1} parent=35 // pred_region
          %s242 = sand.u32 %s30, 1
          %s243 = scalar_lea.sflag [#allocation3], %s242
          %s244 = sand.u32 %s30, 1
          %s245 = smul.addr %s244, 8
          %s246 = scalar_lea.vmem [#allocation2], %s245
          %s248 = ssub.s32 128, 128
          %249 = vsyncadd %s243, %s248
          %s250 = smul.addr %s20, 128
          %s251 = scalar_lea.hbm %s0, %s250
          %s253 = sshll.u32 %s246, 4
          %s254 = int_to_ptr.vmem [resolvable:$true] %s253
          %256 = dma.hbm_to_vmem [thread:$0]  %s251, 128, %s254, %s243
        $region40: #{tpu_custom_call.1} parent=35 // pred_fallthru
          _
      $region36: #{tpu_custom_call.1} parent=5 // pred_fallthru
        _
      %p257 = scmp.le.s32.totalorder 1, %s20
      %p258 = scmp.lt.s32.totalorder %s20, 3
      %p259 = pnand %p257, %p258
      %p260 = pneg %p259
      // Predicated region
      $region41: #{tpu_custom_call.1} parent=5 // pred_check
        _
      $region42: #{tpu_custom_call.1} parent=5 // pred_check_branch
        %262 = sbr.rel (%p259) target = $region44
      $region43: #{tpu_custom_call.1} parent=5 // pred_region
        %s263 = ssub.s32 %s20, 1
        %s264 = sand.u32 %s33, 1
        %s265 = scalar_lea.sflag [#allocation3], %s264
        %s266 = sand.u32 %s33, 1
        %s267 = smul.addr %s266, 8
        %s268 = scalar_lea.vmem [#allocation2], %s267
        // Predicated region
        $region45: #{tpu_custom_call.1} parent=43 // pred_check
          %p269 = pneg %p46
        $region46: #{tpu_custom_call.1} parent=43 // pred_check_branch
          %271 = sbr.rel (%p269) target = $region48
        $region47: #{tpu_custom_call.1} parent=43 // pred_region
          %272 = dma.done %s265, 128
        $region48: #{tpu_custom_call.1} parent=43 // pred_fallthru
          _
        // Predicated region
        $region49: #{tpu_custom_call.1} parent=43 // pred_check
          %p273 = pneg %p67
        $region50: #{tpu_custom_call.1} parent=43 // pred_check_branch
          %275 = sbr.rel (%p273) target = $region52
        $region51: #{tpu_custom_call.1} parent=43 // pred_region
          %276 = dma.done [#allocation6], 24576
        $region52: #{tpu_custom_call.1} parent=43 // pred_fallthru
          _
        // Predicated region
        $region53: #{tpu_custom_call.1} parent=43 // pred_check
          %p277 = pneg %p88
        $region54: #{tpu_custom_call.1} parent=43 // pred_check_branch
          %279 = sbr.rel (%p277) target = $region56
        $region55: #{tpu_custom_call.1} parent=43 // pred_region
          %280 = dma.done [#allocation6], 192
        $region56: #{tpu_custom_call.1} parent=43 // pred_fallthru
          _
        // Predicated region
        $region57: #{tpu_custom_call.1} parent=43 // pred_check
          %p281 = pneg %p109
        $region58: #{tpu_custom_call.1} parent=43 // pred_check_branch
          %283 = sbr.rel (%p281) target = $region60
        $region59: #{tpu_custom_call.1} parent=43 // pred_region
          %284 = dma.done [#allocation9], 8192
        $region60: #{tpu_custom_call.1} parent=43 // pred_fallthru
          _
        %s285 = sand.u32 %s33, 1
        %s286 = scalar_lea.sflag [#allocation3], %s285
        %s287 = sand.u32 %s33, 1
        %s288 = smul.addr %s287, 8
        %s289 = scalar_lea.vmem [#allocation2], %s288
        %p290 = pneg %p46
        %p291 = pneg %p43
        %p292 = pneg %p67
        %p293 = pneg %p64
        %p294 = pneg %p88
        %p295 = pneg %p85
        %p296 = pneg %p109
        %p297 = pneg %p106
        %p298 = pneg %p130
        %p299 = pneg %p127
        %p300 = pneg %p151
        %p301 = pneg %p148
        %p302 = pneg %p177
        %p303 = pneg %p174
        %s304 = sand.u32 %s164, 1
        %s305 = scalar_lea.sflag [#allocation4], %s304
        %s306 = sand.u32 %s164, 1
        %s307 = smul.addr %s306, 8
        %s308 = scalar_lea.vmem [#allocation10], %s307
        %v309 = vld [vmem:[%s268] sm:$0xff]
        %v310 = vld [vmem:[#allocation5] sm:$0xff]
        %v311 = vld [vmem:[#allocation5 + $0x8] sm:$0xff]
        %v312 = vld [vmem:[#allocation5 + $0x10] sm:$0xff]
        %v313 = vld [vmem:[#allocation5 + $0x18] sm:$0xff]
        %v314 = vld [vmem:[#allocation5 + $0x20] sm:$0xff]
        %v315 = vld [vmem:[#allocation5 + $0x28] sm:$0xff]
        %v316 = vld [vmem:[#allocation5 + $0x30] sm:$0xff]
        %v317 = vld [vmem:[#allocation5 + $0x38] sm:$0xff]
        %v318 = vld [vmem:[#allocation5 + $0x40] sm:$0xff]
        %v319 = vld [vmem:[#allocation5 + $0x48] sm:$0xff]
        %v320 = vld [vmem:[#allocation5 + $0x50] sm:$0xff]
        %v321 = vld [vmem:[#allocation5 + $0x58] sm:$0xff]
        %v322 = vld [vmem:[#allocation5 + $0x60] sm:$0xff]
        %v323 = vld [vmem:[#allocation5 + $0x68] sm:$0xff]
        %v324 = vld [vmem:[#allocation5 + $0x70] sm:$0xff]
        %v325 = vld [vmem:[#allocation5 + $0x78] sm:$0xff]
        %v326 = vld [vmem:[#allocation5 + $0x80] sm:$0xff]
        %v327 = vld [vmem:[#allocation5 + $0x88] sm:$0xff]
        %v328 = vld [vmem:[#allocation5 + $0x90] sm:$0xff]
        %v329 = vld [vmem:[#allocation5 + $0x98] sm:$0xff]
        %v330 = vld [vmem:[#allocation5 + $0xa0] sm:$0xff]
        %v331 = vld [vmem:[#allocation5 + $0xa8] sm:$0xff]
        %v332 = vld [vmem:[#allocation5 + $0xb0] sm:$0xff]
        %v333 = vld [vmem:[#allocation5 + $0xb8] sm:$0xff]
        %v334 = vld [vmem:[#allocation5 + $0xc0] sm:$0xff]
        %v335 = vld [vmem:[#allocation5 + $0xc8] sm:$0xff]
        %v336 = vld [vmem:[#allocation5 + $0xd0] sm:$0xff]
        %v337 = vld [vmem:[#allocation5 + $0xd8] sm:$0xff]
        %v338 = vld [vmem:[#allocation5 + $0xe0] sm:$0xff]
        %v339 = vld [vmem:[#allocation5 + $0xe8] sm:$0xff]
        %v340 = vld [vmem:[#allocation5 + $0xf0] sm:$0xff]
        %v341 = vld [vmem:[#allocation5 + $0xf8] sm:$0xff]
        %v342 = vld [vmem:[#allocation5 + $0x100] sm:$0xff]
        %v343 = vld [vmem:[#allocation5 + $0x108] sm:$0xff]
        %v344 = vld [vmem:[#allocation5 + $0x110] sm:$0xff]
        %v345 = vld [vmem:[#allocation5 + $0x118] sm:$0xff]
        %v346 = vld [vmem:[#allocation5 + $0x120] sm:$0xff]
        %v347 = vld [vmem:[#allocation5 + $0x128] sm:$0xff]
        %v348 = vld [vmem:[#allocation5 + $0x130] sm:$0xff]
        %v349 = vld [vmem:[#allocation5 + $0x138] sm:$0xff]
        %v350 = vld [vmem:[#allocation5 + $0x140] sm:$0xff]
        %v351 = vld [vmem:[#allocation5 + $0x148] sm:$0xff]
        %v352 = vld [vmem:[#allocation5 + $0x150] sm:$0xff]
        %v353 = vld [vmem:[#allocation5 + $0x158] sm:$0xff]
        %v354 = vld [vmem:[#allocation5 + $0x160] sm:$0xff]
        %v355 = vld [vmem:[#allocation5 + $0x168] sm:$0xff]
        %v356 = vld [vmem:[#allocation5 + $0x170] sm:$0xff]
        %v357 = vld [vmem:[#allocation5 + $0x178] sm:$0xff]
        %v358 = vld [vmem:[#allocation5 + $0x180] sm:$0xff]
        %v359 = vld [vmem:[#allocation5 + $0x188] sm:$0xff]
        %v360 = vld [vmem:[#allocation5 + $0x190] sm:$0xff]
        %v361 = vld [vmem:[#allocation5 + $0x198] sm:$0xff]
        %v362 = vld [vmem:[#allocation5 + $0x1a0] sm:$0xff]
        %v363 = vld [vmem:[#allocation5 + $0x1a8] sm:$0xff]
        %v364 = vld [vmem:[#allocation5 + $0x1b0] sm:$0xff]
        %v365 = vld [vmem:[#allocation5 + $0x1b8] sm:$0xff]
        %v366 = vld [vmem:[#allocation5 + $0x1c0] sm:$0xff]
        %v367 = vld [vmem:[#allocation5 + $0x1c8] sm:$0xff]
        %v368 = vld [vmem:[#allocation5 + $0x1d0] sm:$0xff]
        %v369 = vld [vmem:[#allocation5 + $0x1d8] sm:$0xff]
        %v370 = vld [vmem:[#allocation5 + $0x1e0] sm:$0xff]
        %v371 = vld [vmem:[#allocation5 + $0x1e8] sm:$0xff]
        %v372 = vld [vmem:[#allocation5 + $0x1f0] sm:$0xff]
        %v373 = vld [vmem:[#allocation5 + $0x1f8] sm:$0xff]
        %v374 = vld [vmem:[#allocation5 + $0x200] sm:$0xff]
        %v375 = vld [vmem:[#allocation5 + $0x208] sm:$0xff]
        %v376 = vld [vmem:[#allocation5 + $0x210] sm:$0xff]
        %v377 = vld [vmem:[#allocation5 + $0x218] sm:$0xff]
        %v378 = vld [vmem:[#allocation5 + $0x220] sm:$0xff]
        %v379 = vld [vmem:[#allocation5 + $0x228] sm:$0xff]
        %v380 = vld [vmem:[#allocation5 + $0x230] sm:$0xff]
        %v381 = vld [vmem:[#allocation5 + $0x238] sm:$0xff]
        %v382 = vld [vmem:[#allocation5 + $0x240] sm:$0xff]
        %v383 = vld [vmem:[#allocation5 + $0x248] sm:$0xff]
        %v384 = vld [vmem:[#allocation5 + $0x250] sm:$0xff]
        %v385 = vld [vmem:[#allocation5 + $0x258] sm:$0xff]
        %v386 = vld [vmem:[#allocation5 + $0x260] sm:$0xff]
        %v387 = vld [vmem:[#allocation5 + $0x268] sm:$0xff]
        %v388 = vld [vmem:[#allocation5 + $0x270] sm:$0xff]
        %v389 = vld [vmem:[#allocation5 + $0x278] sm:$0xff]
        %v390 = vld [vmem:[#allocation5 + $0x280] sm:$0xff]
        %v391 = vld [vmem:[#allocation5 + $0x288] sm:$0xff]
        %v392 = vld [vmem:[#allocation5 + $0x290] sm:$0xff]
        %v393 = vld [vmem:[#allocation5 + $0x298] sm:$0xff]
        %v394 = vld [vmem:[#allocation5 + $0x2a0] sm:$0xff]
        %v395 = vld [vmem:[#allocation5 + $0x2a8] sm:$0xff]
        %v396 = vld [vmem:[#allocation5 + $0x2b0] sm:$0xff]
        %v397 = vld [vmem:[#allocation5 + $0x2b8] sm:$0xff]
        %v398 = vld [vmem:[#allocation5 + $0x2c0] sm:$0xff]
        %v399 = vld [vmem:[#allocation5 + $0x2c8] sm:$0xff]
        %v400 = vld [vmem:[#allocation5 + $0x2d0] sm:$0xff]
        %v401 = vld [vmem:[#allocation5 + $0x2d8] sm:$0xff]
        %v402 = vld [vmem:[#allocation5 + $0x2e0] sm:$0xff]
        %v403 = vld [vmem:[#allocation5 + $0x2e8] sm:$0xff]
        %v404 = vld [vmem:[#allocation5 + $0x2f0] sm:$0xff]
        %v405 = vld [vmem:[#allocation5 + $0x2f8] sm:$0xff]
        %v406 = vld [vmem:[#allocation5 + $0x300] sm:$0xff]
        %v407 = vld [vmem:[#allocation5 + $0x308] sm:$0xff]
        %v408 = vld [vmem:[#allocation5 + $0x310] sm:$0xff]
        %v409 = vld [vmem:[#allocation5 + $0x318] sm:$0xff]
        %v410 = vld [vmem:[#allocation5 + $0x320] sm:$0xff]
        %v411 = vld [vmem:[#allocation5 + $0x328] sm:$0xff]
        %v412 = vld [vmem:[#allocation5 + $0x330] sm:$0xff]
        %v413 = vld [vmem:[#allocation5 + $0x338] sm:$0xff]
        %v414 = vld [vmem:[#allocation5 + $0x340] sm:$0xff]
        %v415 = vld [vmem:[#allocation5 + $0x348] sm:$0xff]
        %v416 = vld [vmem:[#allocation5 + $0x350] sm:$0xff]
        %v417 = vld [vmem:[#allocation5 + $0x358] sm:$0xff]
        %v418 = vld [vmem:[#allocation5 + $0x360] sm:$0xff]
        %v419 = vld [vmem:[#allocation5 + $0x368] sm:$0xff]
        %v420 = vld [vmem:[#allocation5 + $0x370] sm:$0xff]
        %v421 = vld [vmem:[#allocation5 + $0x378] sm:$0xff]
        %v422 = vld [vmem:[#allocation5 + $0x380] sm:$0xff]
        %v423 = vld [vmem:[#allocation5 + $0x388] sm:$0xff]
        %v424 = vld [vmem:[#allocation5 + $0x390] sm:$0xff]
        %v425 = vld [vmem:[#allocation5 + $0x398] sm:$0xff]
        %v426 = vld [vmem:[#allocation5 + $0x3a0] sm:$0xff]
        %v427 = vld [vmem:[#allocation5 + $0x3a8] sm:$0xff]
        %v428 = vld [vmem:[#allocation5 + $0x3b0] sm:$0xff]
        %v429 = vld [vmem:[#allocation5 + $0x3b8] sm:$0xff]
        %v430 = vld [vmem:[#allocation5 + $0x3c0] sm:$0xff]
        %v431 = vld [vmem:[#allocation5 + $0x3c8] sm:$0xff]
        %v432 = vld [vmem:[#allocation5 + $0x3d0] sm:$0xff]
        %v433 = vld [vmem:[#allocation5 + $0x3d8] sm:$0xff]
        %v434 = vld [vmem:[#allocation5 + $0x3e0] sm:$0xff]
        %v435 = vld [vmem:[#allocation5 + $0x3e8] sm:$0xff]
        %v436 = vld [vmem:[#allocation5 + $0x3f0] sm:$0xff]
        %v437 = vld [vmem:[#allocation5 + $0x3f8] sm:$0xff]
        %v438 = vld [vmem:[#allocation5 + $0x400] sm:$0xff]
        %v439 = vld [vmem:[#allocation5 + $0x408] sm:$0xff]
        %v440 = vld [vmem:[#allocation5 + $0x410] sm:$0xff]
        %v441 = vld [vmem:[#allocation5 + $0x418] sm:$0xff]
        %v442 = vld [vmem:[#allocation5 + $0x420] sm:$0xff]
        %v443 = vld [vmem:[#allocation5 + $0x428] sm:$0xff]
        %v444 = vld [vmem:[#allocation5 + $0x430] sm:$0xff]
        %v445 = vld [vmem:[#allocation5 + $0x438] sm:$0xff]
        %v446 = vld [vmem:[#allocation5 + $0x440] sm:$0xff]
        %v447 = vld [vmem:[#allocation5 + $0x448] sm:$0xff]
        %v448 = vld [vmem:[#allocation5 + $0x450] sm:$0xff]
        %v449 = vld [vmem:[#allocation5 + $0x458] sm:$0xff]
        %v450 = vld [vmem:[#allocation5 + $0x460] sm:$0xff]
        %v451 = vld [vmem:[#allocation5 + $0x468] sm:$0xff]
        %v452 = vld [vmem:[#allocation5 + $0x470] sm:$0xff]
        %v453 = vld [vmem:[#allocation5 + $0x478] sm:$0xff]
        %v454 = vld [vmem:[#allocation5 + $0x480] sm:$0xff]
        %v455 = vld [vmem:[#allocation5 + $0x488] sm:$0xff]
        %v456 = vld [vmem:[#allocation5 + $0x490] sm:$0xff]
        %v457 = vld [vmem:[#allocation5 + $0x498] sm:$0xff]
        %v458 = vld [vmem:[#allocation5 + $0x4a0] sm:$0xff]
        %v459 = vld [vmem:[#allocation5 + $0x4a8] sm:$0xff]
        %v460 = vld [vmem:[#allocation5 + $0x4b0] sm:$0xff]
        %v461 = vld [vmem:[#allocation5 + $0x4b8] sm:$0xff]
        %v462 = vld [vmem:[#allocation5 + $0x4c0] sm:$0xff]
        %v463 = vld [vmem:[#allocation5 + $0x4c8] sm:$0xff]
        %v464 = vld [vmem:[#allocation5 + $0x4d0] sm:$0xff]
        %v465 = vld [vmem:[#allocation5 + $0x4d8] sm:$0xff]
        %v466 = vld [vmem:[#allocation5 + $0x4e0] sm:$0xff]
        %v467 = vld [vmem:[#allocation5 + $0x4e8] sm:$0xff]
        %v468 = vld [vmem:[#allocation5 + $0x4f0] sm:$0xff]
        %v469 = vld [vmem:[#allocation5 + $0x4f8] sm:$0xff]
        %v470 = vld [vmem:[#allocation5 + $0x500] sm:$0xff]
        %v471 = vld [vmem:[#allocation5 + $0x508] sm:$0xff]
        %v472 = vld [vmem:[#allocation5 + $0x510] sm:$0xff]
        %v473 = vld [vmem:[#allocation5 + $0x518] sm:$0xff]
        %v474 = vld [vmem:[#allocation5 + $0x520] sm:$0xff]
        %v475 = vld [vmem:[#allocation5 + $0x528] sm:$0xff]
        %v476 = vld [vmem:[#allocation5 + $0x530] sm:$0xff]
        %v477 = vld [vmem:[#allocation5 + $0x538] sm:$0xff]
        %v478 = vld [vmem:[#allocation5 + $0x540] sm:$0xff]
        %v479 = vld [vmem:[#allocation5 + $0x548] sm:$0xff]
        %v480 = vld [vmem:[#allocation5 + $0x550] sm:$0xff]
        %v481 = vld [vmem:[#allocation5 + $0x558] sm:$0xff]
        %v482 = vld [vmem:[#allocation5 + $0x560] sm:$0xff]
        %v483 = vld [vmem:[#allocation5 + $0x568] sm:$0xff]
        %v484 = vld [vmem:[#allocation5 + $0x570] sm:$0xff]
        %v485 = vld [vmem:[#allocation5 + $0x578] sm:$0xff]
        %v486 = vld [vmem:[#allocation5 + $0x580] sm:$0xff]
        %v487 = vld [vmem:[#allocation5 + $0x588] sm:$0xff]
        %v488 = vld [vmem:[#allocation5 + $0x590] sm:$0xff]
        %v489 = vld [vmem:[#allocation5 + $0x598] sm:$0xff]
        %v490 = vld [vmem:[#allocation5 + $0x5a0] sm:$0xff]
        %v491 = vld [vmem:[#allocation5 + $0x5a8] sm:$0xff]
        %v492 = vld [vmem:[#allocation5 + $0x5b0] sm:$0xff]
        %v493 = vld [vmem:[#allocation5 + $0x5b8] sm:$0xff]
        %v494 = vld [vmem:[#allocation5 + $0x5c0] sm:$0xff]
        %v495 = vld [vmem:[#allocation5 + $0x5c8] sm:$0xff]
        %v496 = vld [vmem:[#allocation5 + $0x5d0] sm:$0xff]
        %v497 = vld [vmem:[#allocation5 + $0x5d8] sm:$0xff]
        %v498 = vld [vmem:[#allocation5 + $0x5e0] sm:$0xff]
        %v499 = vld [vmem:[#allocation5 + $0x5e8] sm:$0xff]
        %v500 = vld [vmem:[#allocation5 + $0x5f0] sm:$0xff]
        %v501 = vld [vmem:[#allocation5 + $0x5f8] sm:$0xff]
        %v502 = vld [vmem:[#allocation7] sm:$0xff]
        %v503 = vld [vmem:[#allocation7 + $0x8] sm:$0xf]
        %v506 = vlaneseq
        %v507 = vshrl.u32 %v506, 7
        %v508 = vsub.s32 0, %v507
        %v509 = vrot.slane %v502, %v508
        %v510 = vlaneseq
        %v511 = vshrl.u32 %v510, 7
        %v512 = vsub.s32 1, %v511
        %v513 = vrot.slane %v502, %v512
        %v514 = vlaneseq
        %v515 = vshrl.u32 %v514, 7
        %v516 = vsub.s32 2, %v515
        %v517 = vrot.slane %v502, %v516
        %v518 = vlaneseq
        %v519 = vshrl.u32 %v518, 7
        %v520 = vsub.s32 3, %v519
        %v521 = vrot.slane %v502, %v520
        %v522 = vlaneseq
        %v523 = vshrl.u32 %v522, 7
        %v524 = vsub.s32 4, %v523
        %v525 = vrot.slane %v502, %v524
        %v526 = vlaneseq
        %v527 = vshrl.u32 %v526, 7
        %v528 = vsub.s32 5, %v527
        %v529 = vrot.slane %v502, %v528
        %v530 = vlaneseq
        %v531 = vshrl.u32 %v530, 7
        %v532 = vsub.s32 6, %v531
        %v533 = vrot.slane %v502, %v532
        %v534 = vlaneseq
        %v535 = vshrl.u32 %v534, 7
        %v536 = vsub.s32 7, %v535
        %v537 = vrot.slane %v502, %v536
        %v538 = vlaneseq
        %v539 = vshrl.u32 %v538, 7
        %v540 = vsub.s32 0, %v539
        %v541 = vrot.slane %v503, %v540
        %v542 = vlaneseq
        %v543 = vshrl.u32 %v542, 7
        %v544 = vsub.s32 1, %v543
        %v545 = vrot.slane %v503, %v544
        %v546 = vlaneseq
        %v547 = vshrl.u32 %v546, 7
        %v548 = vsub.s32 2, %v547
        %v549 = vrot.slane %v503, %v548
        %v550 = vlaneseq
        %v551 = vshrl.u32 %v550, 7
        %v552 = vsub.s32 3, %v551
        %v553 = vrot.slane %v503, %v552
        %566 = vmatprep.subr.mxu0 %v311
        %567 = vmatpush1.msra.mxu0 %v310
        %568 = vmatprep.subr.mxu0 %v323
        %569 = vmatpush1.msra.mxu0 %v322
        %570 = vmatprep.subr.mxu0 %v335
        %571 = vmatpush1.msra.mxu0 %v334
        %572 = vmatprep.subr.mxu0 %v347
        %573 = vmatpush1.msra.mxu0 %v346
        %574 = vmatprep.subr.mxu0 %v359
        %575 = vmatpush1.msra.mxu0 %v358
        %576 = vmatprep.subr.mxu0 %v371
        %577 = vmatpush1.msra.mxu0 %v370
        %578 = vmatprep.subr.mxu0 %v383
        %579 = vmatpush1.msra.mxu0 %v382
        %580 = vmatprep.subr.mxu0 %v395
        %581 = vmatpush1.msra.mxu0 %v394
        %582 = vmatprep.subr.mxu0 %v407
        %583 = vmatpush1.msra.mxu0 %v406
        %584 = vmatprep.subr.mxu0 %v419
        %585 = vmatpush1.msra.mxu0 %v418
        %586 = vmatprep.subr.mxu0 %v431
        %587 = vmatpush1.msra.mxu0 %v430
        %588 = vmatprep.subr.mxu0 %v443
        %589 = vmatpush1.msra.mxu0 %v442
        %590 = vmatprep.subr.mxu0 %v455
        %591 = vmatpush1.msra.mxu0 %v454
        %592 = vmatprep.subr.mxu0 %v467
        %593 = vmatpush1.msra.mxu0 %v466
        %594 = vmatprep.subr.mxu0 %v479
        %595 = vmatpush1.msra.mxu0 %v478
        %596 = vmatprep.subr.mxu0 %v491
        %597 = vmatpush1.msra.mxu0 %v490
        %598 = vmatprep.subr.mxu0 0.0
        %599 = vmatpush1.msra.mxu0 0.0
        %600 = vmatprep.subr.mxu0 0.0
        %601 = vmatpush1.msra.mxu0 0.0
        %602 = vmatprep.subr.mxu0 0.0
        %603 = vmatpush1.msra.mxu0 0.0
        %604 = vmatprep.subr.mxu0 0.0
        %605 = vmatpush1.msra.mxu0 0.0
        %606 = vmatprep.subr.mxu0 0.0
        %607 = vmatpush1.msra.mxu0 0.0
        %608 = vmatprep.subr.mxu0 0.0
        %609 = vmatpush1.msra.mxu0 0.0
        %610 = vmatprep.subr.mxu0 0.0
        %611 = vmatpush1.msra.mxu0 0.0
        %612 = vmatprep.subr.mxu0 0.0
        %613 = vmatpush1.msra.mxu0 0.0
        %614 = vmatprep.subr.mxu0 0.0
        %615 = vmatpush1.msra.mxu0 0.0
        %616 = vmatprep.subr.mxu0 0.0
        %617 = vmatpush1.msra.mxu0 0.0
        %618 = vmatprep.subr.mxu0 0.0
        %619 = vmatpush1.msra.mxu0 0.0
        %620 = vmatprep.subr.mxu0 0.0
        %621 = vmatpush1.msra.mxu0 0.0
        %622 = vmatprep.subr.mxu0 0.0
        %623 = vmatpush1.msra.mxu0 0.0
        %624 = vmatprep.subr.mxu0 0.0
        %625 = vmatpush1.msra.mxu0 0.0
        %626 = vmatprep.subr.mxu0 0.0
        %627 = vmatpush1.msra.mxu0 0.0
        %628 = vmatprep.subr.mxu0 0.0
        %629 = vmatpush1.msra.mxu0 0.0
        %630 = vmatprep.mubr.f32.mxu0 0.0
        %631 = vmatmul.mubr.f32.gmra.mrb[0].mxu0 %v309
        %v632 = vpop.f32.mrb[0].mxu0
        %v633 = vadd.f32 %v509, %v632
        %v634 = vpop.f32.mrb[0].mxu0
        %v635 = vadd.f32 %v513, %v634
        %636 = vdwg.mxu0
        %637 = vmatprep.subr.mxu0 %v313
        %638 = vmatpush1.msra.mxu0 %v312
        %639 = vmatprep.subr.mxu0 %v325
        %640 = vmatpush1.msra.mxu0 %v324
        %641 = vmatprep.subr.mxu0 %v337
        %642 = vmatpush1.msra.mxu0 %v336
        %643 = vmatprep.subr.mxu0 %v349
        %644 = vmatpush1.msra.mxu0 %v348
        %645 = vmatprep.subr.mxu0 %v361
        %646 = vmatpush1.msra.mxu0 %v360
        %647 = vmatprep.subr.mxu0 %v373
        %648 = vmatpush1.msra.mxu0 %v372
        %649 = vmatprep.subr.mxu0 %v385
        %650 = vmatpush1.msra.mxu0 %v384
        %651 = vmatprep.subr.mxu0 %v397
        %652 = vmatpush1.msra.mxu0 %v396
        %653 = vmatprep.subr.mxu0 %v409
        %654 = vmatpush1.msra.mxu0 %v408
        %655 = vmatprep.subr.mxu0 %v421
        %656 = vmatpush1.msra.mxu0 %v420
        %657 = vmatprep.subr.mxu0 %v433
        %658 = vmatpush1.msra.mxu0 %v432
        %659 = vmatprep.subr.mxu0 %v445
        %660 = vmatpush1.msra.mxu0 %v444
        %661 = vmatprep.subr.mxu0 %v457
        %662 = vmatpush1.msra.mxu0 %v456
        %663 = vmatprep.subr.mxu0 %v469
        %664 = vmatpush1.msra.mxu0 %v468
        %665 = vmatprep.subr.mxu0 %v481
        %666 = vmatpush1.msra.mxu0 %v480
        %667 = vmatprep.subr.mxu0 %v493
        %668 = vmatpush1.msra.mxu0 %v492
        %669 = vmatprep.subr.mxu0 0.0
        %670 = vmatpush1.msra.mxu0 0.0
        %671 = vmatprep.subr.mxu0 0.0
        %672 = vmatpush1.msra.mxu0 0.0
        %673 = vmatprep.subr.mxu0 0.0
        %674 = vmatpush1.msra.mxu0 0.0
        %675 = vmatprep.subr.mxu0 0.0
        %676 = vmatpush1.msra.mxu0 0.0
        %677 = vmatprep.subr.mxu0 0.0
        %678 = vmatpush1.msra.mxu0 0.0
        %679 = vmatprep.subr.mxu0 0.0
        %680 = vmatpush1.msra.mxu0 0.0
        %681 = vmatprep.subr.mxu0 0.0
        %682 = vmatpush1.msra.mxu0 0.0
        %683 = vmatprep.subr.mxu0 0.0
        %684 = vmatpush1.msra.mxu0 0.0
        %685 = vmatprep.subr.mxu0 0.0
        %686 = vmatpush1.msra.mxu0 0.0
        %687 = vmatprep.subr.mxu0 0.0
        %688 = vmatpush1.msra.mxu0 0.0
        %689 = vmatprep.subr.mxu0 0.0
        %690 = vmatpush1.msra.mxu0 0.0
        %691 = vmatprep.subr.mxu0 0.0
        %692 = vmatpush1.msra.mxu0 0.0
        %693 = vmatprep.subr.mxu0 0.0
        %694 = vmatpush1.msra.mxu0 0.0
        %695 = vmatprep.subr.mxu0 0.0
        %696 = vmatpush1.msra.mxu0 0.0
        %697 = vmatprep.subr.mxu0 0.0
        %698 = vmatpush1.msra.mxu0 0.0
        %699 = vmatprep.subr.mxu0 0.0
        %700 = vmatpush1.msra.mxu0 0.0
        %701 = vmatprep.mubr.f32.mxu0 0.0
        %702 = vmatmul.mubr.f32.gmra.mrb[0].mxu0 %v309
        %v703 = vpop.f32.mrb[0].mxu0
        %v704 = vadd.f32 %v517, %v703
        %v705 = vpop.f32.mrb[0].mxu0
        %v706 = vadd.f32 %v521, %v705
        %707 = vdwg.mxu0
        %708 = vmatprep.subr.mxu0 %v315
        %709 = vmatpush1.msra.mxu0 %v314
        %710 = vmatprep.subr.mxu0 %v327
        %711 = vmatpush1.msra.mxu0 %v326
        %712 = vmatprep.subr.mxu0 %v339
        %713 = vmatpush1.msra.mxu0 %v338
        %714 = vmatprep.subr.mxu0 %v351
        %715 = vmatpush1.msra.mxu0 %v350
        %716 = vmatprep.subr.mxu0 %v363
        %717 = vmatpush1.msra.mxu0 %v362
        %718 = vmatprep.subr.mxu0 %v375
        %719 = vmatpush1.msra.mxu0 %v374
        %720 = vmatprep.subr.mxu0 %v387
        %721 = vmatpush1.msra.mxu0 %v386
        %722 = vmatprep.subr.mxu0 %v399
        %723 = vmatpush1.msra.mxu0 %v398
        %724 = vmatprep.subr.mxu0 %v411
        %725 = vmatpush1.msra.mxu0 %v410
        %726 = vmatprep.subr.mxu0 %v423
        %727 = vmatpush1.msra.mxu0 %v422
        %728 = vmatprep.subr.mxu0 %v435
        %729 = vmatpush1.msra.mxu0 %v434
        %730 = vmatprep.subr.mxu0 %v447
        %731 = vmatpush1.msra.mxu0 %v446
        %732 = vmatprep.subr.mxu0 %v459
        %733 = vmatpush1.msra.mxu0 %v458
        %734 = vmatprep.subr.mxu0 %v471
        %735 = vmatpush1.msra.mxu0 %v470
        %736 = vmatprep.subr.mxu0 %v483
        %737 = vmatpush1.msra.mxu0 %v482
        %738 = vmatprep.subr.mxu0 %v495
        %739 = vmatpush1.msra.mxu0 %v494
        %740 = vmatprep.subr.mxu0 0.0
        %741 = vmatpush1.msra.mxu0 0.0
        %742 = vmatprep.subr.mxu0 0.0
        %743 = vmatpush1.msra.mxu0 0.0
        %744 = vmatprep.subr.mxu0 0.0
        %745 = vmatpush1.msra.mxu0 0.0
        %746 = vmatprep.subr.mxu0 0.0
        %747 = vmatpush1.msra.mxu0 0.0
        %748 = vmatprep.subr.mxu0 0.0
        %749 = vmatpush1.msra.mxu0 0.0
        %750 = vmatprep.subr.mxu0 0.0
        %751 = vmatpush1.msra.mxu0 0.0
        %752 = vmatprep.subr.mxu0 0.0
        %753 = vmatpush1.msra.mxu0 0.0
        %754 = vmatprep.subr.mxu0 0.0
        %755 = vmatpush1.msra.mxu0 0.0
        %756 = vmatprep.subr.mxu0 0.0
        %757 = vmatpush1.msra.mxu0 0.0
        %758 = vmatprep.subr.mxu0 0.0
        %759 = vmatpush1.msra.mxu0 0.0
        %760 = vmatprep.subr.mxu0 0.0
        %761 = vmatpush1.msra.mxu0 0.0
        %762 = vmatprep.subr.mxu0 0.0
        %763 = vmatpush1.msra.mxu0 0.0
        %764 = vmatprep.subr.mxu0 0.0
        %765 = vmatpush1.msra.mxu0 0.0
        %766 = vmatprep.subr.mxu0 0.0
        %767 = vmatpush1.msra.mxu0 0.0
        %768 = vmatprep.subr.mxu0 0.0
        %769 = vmatpush1.msra.mxu0 0.0
        %770 = vmatprep.subr.mxu0 0.0
        %771 = vmatpush1.msra.mxu0 0.0
        %772 = vmatprep.mubr.f32.mxu0 0.0
        %773 = vmatmul.mubr.f32.gmra.mrb[0].mxu0 %v309
        %v774 = vpop.f32.mrb[0].mxu0
        %v775 = vadd.f32 %v525, %v774
        %v776 = vpop.f32.mrb[0].mxu0
        %v777 = vadd.f32 %v529, %v776
        %778 = vdwg.mxu0
        %779 = vmatprep.subr.mxu0 %v317
        %780 = vmatpush1.msra.mxu0 %v316
        %781 = vmatprep.subr.mxu0 %v329
        %782 = vmatpush1.msra.mxu0 %v328
        %783 = vmatprep.subr.mxu0 %v341
        %784 = vmatpush1.msra.mxu0 %v340
        %785 = vmatprep.subr.mxu0 %v353
        %786 = vmatpush1.msra.mxu0 %v352
        %787 = vmatprep.subr.mxu0 %v365
        %788 = vmatpush1.msra.mxu0 %v364
        %789 = vmatprep.subr.mxu0 %v377
        %790 = vmatpush1.msra.mxu0 %v376
        %791 = vmatprep.subr.mxu0 %v389
        %792 = vmatpush1.msra.mxu0 %v388
        %793 = vmatprep.subr.mxu0 %v401
        %794 = vmatpush1.msra.mxu0 %v400
        %795 = vmatprep.subr.mxu0 %v413
        %796 = vmatpush1.msra.mxu0 %v412
        %797 = vmatprep.subr.mxu0 %v425
        %798 = vmatpush1.msra.mxu0 %v424
        %799 = vmatprep.subr.mxu0 %v437
        %800 = vmatpush1.msra.mxu0 %v436
        %801 = vmatprep.subr.mxu0 %v449
        %802 = vmatpush1.msra.mxu0 %v448
        %803 = vmatprep.subr.mxu0 %v461
        %804 = vmatpush1.msra.mxu0 %v460
        %805 = vmatprep.subr.mxu0 %v473
        %806 = vmatpush1.msra.mxu0 %v472
        %807 = vmatprep.subr.mxu0 %v485
        %808 = vmatpush1.msra.mxu0 %v484
        %809 = vmatprep.subr.mxu0 %v497
        %810 = vmatpush1.msra.mxu0 %v496
        %811 = vmatprep.subr.mxu0 0.0
        %812 = vmatpush1.msra.mxu0 0.0
        %813 = vmatprep.subr.mxu0 0.0
        %814 = vmatpush1.msra.mxu0 0.0
        %815 = vmatprep.subr.mxu0 0.0
        %816 = vmatpush1.msra.mxu0 0.0
        %817 = vmatprep.subr.mxu0 0.0
        %818 = vmatpush1.msra.mxu0 0.0
        %819 = vmatprep.subr.mxu0 0.0
        %820 = vmatpush1.msra.mxu0 0.0
        %821 = vmatprep.subr.mxu0 0.0
        %822 = vmatpush1.msra.mxu0 0.0
        %823 = vmatprep.subr.mxu0 0.0
        %824 = vmatpush1.msra.mxu0 0.0
        %825 = vmatprep.subr.mxu0 0.0
        %826 = vmatpush1.msra.mxu0 0.0
        %827 = vmatprep.subr.mxu0 0.0
        %828 = vmatpush1.msra.mxu0 0.0
        %829 = vmatprep.subr.mxu0 0.0
        %830 = vmatpush1.msra.mxu0 0.0
        %831 = vmatprep.subr.mxu0 0.0
        %832 = vmatpush1.msra.mxu0 0.0
        %833 = vmatprep.subr.mxu0 0.0
        %834 = vmatpush1.msra.mxu0 0.0
        %835 = vmatprep.subr.mxu0 0.0
        %836 = vmatpush1.msra.mxu0 0.0
        %837 = vmatprep.subr.mxu0 0.0
        %838 = vmatpush1.msra.mxu0 0.0
        %839 = vmatprep.subr.mxu0 0.0
        %840 = vmatpush1.msra.mxu0 0.0
        %841 = vmatprep.subr.mxu0 0.0
        %842 = vmatpush1.msra.mxu0 0.0
        %843 = vmatprep.mubr.f32.mxu0 0.0
        %844 = vmatmul.mubr.f32.gmra.mrb[0].mxu0 %v309
        %v845 = vpop.f32.mrb[0].mxu0
        %v846 = vadd.f32 %v533, %v845
        %v847 = vpop.f32.mrb[0].mxu0
        %v848 = vadd.f32 %v537, %v847
        %849 = vdwg.mxu0
        %850 = vmatprep.subr.mxu0 %v319
        %851 = vmatpush1.msra.mxu0 %v318
        %852 = vmatprep.subr.mxu0 %v331
        %853 = vmatpush1.msra.mxu0 %v330
        %854 = vmatprep.subr.mxu0 %v343
        %855 = vmatpush1.msra.mxu0 %v342
        %856 = vmatprep.subr.mxu0 %v355
        %857 = vmatpush1.msra.mxu0 %v354
        %858 = vmatprep.subr.mxu0 %v367
        %859 = vmatpush1.msra.mxu0 %v366
        %860 = vmatprep.subr.mxu0 %v379
        %861 = vmatpush1.msra.mxu0 %v378
        %862 = vmatprep.subr.mxu0 %v391
        %863 = vmatpush1.msra.mxu0 %v390
        %864 = vmatprep.subr.mxu0 %v403
        %865 = vmatpush1.msra.mxu0 %v402
        %866 = vmatprep.subr.mxu0 %v415
        %867 = vmatpush1.msra.mxu0 %v414
        %868 = vmatprep.subr.mxu0 %v427
        %869 = vmatpush1.msra.mxu0 %v426
        %870 = vmatprep.subr.mxu0 %v439
        %871 = vmatpush1.msra.mxu0 %v438
        %872 = vmatprep.subr.mxu0 %v451
        %873 = vmatpush1.msra.mxu0 %v450
        %874 = vmatprep.subr.mxu0 %v463
        %875 = vmatpush1.msra.mxu0 %v462
        %876 = vmatprep.subr.mxu0 %v475
        %877 = vmatpush1.msra.mxu0 %v474
        %878 = vmatprep.subr.mxu0 %v487
        %879 = vmatpush1.msra.mxu0 %v486
        %880 = vmatprep.subr.mxu0 %v499
        %881 = vmatpush1.msra.mxu0 %v498
        %882 = vmatprep.subr.mxu0 0.0
        %883 = vmatpush1.msra.mxu0 0.0
        %884 = vmatprep.subr.mxu0 0.0
        %885 = vmatpush1.msra.mxu0 0.0
        %886 = vmatprep.subr.mxu0 0.0
        %887 = vmatpush1.msra.mxu0 0.0
        %888 = vmatprep.subr.mxu0 0.0
        %889 = vmatpush1.msra.mxu0 0.0
        %890 = vmatprep.subr.mxu0 0.0
        %891 = vmatpush1.msra.mxu0 0.0
        %892 = vmatprep.subr.mxu0 0.0
        %893 = vmatpush1.msra.mxu0 0.0
        %894 = vmatprep.subr.mxu0 0.0
        %895 = vmatpush1.msra.mxu0 0.0
        %896 = vmatprep.subr.mxu0 0.0
        %897 = vmatpush1.msra.mxu0 0.0
        %898 = vmatprep.subr.mxu0 0.0
        %899 = vmatpush1.msra.mxu0 0.0
        %900 = vmatprep.subr.mxu0 0.0
        %901 = vmatpush1.msra.mxu0 0.0
        %902 = vmatprep.subr.mxu0 0.0
        %903 = vmatpush1.msra.mxu0 0.0
        %904 = vmatprep.subr.mxu0 0.0
        %905 = vmatpush1.msra.mxu0 0.0
        %906 = vmatprep.subr.mxu0 0.0
        %907 = vmatpush1.msra.mxu0 0.0
        %908 = vmatprep.subr.mxu0 0.0
        %909 = vmatpush1.msra.mxu0 0.0
        %910 = vmatprep.subr.mxu0 0.0
        %911 = vmatpush1.msra.mxu0 0.0
        %912 = vmatprep.subr.mxu0 0.0
        %913 = vmatpush1.msra.mxu0 0.0
        %914 = vmatprep.mubr.f32.mxu0 0.0
        %915 = vmatmul.mubr.f32.gmra.mrb[0].mxu0 %v309
        %v916 = vpop.f32.mrb[0].mxu0
        %v917 = vadd.f32 %v541, %v916
        %v918 = vpop.f32.mrb[0].mxu0
        %v919 = vadd.f32 %v545, %v918
        %920 = vdwg.mxu0
        %921 = vmatprep.subr.mxu0 %v321
        %922 = vmatpush1.msra.mxu0 %v320
        %923 = vmatprep.subr.mxu0 %v333
        %924 = vmatpush1.msra.mxu0 %v332
        %925 = vmatprep.subr.mxu0 %v345
        %926 = vmatpush1.msra.mxu0 %v344
        %927 = vmatprep.subr.mxu0 %v357
        %928 = vmatpush1.msra.mxu0 %v356
        %929 = vmatprep.subr.mxu0 %v369
        %930 = vmatpush1.msra.mxu0 %v368
        %931 = vmatprep.subr.mxu0 %v381
        %932 = vmatpush1.msra.mxu0 %v380
        %933 = vmatprep.subr.mxu0 %v393
        %934 = vmatpush1.msra.mxu0 %v392
        %935 = vmatprep.subr.mxu0 %v405
        %936 = vmatpush1.msra.mxu0 %v404
        %937 = vmatprep.subr.mxu0 %v417
        %938 = vmatpush1.msra.mxu0 %v416
        %939 = vmatprep.subr.mxu0 %v429
        %940 = vmatpush1.msra.mxu0 %v428
        %941 = vmatprep.subr.mxu0 %v441
        %942 = vmatpush1.msra.mxu0 %v440
        %943 = vmatprep.subr.mxu0 %v453
        %944 = vmatpush1.msra.mxu0 %v452
        %945 = vmatprep.subr.mxu0 %v465
        %946 = vmatpush1.msra.mxu0 %v464
        %947 = vmatprep.subr.mxu0 %v477
        %948 = vmatpush1.msra.mxu0 %v476
        %949 = vmatprep.subr.mxu0 %v489
        %950 = vmatpush1.msra.mxu0 %v488
        %951 = vmatprep.subr.mxu0 %v501
        %952 = vmatpush1.msra.mxu0 %v500
        %953 = vmatprep.subr.mxu0 0.0
        %954 = vmatpush1.msra.mxu0 0.0
        %955 = vmatprep.subr.mxu0 0.0
        %956 = vmatpush1.msra.mxu0 0.0
        %957 = vmatprep.subr.mxu0 0.0
        %958 = vmatpush1.msra.mxu0 0.0
        %959 = vmatprep.subr.mxu0 0.0
        %960 = vmatpush1.msra.mxu0 0.0
        %961 = vmatprep.subr.mxu0 0.0
        %962 = vmatpush1.msra.mxu0 0.0
        %963 = vmatprep.subr.mxu0 0.0
        %964 = vmatpush1.msra.mxu0 0.0
        %965 = vmatprep.subr.mxu0 0.0
        %966 = vmatpush1.msra.mxu0 0.0
        %967 = vmatprep.subr.mxu0 0.0
        %968 = vmatpush1.msra.mxu0 0.0
        %969 = vmatprep.subr.mxu0 0.0
        %970 = vmatpush1.msra.mxu0 0.0
        %971 = vmatprep.subr.mxu0 0.0
        %972 = vmatpush1.msra.mxu0 0.0
        %973 = vmatprep.subr.mxu0 0.0
        %974 = vmatpush1.msra.mxu0 0.0
        %975 = vmatprep.subr.mxu0 0.0
        %976 = vmatpush1.msra.mxu0 0.0
        %977 = vmatprep.subr.mxu0 0.0
        %978 = vmatpush1.msra.mxu0 0.0
        %979 = vmatprep.subr.mxu0 0.0
        %980 = vmatpush1.msra.mxu0 0.0
        %981 = vmatprep.subr.mxu0 0.0
        %982 = vmatpush1.msra.mxu0 0.0
        %983 = vmatprep.subr.mxu0 0.0
        %984 = vmatpush1.msra.mxu0 0.0
        %985 = vmatprep.mubr.f32.mxu0 0.0
        %986 = vmatmul.mubr.f32.gmra.mrb[0].mxu0 %v309
        %v987 = vpop.f32.mrb[0].mxu0
        %v988 = vadd.f32 %v549, %v987
        %v989 = vpop.f32.mrb[0].mxu0
        %v990 = vadd.f32 %v553, %v989
        %991 = vdwg.mxu0
        %v992 = vld [vmem:[%s5] sm:$0xff]
        %993 = vmatprep.subr.mxu0 0.0
        %994 = vmatpush1.xpose.msra.mxu0 %v775
        %995 = vmatprep.subr.mxu0 0.0
        %996 = vmatpush1.xpose.msra.mxu0 0.0
        %997 = vmatprep.subr.mxu0 0.0
        %998 = vmatpush1.xpose.msra.mxu0 0.0
        %999 = vmatprep.subr.mxu0 0.0
        %1000 = vmatpush1.xpose.msra.mxu0 0.0
        %1001 = vmatprep.subr.mxu0 0.0
        %1002 = vmatpush1.xpose.msra.mxu0 0.0
        %1003 = vmatprep.subr.mxu0 0.0
        %1004 = vmatpush1.xpose.msra.mxu0 0.0
        %1005 = vmatprep.subr.mxu0 0.0
        %1006 = vmatpush1.xpose.msra.mxu0 0.0
        %1007 = vmatprep.subr.mxu0 0.0
        %1008 = vmatpush1.xpose.msra.mxu0 0.0
        %1009 = vmatprep.subr.mxu0 0.0
        %1010 = vmatpush1.xpose.msra.mxu0 0.0
        %1011 = vmatprep.subr.mxu0 0.0
        %1012 = vmatpush1.xpose.msra.mxu0 0.0
        %1013 = vmatprep.subr.mxu0 0.0
        %1014 = vmatpush1.xpose.msra.mxu0 0.0
        %1015 = vmatprep.subr.mxu0 0.0
        %1016 = vmatpush1.xpose.msra.mxu0 0.0
        %1017 = vmatprep.subr.mxu0 0.0
        %1018 = vmatpush1.xpose.msra.mxu0 0.0
        %1019 = vmatprep.subr.mxu0 0.0
        %1020 = vmatpush1.xpose.msra.mxu0 0.0
        %1021 = vmatprep.subr.mxu0 0.0
        %1022 = vmatpush1.xpose.msra.mxu0 0.0
        %1023 = vmatprep.subr.mxu0 0.0
        %1024 = vmatpush1.xpose.msra.mxu0 0.0
        %1025 = vmatprep.subr.mxu0 0.0
        %1026 = vmatpush1.xpose.msra.mxu0 0.0
        %1027 = vmatprep.subr.mxu0 0.0
        %1028 = vmatpush1.xpose.msra.mxu0 0.0
        %1029 = vmatprep.subr.mxu0 0.0
        %1030 = vmatpush1.xpose.msra.mxu0 0.0
        %1031 = vmatprep.subr.mxu0 0.0
        %1032 = vmatpush1.xpose.msra.mxu0 0.0
        %1033 = vmatprep.subr.mxu0 0.0
        %1034 = vmatpush1.xpose.msra.mxu0 0.0
        %1035 = vmatprep.subr.mxu0 0.0
        %1036 = vmatpush1.xpose.msra.mxu0 0.0
        %1037 = vmatprep.subr.mxu0 0.0
        %1038 = vmatpush1.xpose.msra.mxu0 0.0
        %1039 = vmatprep.subr.mxu0 0.0
        %1040 = vmatpush1.xpose.msra.mxu0 0.0
        %1041 = vmatprep.subr.mxu0 0.0
        %1042 = vmatpush1.xpose.msra.mxu0 0.0
        %1043 = vmatprep.subr.mxu0 0.0
        %1044 = vmatpush1.xpose.msra.mxu0 0.0
        %1045 = vmatprep.subr.mxu0 0.0
        %1046 = vmatpush1.xpose.msra.mxu0 0.0
        %1047 = vmatprep.subr.mxu0 0.0
        %1048 = vmatpush1.xpose.msra.mxu0 0.0
        %1049 = vmatprep.subr.mxu0 0.0
        %1050 = vmatpush1.xpose.msra.mxu0 0.0
        %1051 = vmatprep.subr.mxu0 0.0
        %1052 = vmatpush1.xpose.msra.mxu0 0.0
        %1053 = vmatprep.subr.mxu0 0.0
        %1054 = vmatpush1.xpose.msra.mxu0 0.0
        %1055 = vmatprep.subr.mxu0 0.0
        %1056 = vmatpush1.xpose.msra.mxu0 0.0
        %1057 = vmatprep.mubr.f32.mxu0 0.0
        %1058 = vmatmul.mubr.f32.gmra.mrb[0].mxu0 %v633
        %v1059 = vpop.f32.mrb[0].mxu0
        %v1060 = vadd.f32 %v992, %v1059
        %v1061 = vpop.f32.mrb[0].mxu0
        %1062 = vdwg.mxu0
        %vm1063 = vcmask 64512
        %v1064 = vsel %vm1063, %v1060, -inf
        %1065 = vmax.xlane.f32.xlu0 %v1064
        %v1066 = vpop.xlane.xlu0 %1065
        %v1067 = vsub.f32 %v1060, %v1066
        %v1068 = vmul.f32 %v1067, 1.442695
        %v1069 = vpow.pop %v1068
        %v1070 = vsel %vm1063, %v1069, 0.0
        %1071 = vadd.xlane.f32.xlu0 %v1070
        %v1072 = vpop.xlane.xlu0 %1071
        %v1073 = vrcp.pop %v1072
        %v1074 = vmul.f32 %v1069, %v1073
        %v1076 = vsel %vm1063, %v1074, 0
        %1078 = vmatprep.subr.mxu0 0.0
        %1079 = vmatpush1.msra.mxu0 %v917
        %1080 = vmatprep.subr.mxu0 0.0
        %1081 = vmatpush1.msra.mxu0 0.0
        %1082 = vmatprep.subr.mxu0 0.0
        %1083 = vmatpush1.msra.mxu0 0.0
        %1084 = vmatprep.subr.mxu0 0.0
        %1085 = vmatpush1.msra.mxu0 0.0
        %1086 = vmatprep.subr.mxu0 0.0
        %1087 = vmatpush1.msra.mxu0 0.0
        %1088 = vmatprep.subr.mxu0 0.0
        %1089 = vmatpush1.msra.mxu0 0.0
        %1090 = vmatprep.subr.mxu0 0.0
        %1091 = vmatpush1.msra.mxu0 0.0
        %1092 = vmatprep.subr.mxu0 0.0
        %1093 = vmatpush1.msra.mxu0 0.0
        %1094 = vmatprep.subr.mxu0 0.0
        %1095 = vmatpush1.msra.mxu0 0.0
        %1096 = vmatprep.subr.mxu0 0.0
        %1097 = vmatpush1.msra.mxu0 0.0
        %1098 = vmatprep.subr.mxu0 0.0
        %1099 = vmatpush1.msra.mxu0 0.0
        %1100 = vmatprep.subr.mxu0 0.0
        %1101 = vmatpush1.msra.mxu0 0.0
        %1102 = vmatprep.subr.mxu0 0.0
        %1103 = vmatpush1.msra.mxu0 0.0
        %1104 = vmatprep.subr.mxu0 0.0
        %1105 = vmatpush1.msra.mxu0 0.0
        %1106 = vmatprep.subr.mxu0 0.0
        %1107 = vmatpush1.msra.mxu0 0.0
        %1108 = vmatprep.subr.mxu0 0.0
        %1109 = vmatpush1.msra.mxu0 0.0
        %1110 = vmatprep.subr.mxu0 0.0
        %1111 = vmatpush1.msra.mxu0 0.0
        %1112 = vmatprep.subr.mxu0 0.0
        %1113 = vmatpush1.msra.mxu0 0.0
        %1114 = vmatprep.subr.mxu0 0.0
        %1115 = vmatpush1.msra.mxu0 0.0
        %1116 = vmatprep.subr.mxu0 0.0
        %1117 = vmatpush1.msra.mxu0 0.0
        %1118 = vmatprep.subr.mxu0 0.0
        %1119 = vmatpush1.msra.mxu0 0.0
        %1120 = vmatprep.subr.mxu0 0.0
        %1121 = vmatpush1.msra.mxu0 0.0
        %1122 = vmatprep.subr.mxu0 0.0
        %1123 = vmatpush1.msra.mxu0 0.0
        %1124 = vmatprep.subr.mxu0 0.0
        %1125 = vmatpush1.msra.mxu0 0.0
        %1126 = vmatprep.subr.mxu0 0.0
        %1127 = vmatpush1.msra.mxu0 0.0
        %1128 = vmatprep.subr.mxu0 0.0
        %1129 = vmatpush1.msra.mxu0 0.0
        %1130 = vmatprep.subr.mxu0 0.0
        %1131 = vmatpush1.msra.mxu0 0.0
        %1132 = vmatprep.subr.mxu0 0.0
        %1133 = vmatpush1.msra.mxu0 0.0
        %1134 = vmatprep.subr.mxu0 0.0
        %1135 = vmatpush1.msra.mxu0 0.0
        %1136 = vmatprep.subr.mxu0 0.0
        %1137 = vmatpush1.msra.mxu0 0.0
        %1138 = vmatprep.subr.mxu0 0.0
        %1139 = vmatpush1.msra.mxu0 0.0
        %1140 = vmatprep.subr.mxu0 0.0
        %1141 = vmatpush1.msra.mxu0 0.0
        %1142 = vmatprep.mubr.f32.mxu0 0.0
        %1143 = vmatmul.mubr.f32.gmra.mrb[0].mxu0 %v1076
        %v1144 = vpop.f32.mrb[0].mxu0
        %v1145 = vadd.f32 0.0, %v1144
        %v1146 = vpop.f32.mrb[0].mxu0
        %1147 = vdwg.mxu0
        %1148 = vmatprep.subr.mxu0 0.0
        %1149 = vmatpush1.xpose.msra.mxu0 %v777
        %1150 = vmatprep.subr.mxu0 0.0
        %1151 = vmatpush1.xpose.msra.mxu0 0.0
        %1152 = vmatprep.subr.mxu0 0.0
        %1153 = vmatpush1.xpose.msra.mxu0 0.0
        %1154 = vmatprep.subr.mxu0 0.0
        %1155 = vmatpush1.xpose.msra.mxu0 0.0
        %1156 = vmatprep.subr.mxu0 0.0
        %1157 = vmatpush1.xpose.msra.mxu0 0.0
        %1158 = vmatprep.subr.mxu0 0.0
        %1159 = vmatpush1.xpose.msra.mxu0 0.0
        %1160 = vmatprep.subr.mxu0 0.0
        %1161 = vmatpush1.xpose.msra.mxu0 0.0
        %1162 = vmatprep.subr.mxu0 0.0
        %1163 = vmatpush1.xpose.msra.mxu0 0.0
        %1164 = vmatprep.subr.mxu0 0.0
        %1165 = vmatpush1.xpose.msra.mxu0 0.0
        %1166 = vmatprep.subr.mxu0 0.0
        %1167 = vmatpush1.xpose.msra.mxu0 0.0
        %1168 = vmatprep.subr.mxu0 0.0
        %1169 = vmatpush1.xpose.msra.mxu0 0.0
        %1170 = vmatprep.subr.mxu0 0.0
        %1171 = vmatpush1.xpose.msra.mxu0 0.0
        %1172 = vmatprep.subr.mxu0 0.0
        %1173 = vmatpush1.xpose.msra.mxu0 0.0
        %1174 = vmatprep.subr.mxu0 0.0
        %1175 = vmatpush1.xpose.msra.mxu0 0.0
        %1176 = vmatprep.subr.mxu0 0.0
        %1177 = vmatpush1.xpose.msra.mxu0 0.0
        %1178 = vmatprep.subr.mxu0 0.0
        %1179 = vmatpush1.xpose.msra.mxu0 0.0
        %1180 = vmatprep.subr.mxu0 0.0
        %1181 = vmatpush1.xpose.msra.mxu0 0.0
        %1182 = vmatprep.subr.mxu0 0.0
        %1183 = vmatpush1.xpose.msra.mxu0 0.0
        %1184 = vmatprep.subr.mxu0 0.0
        %1185 = vmatpush1.xpose.msra.mxu0 0.0
        %1186 = vmatprep.subr.mxu0 0.0
        %1187 = vmatpush1.xpose.msra.mxu0 0.0
        %1188 = vmatprep.subr.mxu0 0.0
        %1189 = vmatpush1.xpose.msra.mxu0 0.0
        %1190 = vmatprep.subr.mxu0 0.0
        %1191 = vmatpush1.xpose.msra.mxu0 0.0
        %1192 = vmatprep.subr.mxu0 0.0
        %1193 = vmatpush1.xpose.msra.mxu0 0.0
        %1194 = vmatprep.subr.mxu0 0.0
        %1195 = vmatpush1.xpose.msra.mxu0 0.0
        %1196 = vmatprep.subr.mxu0 0.0
        %1197 = vmatpush1.xpose.msra.mxu0 0.0
        %1198 = vmatprep.subr.mxu0 0.0
        %1199 = vmatpush1.xpose.msra.mxu0 0.0
        %1200 = vmatprep.subr.mxu0 0.0
        %1201 = vmatpush1.xpose.msra.mxu0 0.0
        %1202 = vmatprep.subr.mxu0 0.0
        %1203 = vmatpush1.xpose.msra.mxu0 0.0
        %1204 = vmatprep.subr.mxu0 0.0
        %1205 = vmatpush1.xpose.msra.mxu0 0.0
        %1206 = vmatprep.subr.mxu0 0.0
        %1207 = vmatpush1.xpose.msra.mxu0 0.0
        %1208 = vmatprep.subr.mxu0 0.0
        %1209 = vmatpush1.xpose.msra.mxu0 0.0
        %1210 = vmatprep.subr.mxu0 0.0
        %1211 = vmatpush1.xpose.msra.mxu0 0.0
        %1212 = vmatprep.mubr.f32.mxu0 0.0
        %1213 = vmatmul.mubr.f32.gmra.mrb[0].mxu0 %v635
        %v1214 = vpop.f32.mrb[0].mxu0
        %v1215 = vadd.f32 %v992, %v1214
        %v1216 = vpop.f32.mrb[0].mxu0
        %1217 = vdwg.mxu0
        %v1218 = vsel %vm1063, %v1215, -inf
        %1219 = vmax.xlane.f32.xlu0 %v1218
        %v1220 = vpop.xlane.xlu0 %1219
        %v1221 = vsub.f32 %v1215, %v1220
        %v1222 = vmul.f32 %v1221, 1.442695
        %v1223 = vpow.pop %v1222
        %v1224 = vsel %vm1063, %v1223, 0.0
        %1225 = vadd.xlane.f32.xlu0 %v1224
        %v1226 = vpop.xlane.xlu0 %1225
        %v1227 = vrcp.pop %v1226
        %v1228 = vmul.f32 %v1223, %v1227
        %v1230 = vsel %vm1063, %v1228, 0
        %1232 = vmatprep.subr.mxu0 0.0
        %1233 = vmatpush1.msra.mxu0 %v919
        %1234 = vmatprep.subr.mxu0 0.0
        %1235 = vmatpush1.msra.mxu0 0.0
        %1236 = vmatprep.subr.mxu0 0.0
        %1237 = vmatpush1.msra.mxu0 0.0
        %1238 = vmatprep.subr.mxu0 0.0
        %1239 = vmatpush1.msra.mxu0 0.0
        %1240 = vmatprep.subr.mxu0 0.0
        %1241 = vmatpush1.msra.mxu0 0.0
        %1242 = vmatprep.subr.mxu0 0.0
        %1243 = vmatpush1.msra.mxu0 0.0
        %1244 = vmatprep.subr.mxu0 0.0
        %1245 = vmatpush1.msra.mxu0 0.0
        %1246 = vmatprep.subr.mxu0 0.0
        %1247 = vmatpush1.msra.mxu0 0.0
        %1248 = vmatprep.subr.mxu0 0.0
        %1249 = vmatpush1.msra.mxu0 0.0
        %1250 = vmatprep.subr.mxu0 0.0
        %1251 = vmatpush1.msra.mxu0 0.0
        %1252 = vmatprep.subr.mxu0 0.0
        %1253 = vmatpush1.msra.mxu0 0.0
        %1254 = vmatprep.subr.mxu0 0.0
        %1255 = vmatpush1.msra.mxu0 0.0
        %1256 = vmatprep.subr.mxu0 0.0
        %1257 = vmatpush1.msra.mxu0 0.0
        %1258 = vmatprep.subr.mxu0 0.0
        %1259 = vmatpush1.msra.mxu0 0.0
        %1260 = vmatprep.subr.mxu0 0.0
        %1261 = vmatpush1.msra.mxu0 0.0
        %1262 = vmatprep.subr.mxu0 0.0
        %1263 = vmatpush1.msra.mxu0 0.0
        %1264 = vmatprep.subr.mxu0 0.0
        %1265 = vmatpush1.msra.mxu0 0.0
        %1266 = vmatprep.subr.mxu0 0.0
        %1267 = vmatpush1.msra.mxu0 0.0
        %1268 = vmatprep.subr.mxu0 0.0
        %1269 = vmatpush1.msra.mxu0 0.0
        %1270 = vmatprep.subr.mxu0 0.0
        %1271 = vmatpush1.msra.mxu0 0.0
        %1272 = vmatprep.subr.mxu0 0.0
        %1273 = vmatpush1.msra.mxu0 0.0
        %1274 = vmatprep.subr.mxu0 0.0
        %1275 = vmatpush1.msra.mxu0 0.0
        %1276 = vmatprep.subr.mxu0 0.0
        %1277 = vmatpush1.msra.mxu0 0.0
        %1278 = vmatprep.subr.mxu0 0.0
        %1279 = vmatpush1.msra.mxu0 0.0
        %1280 = vmatprep.subr.mxu0 0.0
        %1281 = vmatpush1.msra.mxu0 0.0
        %1282 = vmatprep.subr.mxu0 0.0
        %1283 = vmatpush1.msra.mxu0 0.0
        %1284 = vmatprep.subr.mxu0 0.0
        %1285 = vmatpush1.msra.mxu0 0.0
        %1286 = vmatprep.subr.mxu0 0.0
        %1287 = vmatpush1.msra.mxu0 0.0
        %1288 = vmatprep.subr.mxu0 0.0
        %1289 = vmatpush1.msra.mxu0 0.0
        %1290 = vmatprep.subr.mxu0 0.0
        %1291 = vmatpush1.msra.mxu0 0.0
        %1292 = vmatprep.subr.mxu0 0.0
        %1293 = vmatpush1.msra.mxu0 0.0
        %1294 = vmatprep.subr.mxu0 0.0
        %1295 = vmatpush1.msra.mxu0 0.0
        %1296 = vmatprep.mubr.f32.mxu0 0.0
        %1297 = vmatmul.mubr.f32.gmra.mrb[0].mxu0 %v1230
        %v1298 = vpop.f32.mrb[0].mxu0
        %v1299 = vadd.f32 0.0, %v1298
        %v1300 = vpop.f32.mrb[0].mxu0
        %1301 = vdwg.mxu0
        %1302 = vmatprep.subr.mxu0 0.0
        %1303 = vmatpush1.xpose.msra.mxu0 %v846
        %1304 = vmatprep.subr.mxu0 0.0
        %1305 = vmatpush1.xpose.msra.mxu0 0.0
        %1306 = vmatprep.subr.mxu0 0.0
        %1307 = vmatpush1.xpose.msra.mxu0 0.0
        %1308 = vmatprep.subr.mxu0 0.0
        %1309 = vmatpush1.xpose.msra.mxu0 0.0
        %1310 = vmatprep.subr.mxu0 0.0
        %1311 = vmatpush1.xpose.msra.mxu0 0.0
        %1312 = vmatprep.subr.mxu0 0.0
        %1313 = vmatpush1.xpose.msra.mxu0 0.0
        %1314 = vmatprep.subr.mxu0 0.0
        %1315 = vmatpush1.xpose.msra.mxu0 0.0
        %1316 = vmatprep.subr.mxu0 0.0
        %1317 = vmatpush1.xpose.msra.mxu0 0.0
        %1318 = vmatprep.subr.mxu0 0.0
        %1319 = vmatpush1.xpose.msra.mxu0 0.0
        %1320 = vmatprep.subr.mxu0 0.0
        %1321 = vmatpush1.xpose.msra.mxu0 0.0
        %1322 = vmatprep.subr.mxu0 0.0
        %1323 = vmatpush1.xpose.msra.mxu0 0.0
        %1324 = vmatprep.subr.mxu0 0.0
        %1325 = vmatpush1.xpose.msra.mxu0 0.0
        %1326 = vmatprep.subr.mxu0 0.0
        %1327 = vmatpush1.xpose.msra.mxu0 0.0
        %1328 = vmatprep.subr.mxu0 0.0
        %1329 = vmatpush1.xpose.msra.mxu0 0.0
        %1330 = vmatprep.subr.mxu0 0.0
        %1331 = vmatpush1.xpose.msra.mxu0 0.0
        %1332 = vmatprep.subr.mxu0 0.0
        %1333 = vmatpush1.xpose.msra.mxu0 0.0
        %1334 = vmatprep.subr.mxu0 0.0
        %1335 = vmatpush1.xpose.msra.mxu0 0.0
        %1336 = vmatprep.subr.mxu0 0.0
        %1337 = vmatpush1.xpose.msra.mxu0 0.0
        %1338 = vmatprep.subr.mxu0 0.0
        %1339 = vmatpush1.xpose.msra.mxu0 0.0
        %1340 = vmatprep.subr.mxu0 0.0
        %1341 = vmatpush1.xpose.msra.mxu0 0.0
        %1342 = vmatprep.subr.mxu0 0.0
        %1343 = vmatpush1.xpose.msra.mxu0 0.0
        %1344 = vmatprep.subr.mxu0 0.0
        %1345 = vmatpush1.xpose.msra.mxu0 0.0
        %1346 = vmatprep.subr.mxu0 0.0
        %1347 = vmatpush1.xpose.msra.mxu0 0.0
        %1348 = vmatprep.subr.mxu0 0.0
        %1349 = vmatpush1.xpose.msra.mxu0 0.0
        %1350 = vmatprep.subr.mxu0 0.0
        %1351 = vmatpush1.xpose.msra.mxu0 0.0
        %1352 = vmatprep.subr.mxu0 0.0
        %1353 = vmatpush1.xpose.msra.mxu0 0.0
        %1354 = vmatprep.subr.mxu0 0.0
        %1355 = vmatpush1.xpose.msra.mxu0 0.0
        %1356 = vmatprep.subr.mxu0 0.0
        %1357 = vmatpush1.xpose.msra.mxu0 0.0
        %1358 = vmatprep.subr.mxu0 0.0
        %1359 = vmatpush1.xpose.msra.mxu0 0.0
        %1360 = vmatprep.subr.mxu0 0.0
        %1361 = vmatpush1.xpose.msra.mxu0 0.0
        %1362 = vmatprep.subr.mxu0 0.0
        %1363 = vmatpush1.xpose.msra.mxu0 0.0
        %1364 = vmatprep.subr.mxu0 0.0
        %1365 = vmatpush1.xpose.msra.mxu0 0.0
        %1366 = vmatprep.mubr.f32.mxu0 0.0
        %1367 = vmatmul.mubr.f32.gmra.mrb[0].mxu0 %v704
        %v1368 = vpop.f32.mrb[0].mxu0
        %v1369 = vadd.f32 %v992, %v1368
        %v1370 = vpop.f32.mrb[0].mxu0
        %1371 = vdwg.mxu0
        %v1372 = vsel %vm1063, %v1369, -inf
        %1373 = vmax.xlane.f32.xlu0 %v1372
        %v1374 = vpop.xlane.xlu0 %1373
        %v1375 = vsub.f32 %v1369, %v1374
        %v1376 = vmul.f32 %v1375, 1.442695
        %v1377 = vpow.pop %v1376
        %v1378 = vsel %vm1063, %v1377, 0.0
        %1379 = vadd.xlane.f32.xlu0 %v1378
        %v1380 = vpop.xlane.xlu0 %1379
        %v1381 = vrcp.pop %v1380
        %v1382 = vmul.f32 %v1377, %v1381
        %v1384 = vsel %vm1063, %v1382, 0
        %1386 = vmatprep.subr.mxu0 0.0
        %1387 = vmatpush1.msra.mxu0 %v988
        %1388 = vmatprep.subr.mxu0 0.0
        %1389 = vmatpush1.msra.mxu0 0.0
        %1390 = vmatprep.subr.mxu0 0.0
        %1391 = vmatpush1.msra.mxu0 0.0
        %1392 = vmatprep.subr.mxu0 0.0
        %1393 = vmatpush1.msra.mxu0 0.0
        %1394 = vmatprep.subr.mxu0 0.0
        %1395 = vmatpush1.msra.mxu0 0.0
        %1396 = vmatprep.subr.mxu0 0.0
        %1397 = vmatpush1.msra.mxu0 0.0
        %1398 = vmatprep.subr.mxu0 0.0
        %1399 = vmatpush1.msra.mxu0 0.0
        %1400 = vmatprep.subr.mxu0 0.0
        %1401 = vmatpush1.msra.mxu0 0.0
        %1402 = vmatprep.subr.mxu0 0.0
        %1403 = vmatpush1.msra.mxu0 0.0
        %1404 = vmatprep.subr.mxu0 0.0
        %1405 = vmatpush1.msra.mxu0 0.0
        %1406 = vmatprep.subr.mxu0 0.0
        %1407 = vmatpush1.msra.mxu0 0.0
        %1408 = vmatprep.subr.mxu0 0.0
        %1409 = vmatpush1.msra.mxu0 0.0
        %1410 = vmatprep.subr.mxu0 0.0
        %1411 = vmatpush1.msra.mxu0 0.0
        %1412 = vmatprep.subr.mxu0 0.0
        %1413 = vmatpush1.msra.mxu0 0.0
        %1414 = vmatprep.subr.mxu0 0.0
        %1415 = vmatpush1.msra.mxu0 0.0
        %1416 = vmatprep.subr.mxu0 0.0
        %1417 = vmatpush1.msra.mxu0 0.0
        %1418 = vmatprep.subr.mxu0 0.0
        %1419 = vmatpush1.msra.mxu0 0.0
        %1420 = vmatprep.subr.mxu0 0.0
        %1421 = vmatpush1.msra.mxu0 0.0
        %1422 = vmatprep.subr.mxu0 0.0
        %1423 = vmatpush1.msra.mxu0 0.0
        %1424 = vmatprep.subr.mxu0 0.0
        %1425 = vmatpush1.msra.mxu0 0.0
        %1426 = vmatprep.subr.mxu0 0.0
        %1427 = vmatpush1.msra.mxu0 0.0
        %1428 = vmatprep.subr.mxu0 0.0
        %1429 = vmatpush1.msra.mxu0 0.0
        %1430 = vmatprep.subr.mxu0 0.0
        %1431 = vmatpush1.msra.mxu0 0.0
        %1432 = vmatprep.subr.mxu0 0.0
        %1433 = vmatpush1.msra.mxu0 0.0
        %1434 = vmatprep.subr.mxu0 0.0
        %1435 = vmatpush1.msra.mxu0 0.0
        %1436 = vmatprep.subr.mxu0 0.0
        %1437 = vmatpush1.msra.mxu0 0.0
        %1438 = vmatprep.subr.mxu0 0.0
        %1439 = vmatpush1.msra.mxu0 0.0
        %1440 = vmatprep.subr.mxu0 0.0
        %1441 = vmatpush1.msra.mxu0 0.0
        %1442 = vmatprep.subr.mxu0 0.0
        %1443 = vmatpush1.msra.mxu0 0.0
        %1444 = vmatprep.subr.mxu0 0.0
        %1445 = vmatpush1.msra.mxu0 0.0
        %1446 = vmatprep.subr.mxu0 0.0
        %1447 = vmatpush1.msra.mxu0 0.0
        %1448 = vmatprep.subr.mxu0 0.0
        %1449 = vmatpush1.msra.mxu0 0.0
        %1450 = vmatprep.mubr.f32.mxu0 0.0
        %1451 = vmatmul.mubr.f32.gmra.mrb[0].mxu0 %v1384
        %v1452 = vpop.f32.mrb[0].mxu0
        %v1453 = vadd.f32 0.0, %v1452
        %v1454 = vpop.f32.mrb[0].mxu0
        %1455 = vdwg.mxu0
        %1456 = vmatprep.subr.mxu0 0.0
        %1457 = vmatpush1.xpose.msra.mxu0 %v848
        %1458 = vmatprep.subr.mxu0 0.0
        %1459 = vmatpush1.xpose.msra.mxu0 0.0
        %1460 = vmatprep.subr.mxu0 0.0
        %1461 = vmatpush1.xpose.msra.mxu0 0.0
        %1462 = vmatprep.subr.mxu0 0.0
        %1463 = vmatpush1.xpose.msra.mxu0 0.0
        %1464 = vmatprep.subr.mxu0 0.0
        %1465 = vmatpush1.xpose.msra.mxu0 0.0
        %1466 = vmatprep.subr.mxu0 0.0
        %1467 = vmatpush1.xpose.msra.mxu0 0.0
        %1468 = vmatprep.subr.mxu0 0.0
        %1469 = vmatpush1.xpose.msra.mxu0 0.0
        %1470 = vmatprep.subr.mxu0 0.0
        %1471 = vmatpush1.xpose.msra.mxu0 0.0
        %1472 = vmatprep.subr.mxu0 0.0
        %1473 = vmatpush1.xpose.msra.mxu0 0.0
        %1474 = vmatprep.subr.mxu0 0.0
        %1475 = vmatpush1.xpose.msra.mxu0 0.0
        %1476 = vmatprep.subr.mxu0 0.0
        %1477 = vmatpush1.xpose.msra.mxu0 0.0
        %1478 = vmatprep.subr.mxu0 0.0
        %1479 = vmatpush1.xpose.msra.mxu0 0.0
        %1480 = vmatprep.subr.mxu0 0.0
        %1481 = vmatpush1.xpose.msra.mxu0 0.0
        %1482 = vmatprep.subr.mxu0 0.0
        %1483 = vmatpush1.xpose.msra.mxu0 0.0
        %1484 = vmatprep.subr.mxu0 0.0
        %1485 = vmatpush1.xpose.msra.mxu0 0.0
        %1486 = vmatprep.subr.mxu0 0.0
        %1487 = vmatpush1.xpose.msra.mxu0 0.0
        %1488 = vmatprep.subr.mxu0 0.0
        %1489 = vmatpush1.xpose.msra.mxu0 0.0
        %1490 = vmatprep.subr.mxu0 0.0
        %1491 = vmatpush1.xpose.msra.mxu0 0.0
        %1492 = vmatprep.subr.mxu0 0.0
        %1493 = vmatpush1.xpose.msra.mxu0 0.0
        %1494 = vmatprep.subr.mxu0 0.0
        %1495 = vmatpush1.xpose.msra.mxu0 0.0
        %1496 = vmatprep.subr.mxu0 0.0
        %1497 = vmatpush1.xpose.msra.mxu0 0.0
        %1498 = vmatprep.subr.mxu0 0.0
        %1499 = vmatpush1.xpose.msra.mxu0 0.0
        %1500 = vmatprep.subr.mxu0 0.0
        %1501 = vmatpush1.xpose.msra.mxu0 0.0
        %1502 = vmatprep.subr.mxu0 0.0
        %1503 = vmatpush1.xpose.msra.mxu0 0.0
        %1504 = vmatprep.subr.mxu0 0.0
        %1505 = vmatpush1.xpose.msra.mxu0 0.0
        %1506 = vmatprep.subr.mxu0 0.0
        %1507 = vmatpush1.xpose.msra.mxu0 0.0
        %1508 = vmatprep.subr.mxu0 0.0
        %1509 = vmatpush1.xpose.msra.mxu0 0.0
        %1510 = vmatprep.subr.mxu0 0.0
        %1511 = vmatpush1.xpose.msra.mxu0 0.0
        %1512 = vmatprep.subr.mxu0 0.0
        %1513 = vmatpush1.xpose.msra.mxu0 0.0
        %1514 = vmatprep.subr.mxu0 0.0
        %1515 = vmatpush1.xpose.msra.mxu0 0.0
        %1516 = vmatprep.subr.mxu0 0.0
        %1517 = vmatpush1.xpose.msra.mxu0 0.0
        %1518 = vmatprep.subr.mxu0 0.0
        %1519 = vmatpush1.xpose.msra.mxu0 0.0
        %1520 = vmatprep.mubr.f32.mxu0 0.0
        %1521 = vmatmul.mubr.f32.gmra.mrb[0].mxu0 %v706
        %v1522 = vpop.f32.mrb[0].mxu0
        %v1523 = vadd.f32 %v992, %v1522
        %v1524 = vpop.f32.mrb[0].mxu0
        %1525 = vdwg.mxu0
        %v1526 = vsel %vm1063, %v1523, -inf
        %1527 = vmax.xlane.f32.xlu0 %v1526
        %v1528 = vpop.xlane.xlu0 %1527
        %v1529 = vsub.f32 %v1523, %v1528
        %v1530 = vmul.f32 %v1529, 1.442695
        %v1531 = vpow.pop %v1530
        %v1532 = vsel %vm1063, %v1531, 0.0
        %1533 = vadd.xlane.f32.xlu0 %v1532
        %v1534 = vpop.xlane.xlu0 %1533
        %v1535 = vrcp.pop %v1534
        %v1536 = vmul.f32 %v1531, %v1535
        %v1538 = vsel %vm1063, %v1536, 0
        %1540 = vmatprep.subr.mxu0 0.0
        %1541 = vmatpush1.msra.mxu0 %v990
        %1542 = vmatprep.subr.mxu0 0.0
        %1543 = vmatpush1.msra.mxu0 0.0
        %1544 = vmatprep.subr.mxu0 0.0
        %1545 = vmatpush1.msra.mxu0 0.0
        %1546 = vmatprep.subr.mxu0 0.0
        %1547 = vmatpush1.msra.mxu0 0.0
        %1548 = vmatprep.subr.mxu0 0.0
        %1549 = vmatpush1.msra.mxu0 0.0
        %1550 = vmatprep.subr.mxu0 0.0
        %1551 = vmatpush1.msra.mxu0 0.0
        %1552 = vmatprep.subr.mxu0 0.0
        %1553 = vmatpush1.msra.mxu0 0.0
        %1554 = vmatprep.subr.mxu0 0.0
        %1555 = vmatpush1.msra.mxu0 0.0
        %1556 = vmatprep.subr.mxu0 0.0
        %1557 = vmatpush1.msra.mxu0 0.0
        %1558 = vmatprep.subr.mxu0 0.0
        %1559 = vmatpush1.msra.mxu0 0.0
        %1560 = vmatprep.subr.mxu0 0.0
        %1561 = vmatpush1.msra.mxu0 0.0
        %1562 = vmatprep.subr.mxu0 0.0
        %1563 = vmatpush1.msra.mxu0 0.0
        %1564 = vmatprep.subr.mxu0 0.0
        %1565 = vmatpush1.msra.mxu0 0.0
        %1566 = vmatprep.subr.mxu0 0.0
        %1567 = vmatpush1.msra.mxu0 0.0
        %1568 = vmatprep.subr.mxu0 0.0
        %1569 = vmatpush1.msra.mxu0 0.0
        %1570 = vmatprep.subr.mxu0 0.0
        %1571 = vmatpush1.msra.mxu0 0.0
        %1572 = vmatprep.subr.mxu0 0.0
        %1573 = vmatpush1.msra.mxu0 0.0
        %1574 = vmatprep.subr.mxu0 0.0
        %1575 = vmatpush1.msra.mxu0 0.0
        %1576 = vmatprep.subr.mxu0 0.0
        %1577 = vmatpush1.msra.mxu0 0.0
        %1578 = vmatprep.subr.mxu0 0.0
        %1579 = vmatpush1.msra.mxu0 0.0
        %1580 = vmatprep.subr.mxu0 0.0
        %1581 = vmatpush1.msra.mxu0 0.0
        %1582 = vmatprep.subr.mxu0 0.0
        %1583 = vmatpush1.msra.mxu0 0.0
        %1584 = vmatprep.subr.mxu0 0.0
        %1585 = vmatpush1.msra.mxu0 0.0
        %1586 = vmatprep.subr.mxu0 0.0
        %1587 = vmatpush1.msra.mxu0 0.0
        %1588 = vmatprep.subr.mxu0 0.0
        %1589 = vmatpush1.msra.mxu0 0.0
        %1590 = vmatprep.subr.mxu0 0.0
        %1591 = vmatpush1.msra.mxu0 0.0
        %1592 = vmatprep.subr.mxu0 0.0
        %1593 = vmatpush1.msra.mxu0 0.0
        %1594 = vmatprep.subr.mxu0 0.0
        %1595 = vmatpush1.msra.mxu0 0.0
        %1596 = vmatprep.subr.mxu0 0.0
        %1597 = vmatpush1.msra.mxu0 0.0
        %1598 = vmatprep.subr.mxu0 0.0
        %1599 = vmatpush1.msra.mxu0 0.0
        %1600 = vmatprep.subr.mxu0 0.0
        %1601 = vmatpush1.msra.mxu0 0.0
        %1602 = vmatprep.subr.mxu0 0.0
        %1603 = vmatpush1.msra.mxu0 0.0
        %1604 = vmatprep.mubr.f32.mxu0 0.0
        %1605 = vmatmul.mubr.f32.gmra.mrb[0].mxu0 %v1538
        %v1606 = vpop.f32.mrb[0].mxu0
        %v1607 = vadd.f32 0.0, %v1606
        %v1608 = vpop.f32.mrb[0].mxu0
        %1609 = vdwg.mxu0
        %v1610 = vld [vmem:[#allocation8] sm:$0xff]
        %v1611 = vld [vmem:[#allocation8 + $0x8] sm:$0xff]
        %v1612 = vld [vmem:[#allocation8 + $0x10] sm:$0xff]
        %v1613 = vld [vmem:[#allocation8 + $0x18] sm:$0xff]
        %v1614 = vld [vmem:[#allocation8 + $0x20] sm:$0xff]
        %v1615 = vld [vmem:[#allocation8 + $0x28] sm:$0xff]
        %v1616 = vld [vmem:[#allocation8 + $0x30] sm:$0xff]
        %v1617 = vld [vmem:[#allocation8 + $0x38] sm:$0xff]
        %v1618 = vld [vmem:[#allocation8 + $0x40] sm:$0xff]
        %v1619 = vld [vmem:[#allocation8 + $0x48] sm:$0xff]
        %v1620 = vld [vmem:[#allocation8 + $0x50] sm:$0xff]
        %v1621 = vld [vmem:[#allocation8 + $0x58] sm:$0xff]
        %v1622 = vld [vmem:[#allocation8 + $0x60] sm:$0xff]
        %v1623 = vld [vmem:[#allocation8 + $0x68] sm:$0xff]
        %v1624 = vld [vmem:[#allocation8 + $0x70] sm:$0xff]
        %v1625 = vld [vmem:[#allocation8 + $0x78] sm:$0xff]
        %v1626 = vld [vmem:[#allocation8 + $0x80] sm:$0xff]
        %v1627 = vld [vmem:[#allocation8 + $0x88] sm:$0xff]
        %v1628 = vld [vmem:[#allocation8 + $0x90] sm:$0xff]
        %v1629 = vld [vmem:[#allocation8 + $0x98] sm:$0xff]
        %v1630 = vld [vmem:[#allocation8 + $0xa0] sm:$0xff]
        %v1631 = vld [vmem:[#allocation8 + $0xa8] sm:$0xff]
        %v1632 = vld [vmem:[#allocation8 + $0xb0] sm:$0xff]
        %v1633 = vld [vmem:[#allocation8 + $0xb8] sm:$0xff]
        %v1634 = vld [vmem:[#allocation8 + $0xc0] sm:$0xff]
        %v1635 = vld [vmem:[#allocation8 + $0xc8] sm:$0xff]
        %v1636 = vld [vmem:[#allocation8 + $0xd0] sm:$0xff]
        %v1637 = vld [vmem:[#allocation8 + $0xd8] sm:$0xff]
        %v1638 = vld [vmem:[#allocation8 + $0xe0] sm:$0xff]
        %v1639 = vld [vmem:[#allocation8 + $0xe8] sm:$0xff]
        %v1640 = vld [vmem:[#allocation8 + $0xf0] sm:$0xff]
        %v1641 = vld [vmem:[#allocation8 + $0xf8] sm:$0xff]
        %v1642 = vld [vmem:[#allocation8 + $0x100] sm:$0xff]
        %v1643 = vld [vmem:[#allocation8 + $0x108] sm:$0xff]
        %v1644 = vld [vmem:[#allocation8 + $0x110] sm:$0xff]
        %v1645 = vld [vmem:[#allocation8 + $0x118] sm:$0xff]
        %v1646 = vld [vmem:[#allocation8 + $0x120] sm:$0xff]
        %v1647 = vld [vmem:[#allocation8 + $0x128] sm:$0xff]
        %v1648 = vld [vmem:[#allocation8 + $0x130] sm:$0xff]
        %v1649 = vld [vmem:[#allocation8 + $0x138] sm:$0xff]
        %v1650 = vld [vmem:[#allocation8 + $0x140] sm:$0xff]
        %v1651 = vld [vmem:[#allocation8 + $0x148] sm:$0xff]
        %v1652 = vld [vmem:[#allocation8 + $0x150] sm:$0xff]
        %v1653 = vld [vmem:[#allocation8 + $0x158] sm:$0xff]
        %v1654 = vld [vmem:[#allocation8 + $0x160] sm:$0xff]
        %v1655 = vld [vmem:[#allocation8 + $0x168] sm:$0xff]
        %v1656 = vld [vmem:[#allocation8 + $0x170] sm:$0xff]
        %v1657 = vld [vmem:[#allocation8 + $0x178] sm:$0xff]
        %v1658 = vld [vmem:[#allocation8 + $0x180] sm:$0xff]
        %v1659 = vld [vmem:[#allocation8 + $0x188] sm:$0xff]
        %v1660 = vld [vmem:[#allocation8 + $0x190] sm:$0xff]
        %v1661 = vld [vmem:[#allocation8 + $0x198] sm:$0xff]
        %v1662 = vld [vmem:[#allocation8 + $0x1a0] sm:$0xff]
        %v1663 = vld [vmem:[#allocation8 + $0x1a8] sm:$0xff]
        %v1664 = vld [vmem:[#allocation8 + $0x1b0] sm:$0xff]
        %v1665 = vld [vmem:[#allocation8 + $0x1b8] sm:$0xff]
        %v1666 = vld [vmem:[#allocation8 + $0x1c0] sm:$0xff]
        %v1667 = vld [vmem:[#allocation8 + $0x1c8] sm:$0xff]
        %v1668 = vld [vmem:[#allocation8 + $0x1d0] sm:$0xff]
        %v1669 = vld [vmem:[#allocation8 + $0x1d8] sm:$0xff]
        %v1670 = vld [vmem:[#allocation8 + $0x1e0] sm:$0xff]
        %v1671 = vld [vmem:[#allocation8 + $0x1e8] sm:$0xff]
        %v1672 = vld [vmem:[#allocation8 + $0x1f0] sm:$0xff]
        %v1673 = vld [vmem:[#allocation8 + $0x1f8] sm:$0xff]
        %v1674 = vld [vmem:[%s4] sm:$0x1]
        %v1676 = vlaneseq
        %v1677 = vshrl.u32 %v1676, 7
        %v1678 = vsub.s32 0, %v1677
        %v1679 = vrot.slane %v1674, %v1678
        %1681 = vmatprep.subr.mxu0 0.0
        %1682 = vmatpush1.msra.mxu0 %v1610
        %1683 = vmatprep.subr.mxu0 0.0
        %1684 = vmatpush1.msra.mxu0 %v1611
        %1685 = vmatprep.subr.mxu0 0.0
        %1686 = vmatpush1.msra.mxu0 %v1612
        %1687 = vmatprep.subr.mxu0 0.0
        %1688 = vmatpush1.msra.mxu0 %v1613
        %1689 = vmatprep.subr.mxu0 0.0
        %1690 = vmatpush1.msra.mxu0 %v1614
        %1691 = vmatprep.subr.mxu0 0.0
        %1692 = vmatpush1.msra.mxu0 %v1615
        %1693 = vmatprep.subr.mxu0 0.0
        %1694 = vmatpush1.msra.mxu0 %v1616
        %1695 = vmatprep.subr.mxu0 0.0
        %1696 = vmatpush1.msra.mxu0 %v1617
        %1697 = vmatprep.subr.mxu0 0.0
        %1698 = vmatpush1.msra.mxu0 %v1618
        %1699 = vmatprep.subr.mxu0 0.0
        %1700 = vmatpush1.msra.mxu0 %v1619
        %1701 = vmatprep.subr.mxu0 0.0
        %1702 = vmatpush1.msra.mxu0 %v1620
        %1703 = vmatprep.subr.mxu0 0.0
        %1704 = vmatpush1.msra.mxu0 %v1621
        %1705 = vmatprep.subr.mxu0 0.0
        %1706 = vmatpush1.msra.mxu0 %v1622
        %1707 = vmatprep.subr.mxu0 0.0
        %1708 = vmatpush1.msra.mxu0 %v1623
        %1709 = vmatprep.subr.mxu0 0.0
        %1710 = vmatpush1.msra.mxu0 %v1624
        %1711 = vmatprep.subr.mxu0 0.0
        %1712 = vmatpush1.msra.mxu0 %v1625
        %1713 = vmatprep.subr.mxu0 0.0
        %1714 = vmatpush1.msra.mxu0 %v1626
        %1715 = vmatprep.subr.mxu0 0.0
        %1716 = vmatpush1.msra.mxu0 %v1627
        %1717 = vmatprep.subr.mxu0 0.0
        %1718 = vmatpush1.msra.mxu0 %v1628
        %1719 = vmatprep.subr.mxu0 0.0
        %1720 = vmatpush1.msra.mxu0 %v1629
        %1721 = vmatprep.subr.mxu0 0.0
        %1722 = vmatpush1.msra.mxu0 %v1630
        %1723 = vmatprep.subr.mxu0 0.0
        %1724 = vmatpush1.msra.mxu0 %v1631
        %1725 = vmatprep.subr.mxu0 0.0
        %1726 = vmatpush1.msra.mxu0 %v1632
        %1727 = vmatprep.subr.mxu0 0.0
        %1728 = vmatpush1.msra.mxu0 %v1633
        %1729 = vmatprep.subr.mxu0 0.0
        %1730 = vmatpush1.msra.mxu0 %v1634
        %1731 = vmatprep.subr.mxu0 0.0
        %1732 = vmatpush1.msra.mxu0 %v1635
        %1733 = vmatprep.subr.mxu0 0.0
        %1734 = vmatpush1.msra.mxu0 %v1636
        %1735 = vmatprep.subr.mxu0 0.0
        %1736 = vmatpush1.msra.mxu0 %v1637
        %1737 = vmatprep.subr.mxu0 0.0
        %1738 = vmatpush1.msra.mxu0 %v1638
        %1739 = vmatprep.subr.mxu0 0.0
        %1740 = vmatpush1.msra.mxu0 %v1639
        %1741 = vmatprep.subr.mxu0 0.0
        %1742 = vmatpush1.msra.mxu0 %v1640
        %1743 = vmatprep.subr.mxu0 0.0
        %1744 = vmatpush1.msra.mxu0 %v1641
        %1745 = vmatprep.mubr.f32.mxu0 %v1299
        %1746 = vmatmul.mubr.f32.gmra.mrb[0].mxu0 %v1145
        %v1747 = vpop.f32.mrb[0].mxu0
        %v1748 = vadd.f32 %v1679, %v1747
        %v1749 = vpop.f32.mrb[0].mxu0
        %1750 = vdwg.mxu0
        %1751 = vmatprep.subr.mxu0 0.0
        %1752 = vmatpush1.msra.mxu0 %v1642
        %1753 = vmatprep.subr.mxu0 0.0
        %1754 = vmatpush1.msra.mxu0 %v1643
        %1755 = vmatprep.subr.mxu0 0.0
        %1756 = vmatpush1.msra.mxu0 %v1644
        %1757 = vmatprep.subr.mxu0 0.0
        %1758 = vmatpush1.msra.mxu0 %v1645
        %1759 = vmatprep.subr.mxu0 0.0
        %1760 = vmatpush1.msra.mxu0 %v1646
        %1761 = vmatprep.subr.mxu0 0.0
        %1762 = vmatpush1.msra.mxu0 %v1647
        %1763 = vmatprep.subr.mxu0 0.0
        %1764 = vmatpush1.msra.mxu0 %v1648
        %1765 = vmatprep.subr.mxu0 0.0
        %1766 = vmatpush1.msra.mxu0 %v1649
        %1767 = vmatprep.subr.mxu0 0.0
        %1768 = vmatpush1.msra.mxu0 %v1650
        %1769 = vmatprep.subr.mxu0 0.0
        %1770 = vmatpush1.msra.mxu0 %v1651
        %1771 = vmatprep.subr.mxu0 0.0
        %1772 = vmatpush1.msra.mxu0 %v1652
        %1773 = vmatprep.subr.mxu0 0.0
        %1774 = vmatpush1.msra.mxu0 %v1653
        %1775 = vmatprep.subr.mxu0 0.0
        %1776 = vmatpush1.msra.mxu0 %v1654
        %1777 = vmatprep.subr.mxu0 0.0
        %1778 = vmatpush1.msra.mxu0 %v1655
        %1779 = vmatprep.subr.mxu0 0.0
        %1780 = vmatpush1.msra.mxu0 %v1656
        %1781 = vmatprep.subr.mxu0 0.0
        %1782 = vmatpush1.msra.mxu0 %v1657
        %1783 = vmatprep.subr.mxu0 0.0
        %1784 = vmatpush1.msra.mxu0 %v1658
        %1785 = vmatprep.subr.mxu0 0.0
        %1786 = vmatpush1.msra.mxu0 %v1659
        %1787 = vmatprep.subr.mxu0 0.0
        %1788 = vmatpush1.msra.mxu0 %v1660
        %1789 = vmatprep.subr.mxu0 0.0
        %1790 = vmatpush1.msra.mxu0 %v1661
        %1791 = vmatprep.subr.mxu0 0.0
        %1792 = vmatpush1.msra.mxu0 %v1662
        %1793 = vmatprep.subr.mxu0 0.0
        %1794 = vmatpush1.msra.mxu0 %v1663
        %1795 = vmatprep.subr.mxu0 0.0
        %1796 = vmatpush1.msra.mxu0 %v1664
        %1797 = vmatprep.subr.mxu0 0.0
        %1798 = vmatpush1.msra.mxu0 %v1665
        %1799 = vmatprep.subr.mxu0 0.0
        %1800 = vmatpush1.msra.mxu0 %v1666
        %1801 = vmatprep.subr.mxu0 0.0
        %1802 = vmatpush1.msra.mxu0 %v1667
        %1803 = vmatprep.subr.mxu0 0.0
        %1804 = vmatpush1.msra.mxu0 %v1668
        %1805 = vmatprep.subr.mxu0 0.0
        %1806 = vmatpush1.msra.mxu0 %v1669
        %1807 = vmatprep.subr.mxu0 0.0
        %1808 = vmatpush1.msra.mxu0 %v1670
        %1809 = vmatprep.subr.mxu0 0.0
        %1810 = vmatpush1.msra.mxu0 %v1671
        %1811 = vmatprep.subr.mxu0 0.0
        %1812 = vmatpush1.msra.mxu0 %v1672
        %1813 = vmatprep.subr.mxu0 0.0
        %1814 = vmatpush1.msra.mxu0 %v1673
        %1815 = vmatprep.mubr.f32.mxu0 %v1607
        %1816 = vmatmul.mubr.f32.gmra.mrb[0].mxu0 %v1453
        %v1817 = vpop.f32.mrb[0].mxu0
        %v1818 = vadd.f32 %v1748, %v1817
        %v1819 = vpop.f32.mrb[0].mxu0
        %1820 = vdwg.mxu0
        %1821 = vst [vmem:[%s308] sm:$0xff] %v1818
        %s1822 = sand.u32 %s164, 1
        %s1823 = scalar_lea.sflag [#allocation4], %s1822
        %s1824 = sand.u32 %s164, 1
        %s1825 = smul.addr %s1824, 8
        %s1826 = scalar_lea.vmem [#allocation10], %s1825
        // Predicated region
        $region61: #{tpu_custom_call.1} parent=43 // pred_check
          %p1827 = pneg %p174
        $region62: #{tpu_custom_call.1} parent=43 // pred_check_branch
          %1829 = sbr.rel (%p1827) target = $region64
        $region63: #{tpu_custom_call.1} parent=43 // pred_region
          %s1831 = ssub.s32 128, 128
          %1832 = vsyncadd %s1823, %s1831
          %s1833 = smul.addr %s25, 128
          %s1834 = scalar_lea.hbm %s6, %s1833
          %s1836 = sshll.u32 %s1826, 4
          %s1837 = int_to_ptr.vmem [resolvable:$true] %s1836
          %1839 = dma.vmem_to_hbm [thread:$0]  %s1837, 128, %s1834, %s1823
        $region64: #{tpu_custom_call.1} parent=43 // pred_fallthru
          _
      $region44: #{tpu_custom_call.1} parent=5 // pred_fallthru
        _
      %p1840 = scmp.le.s32.totalorder 2, %s20
      // Predicated region
      $region65: #{tpu_custom_call.1} parent=5 // pred_check
        %p1841 = pneg %p1840
      $region66: #{tpu_custom_call.1} parent=5 // pred_check_branch
        %1843 = sbr.rel (%p1841) target = $region68
      $region67: #{tpu_custom_call.1} parent=5 // pred_region
        %s1844 = ssub.s32 %s20, 2
        // Predicated region
        $region69: #{tpu_custom_call.1} parent=67 // pred_check
          %p1845 = pneg %p180
        $region70: #{tpu_custom_call.1} parent=67 // pred_check_branch
          %1847 = sbr.rel (%p1845) target = $region72
        $region71: #{tpu_custom_call.1} parent=67 // pred_region
          %s1848 = sand.u32 %s165, 1
          %s1849 = scalar_lea.sflag [#allocation4], %s1848
          %s1850 = sand.u32 %s165, 1
          %s1851 = smul.addr %s1850, 8
          %s1852 = scalar_lea.vmem [#allocation10], %s1851
          %1853 = dma.done %s1849, 128
        $region72: #{tpu_custom_call.1} parent=67 // pred_fallthru
          _
      $region68: #{tpu_custom_call.1} parent=5 // pred_fallthru
        _
    $region6: #{tpu_custom_call.1} parent=1 // loop_footer
      %s24 = sadd.s32 1, %s20
    $region7: #{tpu_custom_call.1} parent=1 // loop_footer_branch
      %19 = sbr.rel target = $region3
    $region8: #{tpu_custom_call.1} parent=1 // loop_exit
      _
    %1854 = vsyncpa [#allocation3], 1
    %s1855 = scalar_lea.sflag [#allocation3], 1
    %1856 = vsyncpa %s1855, 1
    %1857 = vsyncpa [#allocation6], 1
    %1858 = vsyncpa [#allocation9], 1
    %1859 = vsyncpa [#allocation4], 1
    %s1860 = scalar_lea.sflag [#allocation4], 1
    %1861 = vsyncpa %s1860, 1

</llo_original>
